<compile_context>
chip_gen: v5e
topology: v5e:2x2
jax: 0.10.0
libtpu: 0.0.40
codegen_flags: <defaults>
</compile_context>

<pallas_src>
import functools

import jax
import jax.numpy as jnp
from jax.experimental import pallas as pl
from jax.experimental.pallas import tpu as pltpu

C_PAD = 128           # padded class lane dimension (real classes: 3)
NEG_BIG = -1.0e30     # masked (padding) class logit -> exp underflows to exactly 0


def _round_up(x: int, m: int) -> int:
    return (x + m - 1) // m * m


def _fused_nll_kernel(bounds_ref,                             # SMEM prefetch (3,) int32
                      src_ref, dst_ref, z_ref, w_ref, b_ref,  # VMEM inputs
                      out_ref,                                # (1,1) f32 output
                      acc_ref, zw_ref):                       # VMEM scratch
    i = pl.program_id(0)
    nsteps = pl.num_programs(0)

    tile_e = src_ref.shape[0]
    n_pad = z_ref.shape[0]
    d = z_ref.shape[1]

    # ---- step-0 init: zero the accumulator and project the resident node
    #      embeddings through the two weight halves ONCE (persisted in zw_ref) ----
    @pl.when(i == 0)
    def _init():
        acc_ref[...] = jnp.zeros_like(acc_ref)
        z = z_ref[...]                    # (n_pad, d)
        w = w_ref[...]                    # (2d, C_PAD)
        zw_ref[pl.ds(0, n_pad), :] = jnp.dot(
            z, w[:d, :], preferred_element_type=jnp.float32)
        zw_ref[pl.ds(n_pad, n_pad), :] = jnp.dot(
            z, w[d:, :], preferred_element_type=jnp.float32)

    # ---- in-kernel gather + Linear, fused as a single MXU matmul -----------
    # onehot[r, src[r]] = onehot[r, n_pad + dst[r]] = 1
    lane = jax.lax.broadcasted_iota(jnp.int32, (tile_e, 2 * n_pad), 1)
    src = src_ref[...]                    # (tile_e, 1) int32
    dst = dst_ref[...]                    # (tile_e, 1) int32
    onehot = jnp.logical_or(lane == src, lane == dst + n_pad).astype(jnp.float32)
    logits = (jnp.dot(onehot, zw_ref[...], preferred_element_type=jnp.float32)
              + b_ref[...])               # (tile_e, C_PAD)

    # ---- log-softmax over the 3 real classes (padding lanes masked) --------
    cls = jax.lax.broadcasted_iota(jnp.int32, (tile_e, C_PAD), 1)
    masked = jnp.where(cls < 3, logits, NEG_BIG)
    m = jnp.max(masked, axis=-1, keepdims=True)
    lse = m + jnp.log(jnp.sum(jnp.exp(masked - m), axis=-1, keepdims=True))

    # ---- per-row target class / weight from prefetched set boundaries ------
    b0 = bounds_ref[0]                    # n_pos
    b1 = bounds_ref[1]                    # n_pos + n_neg
    b2 = bounds_ref[2]                    # n_pos + n_neg + n_none
    row = i * tile_e + jax.lax.broadcasted_iota(jnp.int32, (tile_e, 1), 0)
    tgt = jnp.where(row < b0, 0, jnp.where(row < b1, 1, 2))
    inv_pos = 1.0 / jnp.maximum(b0, 1).astype(jnp.float32)
    inv_neg = 1.0 / jnp.maximum(b1 - b0, 1).astype(jnp.float32)
    inv_non = 1.0 / jnp.maximum(b2 - b1, 1).astype(jnp.float32)
    w_row = jnp.where(row < b0, inv_pos, jnp.where(row < b1, inv_neg, inv_non))
    w_row = jnp.where(row < b2, w_row, 0.0)          # padding rows contribute 0

    # target-class log-prob (targets always land on a valid class lane)
    logit_t = jnp.sum(jnp.where(cls == tgt, logits, 0.0), axis=-1, keepdims=True)
    acc_ref[...] += w_row * (logit_t - lse)          # (tile_e, 1) partials

    @pl.when(i == nsteps - 1)
    def _finalize():
        total = jnp.sum(acc_ref[...])                # single XLU reduce at the end
        out_ref[...] = jnp.full((1, 1), -total / 3.0, dtype=jnp.float32)


@functools.partial(jax.jit, static_argnames=("tile_e",))
def _fused_link_sign_loss(w_cat, b_row, z_pad, src_all, dst_all, bounds,
                          *, tile_e: int = 512):
    """loss = (mean_nll(pos, 0) + mean_nll(neg, 1) + mean_nll(none, 2)) / 3."""
    e_total = src_all.shape[0]
    e_pad = max(1, pl.cdiv(e_total, tile_e)) * tile_e
    pad = e_pad - e_total
    src2d = jnp.pad(src_all, (0, pad)).reshape(e_pad, 1)
    dst2d = jnp.pad(dst_all, (0, pad)).reshape(e_pad, 1)

    n_pad, d = z_pad.shape
    grid = (e_pad // tile_e,)

    out = pl.pallas_call(
        _fused_nll_kernel,
        out_shape=jax.ShapeDtypeStruct((1, 1), jnp.float32),
        grid_spec=pltpu.PrefetchScalarGridSpec(
            num_scalar_prefetch=1,
            grid=grid,
            in_specs=[
                pl.BlockSpec((tile_e, 1), lambda i, b: (i, 0)),      # src idx
                pl.BlockSpec((tile_e, 1), lambda i, b: (i, 0)),      # dst idx
                pl.BlockSpec((n_pad, d), lambda i, b: (0, 0)),       # z (resident)
                pl.BlockSpec((2 * d, C_PAD), lambda i, b: (0, 0)),   # W (resident)
                pl.BlockSpec((1, C_PAD), lambda i, b: (0, 0)),       # bias
            ],
            out_specs=pl.BlockSpec((1, 1), lambda i, b: (0, 0)),
            scratch_shapes=[
                pltpu.VMEM((tile_e, 1), jnp.float32),                # per-row partials
                pltpu.VMEM((2 * n_pad, C_PAD), jnp.float32),         # zw = [z@W1; z@W2]
            ],
        ),
        compiler_params=pltpu.CompilerParams(
            dimension_semantics=("arbitrary",)),
    )(bounds, src2d, dst2d, z_pad, w_cat, b_row)
    return out[0, 0]


class LinkSignEntropyLoss:
    """JAX/Pallas port of Link_Sign_Entropy_Loss (SGCN / SNEA entropy loss)."""

    def __init__(self, emb_dim: int, key):
        self.emb_dim = emb_dim
        # torch.nn.Linear(2*emb_dim, 3).reset_parameters():
        #   weight, bias ~ U(-1/sqrt(fan_in), 1/sqrt(fan_in))
        fan_in = 2 * emb_dim
        bound = 1.0 / float(fan_in) ** 0.5
        kw, kb = jax.random.split(key)
        self.weight = jax.random.uniform(kw, (3, 2 * emb_dim), jnp.float32,
                                         -bound, bound)   # torch layout [out, in]
        self.bias = jax.random.uniform(kb, (3,), jnp.float32, -bound, bound)

        # Packed kernel params: W^T as (2D, C_PAD), bias as (1, C_PAD); padding
        # class lanes are zero (they are masked inside the kernel).
        self.w_cat = jnp.pad(self.weight.T, ((0, 0), (0, C_PAD - 3)))
        self.b_row = jnp.pad(self.bias[None, :], ((0, 0), (0, C_PAD - 3)))

    def __call__(self, z, pos_edge_index, neg_edge_index, sample_key,
                 tile_e: int = 512):
        num_nodes = z.shape[0]
        n_pos = pos_edge_index.shape[1]
        n_neg = neg_edge_index.shape[1]
        n_none = n_pos + n_neg
        # TODO(synk): PyG negative_sampling excludes existing edges; here we use
        # deterministic uniform random node pairs (structural negatives not filtered).
        none_edge_index = jax.random.randint(
            sample_key, (2, n_none), 0, num_nodes, dtype=jnp.int32)

        src_all = jnp.concatenate([pos_edge_index[0], neg_edge_index[0],
                                   none_edge_index[0]]).astype(jnp.int32)
        dst_all = jnp.concatenate([pos_edge_index[1], neg_edge_index[1],
                                   none_edge_index[1]]).astype(jnp.int32)
        bounds = jnp.array([n_pos, n_pos + n_neg, n_pos + n_neg + n_none],
                           jnp.int32)

        n_pad = _round_up(max(num_nodes, 1), 128)
        z_pad = jnp.pad(z.astype(jnp.float32), ((0, n_pad - num_nodes), (0, 0)))

        return _fused_link_sign_loss(self.w_cat, self.b_row, z_pad,
                                     src_all, dst_all, bounds, tile_e=tile_e)


def _reference_loss(z, weight, bias, pos_e, neg_e, none_e):
    """Pure-JAX reference mirroring the PyTorch forward."""
    def set_nll(edges, target):
        x = jnp.concatenate([z[edges[0]], z[edges[1]]], axis=1)
        logp = jax.nn.log_softmax(x @ weight.T + bias, axis=1)
        return -jnp.mean(logp[:, target])
    return (set_nll(pos_e, 0) + set_nll(neg_e, 1) + set_nll(none_e, 2)) / 3.0


if __name__ == "__main__":
    key = jax.random.PRNGKey(0)
    k_param, k_z, k_pos, k_neg, k_none = jax.random.split(key, 5)

    emb_dim = 32
    num_nodes = 24
    n_pos, n_neg = 100, 80

    loss_mod = LinkSignEntropyLoss(emb_dim, k_param)

    z = jax.random.normal(k_z, (num_nodes, emb_dim), jnp.float32)
    pos_edge_index = jax.random.randint(k_pos, (2, n_pos), 0, num_nodes,
                                        dtype=jnp.int32)
    neg_edge_index = jax.random.randint(k_neg, (2, n_neg), 0, num_nodes,
                                        dtype=jnp.int32)

    loss = loss_mod(z, pos_edge_index, neg_edge_index, k_none)
    loss = jax.block_until_ready(loss)

    # Sanity check against a pure-JAX reference (same none-edge sampling).
    none_edge_index = jax.random.randint(k_none, (2, n_pos + n_neg), 0,
                                         num_nodes, dtype=jnp.int32)
    ref = _reference_loss(z, loss_mod.weight, loss_mod.bias,
                          pos_edge_index, neg_edge_index, none_edge_index)
    assert jnp.allclose(loss, ref, rtol=1e-4, atol=1e-5), (loss, ref)

    print("KERNEL_OK")
</pallas_src>

<mosaic_0001>
module attributes {stable_mosaic.version = 11 : i64} {
  func.func @_fused_nll_kernel(%arg0: i32, %arg1: memref<3xi32, #tpu.memory_space<smem>>, %arg2: memref<512x1xi32, #tpu.memory_space<vmem>>, %arg3: memref<512x1xi32, #tpu.memory_space<vmem>>, %arg4: memref<128x32xf32, #tpu.memory_space<vmem>>, %arg5: memref<64x128xf32, #tpu.memory_space<vmem>>, %arg6: memref<1x128xf32, #tpu.memory_space<vmem>>, %arg7: memref<1x1xf32, #tpu.memory_space<vmem>>, %arg8: memref<512x1xf32, #tpu.memory_space<vmem>>, %arg9: memref<256x128xf32, #tpu.memory_space<vmem>>) attributes {dimension_semantics = [#tpu.dimension_semantics<arbitrary>], iteration_bounds = array<i64: 1>, scalar_prefetch = 1 : i64, scratch_operands = 2 : i64, tpu.core_type = #tpu.core_type<tc>, window_params = [{transform_indices = @transform_0, window_bounds = array<i64: 512, 1>}, {transform_indices = @transform_1, window_bounds = array<i64: 512, 1>}, {pipeline_mode = #tpu.pipeline_mode<synchronous>, transform_indices = @transform_2, window_bounds = array<i64: 128, 32>}, {pipeline_mode = #tpu.pipeline_mode<synchronous>, transform_indices = @transform_3, window_bounds = array<i64: 64, 128>}, {pipeline_mode = #tpu.pipeline_mode<synchronous>, transform_indices = @transform_4, window_bounds = array<i64: 1, 128>}, {pipeline_mode = #tpu.pipeline_mode<synchronous>, transform_indices = @transform_5, window_bounds = array<i64: 1, 1>}]} {
    %c0_i32 = arith.constant 0 : i32
    %0 = arith.cmpi eq, %arg0, %c0_i32 : i32
    %1 = arith.extui %0 : i1 to i32
    %c0_i32_0 = arith.constant 0 : i32
    %2 = arith.cmpi ne, %1, %c0_i32_0 : i32
    scf.if %2 {
      %cst_28 = arith.constant 0.000000e+00 : f32
      %88 = vector.broadcast %cst_28 : f32 to vector<512x1xf32>
      %c0_29 = arith.constant 0 : index
      %c0_30 = arith.constant 0 : index
      %89 = vector.load %arg8[%c0_29, %c0_30] : memref<512x1xf32, #tpu.memory_space<vmem>>, vector<512x1xf32>
      tpu.vector_store %arg8[%c0_29, %c0_30], %88 {strides = array<i32>} : memref<512x1xf32, #tpu.memory_space<vmem>>, vector<512x1xf32>,
      %c0_31 = arith.constant 0 : index
      %c0_32 = arith.constant 0 : index
      %90 = vector.load %arg4[%c0_31, %c0_32] : memref<128x32xf32, #tpu.memory_space<vmem>>, vector<128x32xf32>
      %c0_33 = arith.constant 0 : index
      %c0_34 = arith.constant 0 : index
      %91 = vector.load %arg5[%c0_33, %c0_34] : memref<64x128xf32, #tpu.memory_space<vmem>>, vector<64x128xf32>
      %92 = vector.extract_strided_slice %91 {offsets = [0, 0], sizes = [32, 128], strides = [1, 1]} : vector<64x128xf32> to vector<32x128xf32>
      %cst_35 = arith.constant dense<0.000000e+00> : vector<128x128xf32>
      %93 = tpu.matmul %90, %92, %cst_35 {dimension_numbers = #tpu.dot_dimension_numbers<[1], [0], [0], [1], [0, 0, 1, 1], [], []>} : vector<128x32xf32>, vector<32x128xf32>, vector<128x128xf32> -> vector<128x128xf32>
      %c0_36 = arith.constant 0 : index
      %c0_37 = arith.constant 0 : index
      %94 = vector.load %arg9[%c0_36, %c0_37] : memref<256x128xf32, #tpu.memory_space<vmem>>, vector<128x128xf32>
      tpu.vector_store %arg9[%c0_36, %c0_37], %93 {strides = array<i32>} : memref<256x128xf32, #tpu.memory_space<vmem>>, vector<128x128xf32>,
      %95 = vector.extract_strided_slice %91 {offsets = [32, 0], sizes = [32, 128], strides = [1, 1]} : vector<64x128xf32> to vector<32x128xf32>
      %cst_38 = arith.constant dense<0.000000e+00> : vector<128x128xf32>
      %96 = tpu.matmul %90, %95, %cst_38 {dimension_numbers = #tpu.dot_dimension_numbers<[1], [0], [0], [1], [0, 0, 1, 1], [], []>} : vector<128x32xf32>, vector<32x128xf32>, vector<128x128xf32> -> vector<128x128xf32>
      %c128 = arith.constant 128 : index
      %c0_39 = arith.constant 0 : index
      %97 = vector.load %arg9[%c128, %c0_39] : memref<256x128xf32, #tpu.memory_space<vmem>>, vector<128x128xf32>
      tpu.vector_store %arg9[%c128, %c0_39], %96 {strides = array<i32>} : memref<256x128xf32, #tpu.memory_space<vmem>>, vector<128x128xf32>,
    } else {
    }
    %3 = tpu.iota {dimensions = array<i32: 1>} : vector<512x256xi32>
    %c0 = arith.constant 0 : index
    %c0_1 = arith.constant 0 : index
    %4 = vector.load %arg2[%c0, %c0_1] : memref<512x1xi32, #tpu.memory_space<vmem>>, vector<512x1xi32>
    %c0_2 = arith.constant 0 : index
    %c0_3 = arith.constant 0 : index
    %5 = vector.load %arg3[%c0_2, %c0_3] : memref<512x1xi32, #tpu.memory_space<vmem>>, vector<512x1xi32>
    %6 = vector.broadcast %4 : vector<512x1xi32> to vector<512x256xi32>
    %7 = arith.cmpi eq, %3, %6 : vector<512x256xi32>
    %c128_i32 = arith.constant 128 : i32
    %8 = vector.broadcast %c128_i32 : i32 to vector<512x1xi32>
    %9 = arith.addi %5, %8 : vector<512x1xi32>
    %10 = vector.broadcast %9 : vector<512x1xi32> to vector<512x256xi32>
    %11 = arith.cmpi eq, %3, %10 : vector<512x256xi32>
    %12 = arith.ori %7, %11 : vector<512x256xi1>
    %13 = arith.extui %12 : vector<512x256xi1> to vector<512x256xi32>
    %14 = arith.sitofp %13 : vector<512x256xi32> to vector<512x256xf32>
    %c0_4 = arith.constant 0 : index
    %c0_5 = arith.constant 0 : index
    %15 = vector.load %arg9[%c0_4, %c0_5] : memref<256x128xf32, #tpu.memory_space<vmem>>, vector<256x128xf32>
    %cst = arith.constant dense<0.000000e+00> : vector<512x128xf32>
    %16 = tpu.matmul %14, %15, %cst {dimension_numbers = #tpu.dot_dimension_numbers<[1], [0], [0], [1], [0, 0, 1, 1], [], []>} : vector<512x256xf32>, vector<256x128xf32>, vector<512x128xf32> -> vector<512x128xf32>
    %c0_6 = arith.constant 0 : index
    %c0_7 = arith.constant 0 : index
    %17 = vector.load %arg6[%c0_6, %c0_7] : memref<1x128xf32, #tpu.memory_space<vmem>>, vector<1x128xf32>
    %18 = vector.broadcast %17 : vector<1x128xf32> to vector<512x128xf32>
    %19 = arith.addf %16, %18 : vector<512x128xf32>
    %20 = tpu.iota {dimensions = array<i32: 1>} : vector<512x128xi32>
    %c3_i32 = arith.constant 3 : i32
    %21 = vector.broadcast %c3_i32 : i32 to vector<512x128xi32>
    %22 = arith.cmpi slt, %20, %21 : vector<512x128xi32>
    %cst_8 = arith.constant -1.000000e+30 : f32
    %23 = vector.broadcast %cst_8 : f32 to vector<512x128xf32>
    %24 = arith.select %22, %19, %23 : vector<512x128xi1>, vector<512x128xf32>
    %cst_9 = arith.constant dense<0xFF800000> : vector<512xf32>
    %25 = vector.multi_reduction <maximumf>, %24, %cst_9 [1] : vector<512x128xf32> to vector<512xf32>
    %26 = vector.shape_cast %25 : vector<512xf32> to vector<512x1xf32>
    %27 = vector.broadcast %26 : vector<512x1xf32> to vector<512x128xf32>
    %28 = arith.subf %24, %27 : vector<512x128xf32>
    %29 = math.exp %28 : vector<512x128xf32>
    %cst_10 = arith.constant dense<0.000000e+00> : vector<512xf32>
    %30 = vector.multi_reduction <add>, %29, %cst_10 [1] : vector<512x128xf32> to vector<512xf32>
    %31 = vector.shape_cast %30 : vector<512xf32> to vector<512x1xf32>
    %32 = math.log %31 : vector<512x1xf32>
    %33 = arith.addf %26, %32 : vector<512x1xf32>
    %c0_11 = arith.constant 0 : index
    %34 = memref.load %arg1[%c0_11] : memref<3xi32, #tpu.memory_space<smem>>
    %c1 = arith.constant 1 : index
    %35 = memref.load %arg1[%c1] : memref<3xi32, #tpu.memory_space<smem>>
    %c2 = arith.constant 2 : index
    %36 = memref.load %arg1[%c2] : memref<3xi32, #tpu.memory_space<smem>>
    %c512_i32 = arith.constant 512 : i32
    %37 = arith.muli %arg0, %c512_i32 : i32
    %38 = tpu.iota {dimensions = array<i32: 0>} : vector<512x1xi32>
    %39 = vector.broadcast %37 : i32 to vector<512x1xi32>
    %40 = arith.addi %39, %38 : vector<512x1xi32>
    %41 = vector.broadcast %34 : i32 to vector<512x1xi32>
    %42 = arith.cmpi slt, %40, %41 : vector<512x1xi32>
    %43 = vector.broadcast %35 : i32 to vector<512x1xi32>
    %44 = arith.cmpi slt, %40, %43 : vector<512x1xi32>
    %c1_i32 = arith.constant 1 : i32
    %c2_i32 = arith.constant 2 : i32
    %45 = vector.broadcast %c1_i32 : i32 to vector<512x1xi32>
    %46 = vector.broadcast %c2_i32 : i32 to vector<512x1xi32>
    %47 = arith.select %44, %45, %46 : vector<512x1xi1>, vector<512x1xi32>
    %c0_i32_12 = arith.constant 0 : i32
    %48 = vector.broadcast %c0_i32_12 : i32 to vector<512x1xi32>
    %49 = arith.select %42, %48, %47 : vector<512x1xi1>, vector<512x1xi32>
    %c1_i32_13 = arith.constant 1 : i32
    %50 = arith.maxsi %34, %c1_i32_13 : i32
    %51 = arith.sitofp %50 : i32 to f32
    %cst_14 = arith.constant 1.000000e+00 : f32
    %52 = arith.divf %cst_14, %51 : f32
    %53 = arith.subi %35, %34 : i32
    %c1_i32_15 = arith.constant 1 : i32
    %54 = arith.maxsi %53, %c1_i32_15 : i32
    %55 = arith.sitofp %54 : i32 to f32
    %cst_16 = arith.constant 1.000000e+00 : f32
    %56 = arith.divf %cst_16, %55 : f32
    %57 = arith.subi %36, %35 : i32
    %c1_i32_17 = arith.constant 1 : i32
    %58 = arith.maxsi %57, %c1_i32_17 : i32
    %59 = arith.sitofp %58 : i32 to f32
    %cst_18 = arith.constant 1.000000e+00 : f32
    %60 = arith.divf %cst_18, %59 : f32
    %61 = vector.broadcast %34 : i32 to vector<512x1xi32>
    %62 = arith.cmpi slt, %40, %61 : vector<512x1xi32>
    %63 = vector.broadcast %35 : i32 to vector<512x1xi32>
    %64 = arith.cmpi slt, %40, %63 : vector<512x1xi32>
    %65 = vector.broadcast %56 : f32 to vector<512x1xf32>
    %66 = vector.broadcast %60 : f32 to vector<512x1xf32>
    %67 = arith.select %64, %65, %66 : vector<512x1xi1>, vector<512x1xf32>
    %68 = vector.broadcast %52 : f32 to vector<512x1xf32>
    %69 = arith.select %62, %68, %67 : vector<512x1xi1>, vector<512x1xf32>
    %70 = vector.broadcast %36 : i32 to vector<512x1xi32>
    %71 = arith.cmpi slt, %40, %70 : vector<512x1xi32>
    %cst_19 = arith.constant 0.000000e+00 : f32
    %72 = vector.broadcast %cst_19 : f32 to vector<512x1xf32>
    %73 = arith.select %71, %69, %72 : vector<512x1xi1>, vector<512x1xf32>
    %74 = vector.broadcast %49 : vector<512x1xi32> to vector<512x128xi32>
    %75 = arith.cmpi eq, %20, %74 : vector<512x128xi32>
    %cst_20 = arith.constant 0.000000e+00 : f32
    %76 = vector.broadcast %cst_20 : f32 to vector<512x128xf32>
    %77 = arith.select %75, %19, %76 : vector<512x128xi1>, vector<512x128xf32>
    %cst_21 = arith.constant dense<0.000000e+00> : vector<512xf32>
    %78 = vector.multi_reduction <add>, %77, %cst_21 [1] : vector<512x128xf32> to vector<512xf32>
    %79 = vector.shape_cast %78 : vector<512xf32> to vector<512x1xf32>
    %c0_22 = arith.constant 0 : index
    %c0_23 = arith.constant 0 : index
    %80 = vector.load %arg8[%c0_22, %c0_23] : memref<512x1xf32, #tpu.memory_space<vmem>>, vector<512x1xf32>
    %81 = arith.subf %79, %33 : vector<512x1xf32>
    %82 = arith.mulf %73, %81 : vector<512x1xf32>
    %83 = arith.addf %80, %82 : vector<512x1xf32>
    %c0_24 = arith.constant 0 : index
    %c0_25 = arith.constant 0 : index
    %84 = vector.load %arg8[%c0_24, %c0_25] : memref<512x1xf32, #tpu.memory_space<vmem>>, vector<512x1xf32>
    tpu.vector_store %arg8[%c0_24, %c0_25], %83 {strides = array<i32>} : memref<512x1xf32, #tpu.memory_space<vmem>>, vector<512x1xf32>,
    %c0_i32_26 = arith.constant 0 : i32
    %85 = arith.cmpi eq, %arg0, %c0_i32_26 : i32
    %86 = arith.extui %85 : i1 to i32
    %c0_i32_27 = arith.constant 0 : i32
    %87 = arith.cmpi ne, %86, %c0_i32_27 : i32
    scf.if %87 {
      %c0_28 = arith.constant 0 : index
      %c0_29 = arith.constant 0 : index
      %88 = vector.load %arg8[%c0_28, %c0_29] : memref<512x1xf32, #tpu.memory_space<vmem>>, vector<512x1xf32>
      %89 = vector.shape_cast %88 : vector<512x1xf32> to vector<1x512x1xf32>
      %cst_30 = arith.constant dense<0.000000e+00> : vector<1xf32>
      %90 = vector.multi_reduction <add>, %89, %cst_30 [1, 2] : vector<1x512x1xf32> to vector<1xf32>
      %91 = vector.shape_cast %90 : vector<1xf32> to vector<1x1x1xf32>
      %92 = vector.extract %91[0, 0, 0] : f32 from vector<1x1x1xf32>
      %cst_31 = arith.constant 0.000000e+00 : f32
      %93 = arith.subf %cst_31, %92 : f32
      %cst_32 = arith.constant 3.000000e+00 : f32
      %94 = arith.divf %93, %cst_32 : f32
      %95 = vector.broadcast %94 : f32 to vector<1x1xf32>
      %c0_33 = arith.constant 0 : index
      %c0_34 = arith.constant 0 : index
      %96 = vector.load %arg7[%c0_33, %c0_34] : memref<1x1xf32, #tpu.memory_space<vmem>>, vector<1x1xf32>
      tpu.vector_store %arg7[%c0_33, %c0_34], %95 {strides = array<i32>} : memref<1x1xf32, #tpu.memory_space<vmem>>, vector<1x1xf32>,
    } else {
    }
    return
  }
  func.func @transform_0(%arg0: i32, %arg1: memref<3xi32, #tpu.memory_space<smem>>) -> (i32, i32) {
    %c0_i32 = arith.constant 0 : i32
    %c0_i32_0 = arith.constant 0 : i32
    return %arg0, %c0_i32 : i32, i32
  }
  func.func @transform_1(%arg0: i32, %arg1: memref<3xi32, #tpu.memory_space<smem>>) -> (i32, i32) {
    %c0_i32 = arith.constant 0 : i32
    %c0_i32_0 = arith.constant 0 : i32
    return %arg0, %c0_i32 : i32, i32
  }
  func.func @transform_2(%arg0: i32, %arg1: memref<3xi32, #tpu.memory_space<smem>>) -> (i32, i32) {
    %c0_i32 = arith.constant 0 : i32
    %c0_i32_0 = arith.constant 0 : i32
    %c0_i32_1 = arith.constant 0 : i32
    return %c0_i32, %c0_i32_0 : i32, i32
  }
  func.func @transform_3(%arg0: i32, %arg1: memref<3xi32, #tpu.memory_space<smem>>) -> (i32, i32) {
    %c0_i32 = arith.constant 0 : i32
    %c0_i32_0 = arith.constant 0 : i32
    %c0_i32_1 = arith.constant 0 : i32
    return %c0_i32, %c0_i32_0 : i32, i32
  }
  func.func @transform_4(%arg0: i32, %arg1: memref<3xi32, #tpu.memory_space<smem>>) -> (i32, i32) {
    %c0_i32 = arith.constant 0 : i32
    %c0_i32_0 = arith.constant 0 : i32
    %c0_i32_1 = arith.constant 0 : i32
    return %c0_i32, %c0_i32_0 : i32, i32
  }
  func.func @transform_5(%arg0: i32, %arg1: memref<3xi32, #tpu.memory_space<smem>>) -> (i32, i32) {
    %c0_i32 = arith.constant 0 : i32
    %c0_i32_0 = arith.constant 0 : i32
    %c0_i32_1 = arith.constant 0 : i32
    return %c0_i32, %c0_i32_0 : i32, i32
  }
}

</mosaic_0001>

<llo_original>
// kernel: _fused_link_sign_loss.1
$region0: #{_fused_link_sign_loss.1}
  #allocation0 [shape = 'u32[]', space=smem, size = 0x4, offset = 0x4, fixed_abs, tag = 'smem constant byte address 0x4 - core index']
  #allocation1 [shape = 'u32[72,128]{1,0:T(1,128)}', space=vmem, size = 0x9000, scoped, tag = 'internal scratch']
  #allocation2 [shape = 'f32[512,1]{1,0:T(8,128)}', space=vmem, size = 0x40000, scoped, tag = 'scratch operand']
  #allocation3 [shape = 'f32[256,128]{1,0:T(8,128)}', space=vmem, size = 0x20000, scoped, tag = 'scratch operand']
  #allocation4 [shape = 's32[1]{0}', space=sflag, size = 0x4, scoped, tag = 'scoped memory for _fused_link_sign_loss.1']
  #allocation5 [shape = 'u8[512]{0}', space=smem, size = 0x200, scoped, tag = 'prefetched SMEM operand 0']
  %s0 = inlined_call_operand.vmem [shape: s32[3], index: 0, kind: input, shape index: {}]
  %s1 = inlined_call_operand.vmem [shape: s32[512,1], index: 1, kind: input, shape index: {}]
  %s2 = inlined_call_operand.vmem [shape: s32[512,1], index: 2, kind: input, shape index: {}]
  %s3 = inlined_call_operand.vmem [shape: f32[128,32], index: 3, kind: input, shape index: {}]
  %s4 = inlined_call_operand.vmem [shape: f32[64,128], index: 4, kind: input, shape index: {}]
  %s5 = inlined_call_operand.vmem [shape: f32[1,128], index: 5, kind: input, shape index: {}]
  %s6 = inlined_call_operand.hbm [shape: f32[1,1], index: 6, kind: output, shape index: {}]
  %s7 = sld [smem:[#allocation0]]
  $region38: #{_fused_link_sign_loss.1} parent=0
    _
  %s9 = ssub.s32 1, %s7
  %s10 = scalar_select 0, %s9, %s7
  %s12 = sshll.u32 %s0, 4
  %s13 = int_to_ptr.vmem [resolvable:$true] %s12
  %15 = dma.vmem_to_smem %s13, 16, [#allocation5], [#allocation4]
  %17 = dma.done [#allocation4], 16
  %18 = sfence
  $region1: #{_fused_link_sign_loss.1} parent=0
    #allocation6 [shape = 'u8[512]{0}', space=vmem, size = 0x400, scoped, tag = 'output window, operand 0, single buffered']
    #allocation7 [shape = 's32[1]{0}', space=sflag, size = 0x4, scoped, tag = 'scoped memory for _fused_link_sign_loss.1']
    %19 = vsyncpa [#allocation7], 0
    // Predicated region
    $region2: #{_fused_link_sign_loss.1} parent=1 // pred_check
      _
    $region3: #{_fused_link_sign_loss.1} parent=1 // pred_check_branch
      %21 = sbr.rel (0) target = $region5
    $region4: #{_fused_link_sign_loss.1} parent=1 // pred_region
      _
    $region5: #{_fused_link_sign_loss.1} parent=1 // pred_fallthru
      _
    // Predicated region
    $region6: #{_fused_link_sign_loss.1} parent=1 // pred_check
      _
    $region7: #{_fused_link_sign_loss.1} parent=1 // pred_check_branch
      %23 = sbr.rel (0) target = $region9
    $region8: #{_fused_link_sign_loss.1} parent=1 // pred_region
      _
    $region9: #{_fused_link_sign_loss.1} parent=1 // pred_fallthru
      _
    // Predicated region
    $region10: #{_fused_link_sign_loss.1} parent=1 // pred_check
      _
    $region11: #{_fused_link_sign_loss.1} parent=1 // pred_check_branch
      %25 = sbr.rel (0) target = $region13
    $region12: #{_fused_link_sign_loss.1} parent=1 // pred_region
      _
    $region13: #{_fused_link_sign_loss.1} parent=1 // pred_fallthru
      _
    // Predicated region
    $region14: #{_fused_link_sign_loss.1} parent=1 // pred_check
      _
    $region15: #{_fused_link_sign_loss.1} parent=1 // pred_check_branch
      %27 = sbr.rel (0) target = $region17
    $region16: #{_fused_link_sign_loss.1} parent=1 // pred_region
      _
    $region17: #{_fused_link_sign_loss.1} parent=1 // pred_fallthru
      _
    // Predicated region
    $region18: #{_fused_link_sign_loss.1} parent=1 // pred_check
      _
    $region19: #{_fused_link_sign_loss.1} parent=1 // pred_check_branch
      %29 = sbr.rel (0) target = $region21
    $region20: #{_fused_link_sign_loss.1} parent=1 // pred_region
      _
    $region21: #{_fused_link_sign_loss.1} parent=1 // pred_fallthru
      _
    %p30 = scmp.eq.s32.totalorder 0, 0
    // Predicated region
    $region22: #{_fused_link_sign_loss.1} parent=1 // pred_check
      %p31 = pneg %p30
    $region23: #{_fused_link_sign_loss.1} parent=1 // pred_check_branch
      %33 = sbr.rel (%p31) target = $region25
    $region24: #{_fused_link_sign_loss.1} parent=1 // pred_region
      %vm34 = vcmask 7168
      %35 = vst.msk [vmem:[#allocation2] sm:$0xff] %vm34, 0.0
      %36 = vst.msk [vmem:[#allocation2 + $0x8] sm:$0xff] %vm34, 0.0
      %37 = vst.msk [vmem:[#allocation2 + $0x10] sm:$0xff] %vm34, 0.0
      %38 = vst.msk [vmem:[#allocation2 + $0x18] sm:$0xff] %vm34, 0.0
      %39 = vst.msk [vmem:[#allocation2 + $0x20] sm:$0xff] %vm34, 0.0
      %40 = vst.msk [vmem:[#allocation2 + $0x28] sm:$0xff] %vm34, 0.0
      %41 = vst.msk [vmem:[#allocation2 + $0x30] sm:$0xff] %vm34, 0.0
      %42 = vst.msk [vmem:[#allocation2 + $0x38] sm:$0xff] %vm34, 0.0
      %43 = vst.msk [vmem:[#allocation2 + $0x40] sm:$0xff] %vm34, 0.0
      %44 = vst.msk [vmem:[#allocation2 + $0x48] sm:$0xff] %vm34, 0.0
      %45 = vst.msk [vmem:[#allocation2 + $0x50] sm:$0xff] %vm34, 0.0
      %46 = vst.msk [vmem:[#allocation2 + $0x58] sm:$0xff] %vm34, 0.0
      %47 = vst.msk [vmem:[#allocation2 + $0x60] sm:$0xff] %vm34, 0.0
      %48 = vst.msk [vmem:[#allocation2 + $0x68] sm:$0xff] %vm34, 0.0
      %49 = vst.msk [vmem:[#allocation2 + $0x70] sm:$0xff] %vm34, 0.0
      %50 = vst.msk [vmem:[#allocation2 + $0x78] sm:$0xff] %vm34, 0.0
      %51 = vst.msk [vmem:[#allocation2 + $0x80] sm:$0xff] %vm34, 0.0
      %52 = vst.msk [vmem:[#allocation2 + $0x88] sm:$0xff] %vm34, 0.0
      %53 = vst.msk [vmem:[#allocation2 + $0x90] sm:$0xff] %vm34, 0.0
      %54 = vst.msk [vmem:[#allocation2 + $0x98] sm:$0xff] %vm34, 0.0
      %55 = vst.msk [vmem:[#allocation2 + $0xa0] sm:$0xff] %vm34, 0.0
      %56 = vst.msk [vmem:[#allocation2 + $0xa8] sm:$0xff] %vm34, 0.0
      %57 = vst.msk [vmem:[#allocation2 + $0xb0] sm:$0xff] %vm34, 0.0
      %58 = vst.msk [vmem:[#allocation2 + $0xb8] sm:$0xff] %vm34, 0.0
      %59 = vst.msk [vmem:[#allocation2 + $0xc0] sm:$0xff] %vm34, 0.0
      %60 = vst.msk [vmem:[#allocation2 + $0xc8] sm:$0xff] %vm34, 0.0
      %61 = vst.msk [vmem:[#allocation2 + $0xd0] sm:$0xff] %vm34, 0.0
      %62 = vst.msk [vmem:[#allocation2 + $0xd8] sm:$0xff] %vm34, 0.0
      %63 = vst.msk [vmem:[#allocation2 + $0xe0] sm:$0xff] %vm34, 0.0
      %64 = vst.msk [vmem:[#allocation2 + $0xe8] sm:$0xff] %vm34, 0.0
      %65 = vst.msk [vmem:[#allocation2 + $0xf0] sm:$0xff] %vm34, 0.0
      %66 = vst.msk [vmem:[#allocation2 + $0xf8] sm:$0xff] %vm34, 0.0
      %67 = vst.msk [vmem:[#allocation2 + $0x100] sm:$0xff] %vm34, 0.0
      %68 = vst.msk [vmem:[#allocation2 + $0x108] sm:$0xff] %vm34, 0.0
      %69 = vst.msk [vmem:[#allocation2 + $0x110] sm:$0xff] %vm34, 0.0
      %70 = vst.msk [vmem:[#allocation2 + $0x118] sm:$0xff] %vm34, 0.0
      %71 = vst.msk [vmem:[#allocation2 + $0x120] sm:$0xff] %vm34, 0.0
      %72 = vst.msk [vmem:[#allocation2 + $0x128] sm:$0xff] %vm34, 0.0
      %73 = vst.msk [vmem:[#allocation2 + $0x130] sm:$0xff] %vm34, 0.0
      %74 = vst.msk [vmem:[#allocation2 + $0x138] sm:$0xff] %vm34, 0.0
      %75 = vst.msk [vmem:[#allocation2 + $0x140] sm:$0xff] %vm34, 0.0
      %76 = vst.msk [vmem:[#allocation2 + $0x148] sm:$0xff] %vm34, 0.0
      %77 = vst.msk [vmem:[#allocation2 + $0x150] sm:$0xff] %vm34, 0.0
      %78 = vst.msk [vmem:[#allocation2 + $0x158] sm:$0xff] %vm34, 0.0
      %79 = vst.msk [vmem:[#allocation2 + $0x160] sm:$0xff] %vm34, 0.0
      %80 = vst.msk [vmem:[#allocation2 + $0x168] sm:$0xff] %vm34, 0.0
      %81 = vst.msk [vmem:[#allocation2 + $0x170] sm:$0xff] %vm34, 0.0
      %82 = vst.msk [vmem:[#allocation2 + $0x178] sm:$0xff] %vm34, 0.0
      %83 = vst.msk [vmem:[#allocation2 + $0x180] sm:$0xff] %vm34, 0.0
      %84 = vst.msk [vmem:[#allocation2 + $0x188] sm:$0xff] %vm34, 0.0
      %85 = vst.msk [vmem:[#allocation2 + $0x190] sm:$0xff] %vm34, 0.0
      %86 = vst.msk [vmem:[#allocation2 + $0x198] sm:$0xff] %vm34, 0.0
      %87 = vst.msk [vmem:[#allocation2 + $0x1a0] sm:$0xff] %vm34, 0.0
      %88 = vst.msk [vmem:[#allocation2 + $0x1a8] sm:$0xff] %vm34, 0.0
      %89 = vst.msk [vmem:[#allocation2 + $0x1b0] sm:$0xff] %vm34, 0.0
      %90 = vst.msk [vmem:[#allocation2 + $0x1b8] sm:$0xff] %vm34, 0.0
      %91 = vst.msk [vmem:[#allocation2 + $0x1c0] sm:$0xff] %vm34, 0.0
      %92 = vst.msk [vmem:[#allocation2 + $0x1c8] sm:$0xff] %vm34, 0.0
      %93 = vst.msk [vmem:[#allocation2 + $0x1d0] sm:$0xff] %vm34, 0.0
      %94 = vst.msk [vmem:[#allocation2 + $0x1d8] sm:$0xff] %vm34, 0.0
      %95 = vst.msk [vmem:[#allocation2 + $0x1e0] sm:$0xff] %vm34, 0.0
      %96 = vst.msk [vmem:[#allocation2 + $0x1e8] sm:$0xff] %vm34, 0.0
      %97 = vst.msk [vmem:[#allocation2 + $0x1f0] sm:$0xff] %vm34, 0.0
      %98 = vst.msk [vmem:[#allocation2 + $0x1f8] sm:$0xff] %vm34, 0.0
      %v99 = vld [vmem:[%s3] sm:$0xff]
      %v100 = vld [vmem:[%s3 + $0x8] sm:$0xff]
      %v101 = vld [vmem:[%s3 + $0x10] sm:$0xff]
      %v102 = vld [vmem:[%s3 + $0x18] sm:$0xff]
      %v103 = vld [vmem:[%s3 + $0x20] sm:$0xff]
      %v104 = vld [vmem:[%s3 + $0x28] sm:$0xff]
      %v105 = vld [vmem:[%s3 + $0x30] sm:$0xff]
      %v106 = vld [vmem:[%s3 + $0x38] sm:$0xff]
      %v107 = vld [vmem:[%s3 + $0x40] sm:$0xff]
      %v108 = vld [vmem:[%s3 + $0x48] sm:$0xff]
      %v109 = vld [vmem:[%s3 + $0x50] sm:$0xff]
      %v110 = vld [vmem:[%s3 + $0x58] sm:$0xff]
      %v111 = vld [vmem:[%s3 + $0x60] sm:$0xff]
      %v112 = vld [vmem:[%s3 + $0x68] sm:$0xff]
      %v113 = vld [vmem:[%s3 + $0x70] sm:$0xff]
      %v114 = vld [vmem:[%s3 + $0x78] sm:$0xff]
      %v115 = vld [vmem:[%s4] sm:$0xff]
      %v116 = vld [vmem:[%s4 + $0x8] sm:$0xff]
      %v117 = vld [vmem:[%s4 + $0x10] sm:$0xff]
      %v118 = vld [vmem:[%s4 + $0x18] sm:$0xff]
      %v119 = vld [vmem:[%s4 + $0x20] sm:$0xff]
      %v120 = vld [vmem:[%s4 + $0x28] sm:$0xff]
      %v121 = vld [vmem:[%s4 + $0x30] sm:$0xff]
      %v122 = vld [vmem:[%s4 + $0x38] sm:$0xff]
      %vm123 = vcmask 261120
      %v125 = vsel %vm123, %v99, 0
      %v128 = vsel %vm123, %v100, 0
      %v131 = vsel %vm123, %v101, 0
      %v134 = vsel %vm123, %v102, 0
      %v137 = vsel %vm123, %v103, 0
      %v140 = vsel %vm123, %v104, 0
      %v143 = vsel %vm123, %v105, 0
      %v146 = vsel %vm123, %v106, 0
      %v149 = vsel %vm123, %v107, 0
      %v152 = vsel %vm123, %v108, 0
      %v155 = vsel %vm123, %v109, 0
      %v158 = vsel %vm123, %v110, 0
      %v161 = vsel %vm123, %v111, 0
      %v164 = vsel %vm123, %v112, 0
      %v167 = vsel %vm123, %v113, 0
      %v170 = vsel %vm123, %v114, 0
      %172 = vmatpush.msra.mxu0 0.0
      %173 = vmatpush.msra.mxu0 0.0
      %174 = vmatpush.msra.mxu0 0.0
      %175 = vmatpush.msra.mxu0 0.0
      %176 = vmatpush.msra.mxu0 0.0
      %177 = vmatpush.msra.mxu0 0.0
      %178 = vmatpush.msra.mxu0 0.0
      %179 = vmatpush.msra.mxu0 0.0
      %180 = vmatpush.msra.mxu0 0.0
      %181 = vmatpush.msra.mxu0 0.0
      %182 = vmatpush.msra.mxu0 0.0
      %183 = vmatpush.msra.mxu0 0.0
      %184 = vmatpush.msra.mxu0 %v118
      %185 = vmatpush.msra.mxu0 %v117
      %186 = vmatpush.msra.mxu0 %v116
      %187 = vmatpush.msra.mxu0 %v115
      %188 = vmatmul.f32.gmra.mxu0 %v125
      %v189 = vpop.f32.mrf.mxu0
      %v190 = vadd.f32 0.0, %v189
      %191 = vmatmul.f32.gmra.mxu0 %v128
      %v192 = vpop.f32.mrf.mxu0
      %v193 = vadd.f32 0.0, %v192
      %194 = vmatmul.f32.gmra.mxu0 %v131
      %v195 = vpop.f32.mrf.mxu0
      %v196 = vadd.f32 0.0, %v195
      %197 = vmatmul.f32.gmra.mxu0 %v134
      %v198 = vpop.f32.mrf.mxu0
      %v199 = vadd.f32 0.0, %v198
      %200 = vmatmul.f32.gmra.mxu0 %v137
      %v201 = vpop.f32.mrf.mxu0
      %v202 = vadd.f32 0.0, %v201
      %203 = vmatmul.f32.gmra.mxu0 %v140
      %v204 = vpop.f32.mrf.mxu0
      %v205 = vadd.f32 0.0, %v204
      %206 = vmatmul.f32.gmra.mxu0 %v143
      %v207 = vpop.f32.mrf.mxu0
      %v208 = vadd.f32 0.0, %v207
      %209 = vmatmul.f32.gmra.mxu0 %v146
      %v210 = vpop.f32.mrf.mxu0
      %v211 = vadd.f32 0.0, %v210
      %212 = vmatmul.f32.gmra.mxu0 %v149
      %v213 = vpop.f32.mrf.mxu0
      %v214 = vadd.f32 0.0, %v213
      %215 = vmatmul.f32.gmra.mxu0 %v152
      %v216 = vpop.f32.mrf.mxu0
      %v217 = vadd.f32 0.0, %v216
      %218 = vmatmul.f32.gmra.mxu0 %v155
      %v219 = vpop.f32.mrf.mxu0
      %v220 = vadd.f32 0.0, %v219
      %221 = vmatmul.f32.gmra.mxu0 %v158
      %v222 = vpop.f32.mrf.mxu0
      %v223 = vadd.f32 0.0, %v222
      %224 = vmatmul.f32.gmra.mxu0 %v161
      %v225 = vpop.f32.mrf.mxu0
      %v226 = vadd.f32 0.0, %v225
      %227 = vmatmul.f32.gmra.mxu0 %v164
      %v228 = vpop.f32.mrf.mxu0
      %v229 = vadd.f32 0.0, %v228
      %230 = vmatmul.f32.gmra.mxu0 %v167
      %v231 = vpop.f32.mrf.mxu0
      %v232 = vadd.f32 0.0, %v231
      %233 = vmatmul.f32.gmra.mxu0 %v170
      %v234 = vpop.f32.mrf.mxu0
      %v235 = vadd.f32 0.0, %v234
      %236 = vdwg.mxu0
      %237 = vst [vmem:[#allocation3] sm:$0xff] %v190
      %238 = vst [vmem:[#allocation3 + $0x8] sm:$0xff] %v193
      %239 = vst [vmem:[#allocation3 + $0x10] sm:$0xff] %v196
      %240 = vst [vmem:[#allocation3 + $0x18] sm:$0xff] %v199
      %241 = vst [vmem:[#allocation3 + $0x20] sm:$0xff] %v202
      %242 = vst [vmem:[#allocation3 + $0x28] sm:$0xff] %v205
      %243 = vst [vmem:[#allocation3 + $0x30] sm:$0xff] %v208
      %244 = vst [vmem:[#allocation3 + $0x38] sm:$0xff] %v211
      %245 = vst [vmem:[#allocation3 + $0x40] sm:$0xff] %v214
      %246 = vst [vmem:[#allocation3 + $0x48] sm:$0xff] %v217
      %247 = vst [vmem:[#allocation3 + $0x50] sm:$0xff] %v220
      %248 = vst [vmem:[#allocation3 + $0x58] sm:$0xff] %v223
      %249 = vst [vmem:[#allocation3 + $0x60] sm:$0xff] %v226
      %250 = vst [vmem:[#allocation3 + $0x68] sm:$0xff] %v229
      %251 = vst [vmem:[#allocation3 + $0x70] sm:$0xff] %v232
      %252 = vst [vmem:[#allocation3 + $0x78] sm:$0xff] %v235
      %253 = vmatpush.msra.mxu0 0.0
      %254 = vmatpush.msra.mxu0 0.0
      %255 = vmatpush.msra.mxu0 0.0
      %256 = vmatpush.msra.mxu0 0.0
      %257 = vmatpush.msra.mxu0 0.0
      %258 = vmatpush.msra.mxu0 0.0
      %259 = vmatpush.msra.mxu0 0.0
      %260 = vmatpush.msra.mxu0 0.0
      %261 = vmatpush.msra.mxu0 0.0
      %262 = vmatpush.msra.mxu0 0.0
      %263 = vmatpush.msra.mxu0 0.0
      %264 = vmatpush.msra.mxu0 0.0
      %265 = vmatpush.msra.mxu0 %v122
      %266 = vmatpush.msra.mxu0 %v121
      %267 = vmatpush.msra.mxu0 %v120
      %268 = vmatpush.msra.mxu0 %v119
      %269 = vmatmul.f32.gmra.mxu0 %v125
      %v270 = vpop.f32.mrf.mxu0
      %v271 = vadd.f32 0.0, %v270
      %272 = vmatmul.f32.gmra.mxu0 %v128
      %v273 = vpop.f32.mrf.mxu0
      %v274 = vadd.f32 0.0, %v273
      %275 = vmatmul.f32.gmra.mxu0 %v131
      %v276 = vpop.f32.mrf.mxu0
      %v277 = vadd.f32 0.0, %v276
      %278 = vmatmul.f32.gmra.mxu0 %v134
      %v279 = vpop.f32.mrf.mxu0
      %v280 = vadd.f32 0.0, %v279
      %281 = vmatmul.f32.gmra.mxu0 %v137
      %v282 = vpop.f32.mrf.mxu0
      %v283 = vadd.f32 0.0, %v282
      %284 = vmatmul.f32.gmra.mxu0 %v140
      %v285 = vpop.f32.mrf.mxu0
      %v286 = vadd.f32 0.0, %v285
      %287 = vmatmul.f32.gmra.mxu0 %v143
      %v288 = vpop.f32.mrf.mxu0
      %v289 = vadd.f32 0.0, %v288
      %290 = vmatmul.f32.gmra.mxu0 %v146
      %v291 = vpop.f32.mrf.mxu0
      %v292 = vadd.f32 0.0, %v291
      %293 = vmatmul.f32.gmra.mxu0 %v149
      %v294 = vpop.f32.mrf.mxu0
      %v295 = vadd.f32 0.0, %v294
      %296 = vmatmul.f32.gmra.mxu0 %v152
      %v297 = vpop.f32.mrf.mxu0
      %v298 = vadd.f32 0.0, %v297
      %299 = vmatmul.f32.gmra.mxu0 %v155
      %v300 = vpop.f32.mrf.mxu0
      %v301 = vadd.f32 0.0, %v300
      %302 = vmatmul.f32.gmra.mxu0 %v158
      %v303 = vpop.f32.mrf.mxu0
      %v304 = vadd.f32 0.0, %v303
      %305 = vmatmul.f32.gmra.mxu0 %v161
      %v306 = vpop.f32.mrf.mxu0
      %v307 = vadd.f32 0.0, %v306
      %308 = vmatmul.f32.gmra.mxu0 %v164
      %v309 = vpop.f32.mrf.mxu0
      %v310 = vadd.f32 0.0, %v309
      %311 = vmatmul.f32.gmra.mxu0 %v167
      %v312 = vpop.f32.mrf.mxu0
      %v313 = vadd.f32 0.0, %v312
      %314 = vmatmul.f32.gmra.mxu0 %v170
      %v315 = vpop.f32.mrf.mxu0
      %v316 = vadd.f32 0.0, %v315
      %317 = vdwg.mxu0
      %318 = vst [vmem:[#allocation3 + $0x80] sm:$0xff] %v271
      %319 = vst [vmem:[#allocation3 + $0x88] sm:$0xff] %v274
      %320 = vst [vmem:[#allocation3 + $0x90] sm:$0xff] %v277
      %321 = vst [vmem:[#allocation3 + $0x98] sm:$0xff] %v280
      %322 = vst [vmem:[#allocation3 + $0xa0] sm:$0xff] %v283
      %323 = vst [vmem:[#allocation3 + $0xa8] sm:$0xff] %v286
      %324 = vst [vmem:[#allocation3 + $0xb0] sm:$0xff] %v289
      %325 = vst [vmem:[#allocation3 + $0xb8] sm:$0xff] %v292
      %326 = vst [vmem:[#allocation3 + $0xc0] sm:$0xff] %v295
      %327 = vst [vmem:[#allocation3 + $0xc8] sm:$0xff] %v298
      %328 = vst [vmem:[#allocation3 + $0xd0] sm:$0xff] %v301
      %329 = vst [vmem:[#allocation3 + $0xd8] sm:$0xff] %v304
      %330 = vst [vmem:[#allocation3 + $0xe0] sm:$0xff] %v307
      %331 = vst [vmem:[#allocation3 + $0xe8] sm:$0xff] %v310
      %332 = vst [vmem:[#allocation3 + $0xf0] sm:$0xff] %v313
      %333 = vst [vmem:[#allocation3 + $0xf8] sm:$0xff] %v316
    $region25: #{_fused_link_sign_loss.1} parent=1 // pred_fallthru
      _
    %v334 = vlaneseq
    %v335 = vand.u32 %v334, 127
    %v336 = vadd.s32 %v335, 128
    %v337 = vld [vmem:[%s1] sm:$0xff]
    %v338 = vld [vmem:[%s1 + $0x8] sm:$0xff]
    %v339 = vld [vmem:[%s1 + $0x10] sm:$0xff]
    %v340 = vld [vmem:[%s1 + $0x18] sm:$0xff]
    %v341 = vld [vmem:[%s1 + $0x20] sm:$0xff]
    %v342 = vld [vmem:[%s1 + $0x28] sm:$0xff]
    %v343 = vld [vmem:[%s1 + $0x30] sm:$0xff]
    %v344 = vld [vmem:[%s1 + $0x38] sm:$0xff]
    %v345 = vld [vmem:[%s1 + $0x40] sm:$0xff]
    %v346 = vld [vmem:[%s1 + $0x48] sm:$0xff]
    %v347 = vld [vmem:[%s1 + $0x50] sm:$0xff]
    %v348 = vld [vmem:[%s1 + $0x58] sm:$0xff]
    %v349 = vld [vmem:[%s1 + $0x60] sm:$0xff]
    %v350 = vld [vmem:[%s1 + $0x68] sm:$0xff]
    %v351 = vld [vmem:[%s1 + $0x70] sm:$0xff]
    %v352 = vld [vmem:[%s1 + $0x78] sm:$0xff]
    %v353 = vld [vmem:[%s1 + $0x80] sm:$0xff]
    %v354 = vld [vmem:[%s1 + $0x88] sm:$0xff]
    %v355 = vld [vmem:[%s1 + $0x90] sm:$0xff]
    %v356 = vld [vmem:[%s1 + $0x98] sm:$0xff]
    %v357 = vld [vmem:[%s1 + $0xa0] sm:$0xff]
    %v358 = vld [vmem:[%s1 + $0xa8] sm:$0xff]
    %v359 = vld [vmem:[%s1 + $0xb0] sm:$0xff]
    %v360 = vld [vmem:[%s1 + $0xb8] sm:$0xff]
    %v361 = vld [vmem:[%s1 + $0xc0] sm:$0xff]
    %v362 = vld [vmem:[%s1 + $0xc8] sm:$0xff]
    %v363 = vld [vmem:[%s1 + $0xd0] sm:$0xff]
    %v364 = vld [vmem:[%s1 + $0xd8] sm:$0xff]
    %v365 = vld [vmem:[%s1 + $0xe0] sm:$0xff]
    %v366 = vld [vmem:[%s1 + $0xe8] sm:$0xff]
    %v367 = vld [vmem:[%s1 + $0xf0] sm:$0xff]
    %v368 = vld [vmem:[%s1 + $0xf8] sm:$0xff]
    %v369 = vld [vmem:[%s1 + $0x100] sm:$0xff]
    %v370 = vld [vmem:[%s1 + $0x108] sm:$0xff]
    %v371 = vld [vmem:[%s1 + $0x110] sm:$0xff]
    %v372 = vld [vmem:[%s1 + $0x118] sm:$0xff]
    %v373 = vld [vmem:[%s1 + $0x120] sm:$0xff]
    %v374 = vld [vmem:[%s1 + $0x128] sm:$0xff]
    %v375 = vld [vmem:[%s1 + $0x130] sm:$0xff]
    %v376 = vld [vmem:[%s1 + $0x138] sm:$0xff]
    %v377 = vld [vmem:[%s1 + $0x140] sm:$0xff]
    %v378 = vld [vmem:[%s1 + $0x148] sm:$0xff]
    %v379 = vld [vmem:[%s1 + $0x150] sm:$0xff]
    %v380 = vld [vmem:[%s1 + $0x158] sm:$0xff]
    %v381 = vld [vmem:[%s1 + $0x160] sm:$0xff]
    %v382 = vld [vmem:[%s1 + $0x168] sm:$0xff]
    %v383 = vld [vmem:[%s1 + $0x170] sm:$0xff]
    %v384 = vld [vmem:[%s1 + $0x178] sm:$0xff]
    %v385 = vld [vmem:[%s1 + $0x180] sm:$0xff]
    %v386 = vld [vmem:[%s1 + $0x188] sm:$0xff]
    %v387 = vld [vmem:[%s1 + $0x190] sm:$0xff]
    %v388 = vld [vmem:[%s1 + $0x198] sm:$0xff]
    %v389 = vld [vmem:[%s1 + $0x1a0] sm:$0xff]
    %v390 = vld [vmem:[%s1 + $0x1a8] sm:$0xff]
    %v391 = vld [vmem:[%s1 + $0x1b0] sm:$0xff]
    %v392 = vld [vmem:[%s1 + $0x1b8] sm:$0xff]
    %v393 = vld [vmem:[%s1 + $0x1c0] sm:$0xff]
    %v394 = vld [vmem:[%s1 + $0x1c8] sm:$0xff]
    %v395 = vld [vmem:[%s1 + $0x1d0] sm:$0xff]
    %v396 = vld [vmem:[%s1 + $0x1d8] sm:$0xff]
    %v397 = vld [vmem:[%s1 + $0x1e0] sm:$0xff]
    %v398 = vld [vmem:[%s1 + $0x1e8] sm:$0xff]
    %v399 = vld [vmem:[%s1 + $0x1f0] sm:$0xff]
    %v400 = vld [vmem:[%s1 + $0x1f8] sm:$0xff]
    %v401 = vld [vmem:[%s2] sm:$0xff]
    %v402 = vld [vmem:[%s2 + $0x8] sm:$0xff]
    %v403 = vld [vmem:[%s2 + $0x10] sm:$0xff]
    %v404 = vld [vmem:[%s2 + $0x18] sm:$0xff]
    %v405 = vld [vmem:[%s2 + $0x20] sm:$0xff]
    %v406 = vld [vmem:[%s2 + $0x28] sm:$0xff]
    %v407 = vld [vmem:[%s2 + $0x30] sm:$0xff]
    %v408 = vld [vmem:[%s2 + $0x38] sm:$0xff]
    %v409 = vld [vmem:[%s2 + $0x40] sm:$0xff]
    %v410 = vld [vmem:[%s2 + $0x48] sm:$0xff]
    %v411 = vld [vmem:[%s2 + $0x50] sm:$0xff]
    %v412 = vld [vmem:[%s2 + $0x58] sm:$0xff]
    %v413 = vld [vmem:[%s2 + $0x60] sm:$0xff]
    %v414 = vld [vmem:[%s2 + $0x68] sm:$0xff]
    %v415 = vld [vmem:[%s2 + $0x70] sm:$0xff]
    %v416 = vld [vmem:[%s2 + $0x78] sm:$0xff]
    %v417 = vld [vmem:[%s2 + $0x80] sm:$0xff]
    %v418 = vld [vmem:[%s2 + $0x88] sm:$0xff]
    %v419 = vld [vmem:[%s2 + $0x90] sm:$0xff]
    %v420 = vld [vmem:[%s2 + $0x98] sm:$0xff]
    %v421 = vld [vmem:[%s2 + $0xa0] sm:$0xff]
    %v422 = vld [vmem:[%s2 + $0xa8] sm:$0xff]
    %v423 = vld [vmem:[%s2 + $0xb0] sm:$0xff]
    %v424 = vld [vmem:[%s2 + $0xb8] sm:$0xff]
    %v425 = vld [vmem:[%s2 + $0xc0] sm:$0xff]
    %v426 = vld [vmem:[%s2 + $0xc8] sm:$0xff]
    %v427 = vld [vmem:[%s2 + $0xd0] sm:$0xff]
    %v428 = vld [vmem:[%s2 + $0xd8] sm:$0xff]
    %v429 = vld [vmem:[%s2 + $0xe0] sm:$0xff]
    %v430 = vld [vmem:[%s2 + $0xe8] sm:$0xff]
    %v431 = vld [vmem:[%s2 + $0xf0] sm:$0xff]
    %v432 = vld [vmem:[%s2 + $0xf8] sm:$0xff]
    %v433 = vld [vmem:[%s2 + $0x100] sm:$0xff]
    %v434 = vld [vmem:[%s2 + $0x108] sm:$0xff]
    %v435 = vld [vmem:[%s2 + $0x110] sm:$0xff]
    %v436 = vld [vmem:[%s2 + $0x118] sm:$0xff]
    %v437 = vld [vmem:[%s2 + $0x120] sm:$0xff]
    %v438 = vld [vmem:[%s2 + $0x128] sm:$0xff]
    %v439 = vld [vmem:[%s2 + $0x130] sm:$0xff]
    %v440 = vld [vmem:[%s2 + $0x138] sm:$0xff]
    %v441 = vld [vmem:[%s2 + $0x140] sm:$0xff]
    %v442 = vld [vmem:[%s2 + $0x148] sm:$0xff]
    %v443 = vld [vmem:[%s2 + $0x150] sm:$0xff]
    %v444 = vld [vmem:[%s2 + $0x158] sm:$0xff]
    %v445 = vld [vmem:[%s2 + $0x160] sm:$0xff]
    %v446 = vld [vmem:[%s2 + $0x168] sm:$0xff]
    %v447 = vld [vmem:[%s2 + $0x170] sm:$0xff]
    %v448 = vld [vmem:[%s2 + $0x178] sm:$0xff]
    %v449 = vld [vmem:[%s2 + $0x180] sm:$0xff]
    %v450 = vld [vmem:[%s2 + $0x188] sm:$0xff]
    %v451 = vld [vmem:[%s2 + $0x190] sm:$0xff]
    %v452 = vld [vmem:[%s2 + $0x198] sm:$0xff]
    %v453 = vld [vmem:[%s2 + $0x1a0] sm:$0xff]
    %v454 = vld [vmem:[%s2 + $0x1a8] sm:$0xff]
    %v455 = vld [vmem:[%s2 + $0x1b0] sm:$0xff]
    %v456 = vld [vmem:[%s2 + $0x1b8] sm:$0xff]
    %v457 = vld [vmem:[%s2 + $0x1c0] sm:$0xff]
    %v458 = vld [vmem:[%s2 + $0x1c8] sm:$0xff]
    %v459 = vld [vmem:[%s2 + $0x1d0] sm:$0xff]
    %v460 = vld [vmem:[%s2 + $0x1d8] sm:$0xff]
    %v461 = vld [vmem:[%s2 + $0x1e0] sm:$0xff]
    %v462 = vld [vmem:[%s2 + $0x1e8] sm:$0xff]
    %v463 = vld [vmem:[%s2 + $0x1f0] sm:$0xff]
    %v464 = vld [vmem:[%s2 + $0x1f8] sm:$0xff]
    %465 = vset.pattern.permute.xlu0 0
    %466 = vperm.xlu0 %465, %v337
    %v467 = vpop.permute.xlu0 %466
    %468 = vset.pattern.permute.xlu0 0
    %469 = vperm.xlu0 %468, %v338
    %v470 = vpop.permute.xlu0 %469
    %471 = vset.pattern.permute.xlu0 0
    %472 = vperm.xlu0 %471, %v339
    %v473 = vpop.permute.xlu0 %472
    %474 = vset.pattern.permute.xlu0 0
    %475 = vperm.xlu0 %474, %v340
    %v476 = vpop.permute.xlu0 %475
    %477 = vset.pattern.permute.xlu0 0
    %478 = vperm.xlu0 %477, %v341
    %v479 = vpop.permute.xlu0 %478
    %480 = vset.pattern.permute.xlu0 0
    %481 = vperm.xlu0 %480, %v342
    %v482 = vpop.permute.xlu0 %481
    %483 = vset.pattern.permute.xlu0 0
    %484 = vperm.xlu0 %483, %v343
    %v485 = vpop.permute.xlu0 %484
    %486 = vset.pattern.permute.xlu0 0
    %487 = vperm.xlu0 %486, %v344
    %v488 = vpop.permute.xlu0 %487
    %489 = vset.pattern.permute.xlu0 0
    %490 = vperm.xlu0 %489, %v345
    %v491 = vpop.permute.xlu0 %490
    %492 = vset.pattern.permute.xlu0 0
    %493 = vperm.xlu0 %492, %v346
    %v494 = vpop.permute.xlu0 %493
    %495 = vset.pattern.permute.xlu0 0
    %496 = vperm.xlu0 %495, %v347
    %v497 = vpop.permute.xlu0 %496
    %498 = vset.pattern.permute.xlu0 0
    %499 = vperm.xlu0 %498, %v348
    %v500 = vpop.permute.xlu0 %499
    %501 = vset.pattern.permute.xlu0 0
    %502 = vperm.xlu0 %501, %v349
    %v503 = vpop.permute.xlu0 %502
    %504 = vset.pattern.permute.xlu0 0
    %505 = vperm.xlu0 %504, %v350
    %v506 = vpop.permute.xlu0 %505
    %507 = vset.pattern.permute.xlu0 0
    %508 = vperm.xlu0 %507, %v351
    %v509 = vpop.permute.xlu0 %508
    %510 = vset.pattern.permute.xlu0 0
    %511 = vperm.xlu0 %510, %v352
    %v512 = vpop.permute.xlu0 %511
    %513 = vset.pattern.permute.xlu0 0
    %514 = vperm.xlu0 %513, %v353
    %v515 = vpop.permute.xlu0 %514
    %516 = vset.pattern.permute.xlu0 0
    %517 = vperm.xlu0 %516, %v354
    %v518 = vpop.permute.xlu0 %517
    %519 = vset.pattern.permute.xlu0 0
    %520 = vperm.xlu0 %519, %v355
    %v521 = vpop.permute.xlu0 %520
    %522 = vset.pattern.permute.xlu0 0
    %523 = vperm.xlu0 %522, %v356
    %v524 = vpop.permute.xlu0 %523
    %525 = vset.pattern.permute.xlu0 0
    %526 = vperm.xlu0 %525, %v357
    %v527 = vpop.permute.xlu0 %526
    %528 = vset.pattern.permute.xlu0 0
    %529 = vperm.xlu0 %528, %v358
    %v530 = vpop.permute.xlu0 %529
    %531 = vset.pattern.permute.xlu0 0
    %532 = vperm.xlu0 %531, %v359
    %v533 = vpop.permute.xlu0 %532
    %534 = vset.pattern.permute.xlu0 0
    %535 = vperm.xlu0 %534, %v360
    %v536 = vpop.permute.xlu0 %535
    %537 = vset.pattern.permute.xlu0 0
    %538 = vperm.xlu0 %537, %v361
    %v539 = vpop.permute.xlu0 %538
    %540 = vset.pattern.permute.xlu0 0
    %541 = vperm.xlu0 %540, %v362
    %v542 = vpop.permute.xlu0 %541
    %543 = vset.pattern.permute.xlu0 0
    %544 = vperm.xlu0 %543, %v363
    %v545 = vpop.permute.xlu0 %544
    %546 = vset.pattern.permute.xlu0 0
    %547 = vperm.xlu0 %546, %v364
    %v548 = vpop.permute.xlu0 %547
    %549 = vset.pattern.permute.xlu0 0
    %550 = vperm.xlu0 %549, %v365
    %v551 = vpop.permute.xlu0 %550
    %552 = vset.pattern.permute.xlu0 0
    %553 = vperm.xlu0 %552, %v366
    %v554 = vpop.permute.xlu0 %553
    %555 = vset.pattern.permute.xlu0 0
    %556 = vperm.xlu0 %555, %v367
    %v557 = vpop.permute.xlu0 %556
    %558 = vset.pattern.permute.xlu0 0
    %559 = vperm.xlu0 %558, %v368
    %v560 = vpop.permute.xlu0 %559
    %561 = vset.pattern.permute.xlu0 0
    %562 = vperm.xlu0 %561, %v369
    %v563 = vpop.permute.xlu0 %562
    %564 = vset.pattern.permute.xlu0 0
    %565 = vperm.xlu0 %564, %v370
    %v566 = vpop.permute.xlu0 %565
    %567 = vset.pattern.permute.xlu0 0
    %568 = vperm.xlu0 %567, %v371
    %v569 = vpop.permute.xlu0 %568
    %570 = vset.pattern.permute.xlu0 0
    %571 = vperm.xlu0 %570, %v372
    %v572 = vpop.permute.xlu0 %571
    %573 = vset.pattern.permute.xlu0 0
    %574 = vperm.xlu0 %573, %v373
    %v575 = vpop.permute.xlu0 %574
    %576 = vset.pattern.permute.xlu0 0
    %577 = vperm.xlu0 %576, %v374
    %v578 = vpop.permute.xlu0 %577
    %579 = vset.pattern.permute.xlu0 0
    %580 = vperm.xlu0 %579, %v375
    %v581 = vpop.permute.xlu0 %580
    %582 = vset.pattern.permute.xlu0 0
    %583 = vperm.xlu0 %582, %v376
    %v584 = vpop.permute.xlu0 %583
    %585 = vset.pattern.permute.xlu0 0
    %586 = vperm.xlu0 %585, %v377
    %v587 = vpop.permute.xlu0 %586
    %588 = vset.pattern.permute.xlu0 0
    %589 = vperm.xlu0 %588, %v378
    %v590 = vpop.permute.xlu0 %589
    %591 = vset.pattern.permute.xlu0 0
    %592 = vperm.xlu0 %591, %v379
    %v593 = vpop.permute.xlu0 %592
    %594 = vset.pattern.permute.xlu0 0
    %595 = vperm.xlu0 %594, %v380
    %v596 = vpop.permute.xlu0 %595
    %597 = vset.pattern.permute.xlu0 0
    %598 = vperm.xlu0 %597, %v381
    %v599 = vpop.permute.xlu0 %598
    %600 = vset.pattern.permute.xlu0 0
    %601 = vperm.xlu0 %600, %v382
    %v602 = vpop.permute.xlu0 %601
    %603 = vset.pattern.permute.xlu0 0
    %604 = vperm.xlu0 %603, %v383
    %v605 = vpop.permute.xlu0 %604
    %606 = vset.pattern.permute.xlu0 0
    %607 = vperm.xlu0 %606, %v384
    %v608 = vpop.permute.xlu0 %607
    %609 = vset.pattern.permute.xlu0 0
    %610 = vperm.xlu0 %609, %v385
    %v611 = vpop.permute.xlu0 %610
    %612 = vset.pattern.permute.xlu0 0
    %613 = vperm.xlu0 %612, %v386
    %v614 = vpop.permute.xlu0 %613
    %615 = vset.pattern.permute.xlu0 0
    %616 = vperm.xlu0 %615, %v387
    %v617 = vpop.permute.xlu0 %616
    %618 = vset.pattern.permute.xlu0 0
    %619 = vperm.xlu0 %618, %v388
    %v620 = vpop.permute.xlu0 %619
    %621 = vset.pattern.permute.xlu0 0
    %622 = vperm.xlu0 %621, %v389
    %v623 = vpop.permute.xlu0 %622
    %624 = vset.pattern.permute.xlu0 0
    %625 = vperm.xlu0 %624, %v390
    %v626 = vpop.permute.xlu0 %625
    %627 = vset.pattern.permute.xlu0 0
    %628 = vperm.xlu0 %627, %v391
    %v629 = vpop.permute.xlu0 %628
    %630 = vset.pattern.permute.xlu0 0
    %631 = vperm.xlu0 %630, %v392
    %v632 = vpop.permute.xlu0 %631
    %633 = vset.pattern.permute.xlu0 0
    %634 = vperm.xlu0 %633, %v393
    %v635 = vpop.permute.xlu0 %634
    %636 = vset.pattern.permute.xlu0 0
    %637 = vperm.xlu0 %636, %v394
    %v638 = vpop.permute.xlu0 %637
    %639 = vset.pattern.permute.xlu0 0
    %640 = vperm.xlu0 %639, %v395
    %v641 = vpop.permute.xlu0 %640
    %642 = vset.pattern.permute.xlu0 0
    %643 = vperm.xlu0 %642, %v396
    %v644 = vpop.permute.xlu0 %643
    %645 = vset.pattern.permute.xlu0 0
    %646 = vperm.xlu0 %645, %v397
    %v647 = vpop.permute.xlu0 %646
    %648 = vset.pattern.permute.xlu0 0
    %649 = vperm.xlu0 %648, %v398
    %v650 = vpop.permute.xlu0 %649
    %651 = vset.pattern.permute.xlu0 0
    %652 = vperm.xlu0 %651, %v399
    %v653 = vpop.permute.xlu0 %652
    %654 = vset.pattern.permute.xlu0 0
    %655 = vperm.xlu0 %654, %v400
    %v656 = vpop.permute.xlu0 %655
    %vm657 = vcmp.eq.s32.totalorder %v335, %v467
    %vm658 = vcmp.eq.s32.totalorder %v336, %v467
    %vm659 = vcmp.eq.s32.totalorder %v335, %v470
    %vm660 = vcmp.eq.s32.totalorder %v336, %v470
    %vm661 = vcmp.eq.s32.totalorder %v335, %v473
    %vm662 = vcmp.eq.s32.totalorder %v336, %v473
    %vm663 = vcmp.eq.s32.totalorder %v335, %v476
    %vm664 = vcmp.eq.s32.totalorder %v336, %v476
    %vm665 = vcmp.eq.s32.totalorder %v335, %v479
    %vm666 = vcmp.eq.s32.totalorder %v336, %v479
    %vm667 = vcmp.eq.s32.totalorder %v335, %v482
    %vm668 = vcmp.eq.s32.totalorder %v336, %v482
    %vm669 = vcmp.eq.s32.totalorder %v335, %v485
    %vm670 = vcmp.eq.s32.totalorder %v336, %v485
    %vm671 = vcmp.eq.s32.totalorder %v335, %v488
    %vm672 = vcmp.eq.s32.totalorder %v336, %v488
    %vm673 = vcmp.eq.s32.totalorder %v335, %v491
    %vm674 = vcmp.eq.s32.totalorder %v336, %v491
    %vm675 = vcmp.eq.s32.totalorder %v335, %v494
    %vm676 = vcmp.eq.s32.totalorder %v336, %v494
    %vm677 = vcmp.eq.s32.totalorder %v335, %v497
    %vm678 = vcmp.eq.s32.totalorder %v336, %v497
    %vm679 = vcmp.eq.s32.totalorder %v335, %v500
    %vm680 = vcmp.eq.s32.totalorder %v336, %v500
    %vm681 = vcmp.eq.s32.totalorder %v335, %v503
    %vm682 = vcmp.eq.s32.totalorder %v336, %v503
    %vm683 = vcmp.eq.s32.totalorder %v335, %v506
    %vm684 = vcmp.eq.s32.totalorder %v336, %v506
    %vm685 = vcmp.eq.s32.totalorder %v335, %v509
    %vm686 = vcmp.eq.s32.totalorder %v336, %v509
    %vm687 = vcmp.eq.s32.totalorder %v335, %v512
    %vm688 = vcmp.eq.s32.totalorder %v336, %v512
    %vm689 = vcmp.eq.s32.totalorder %v335, %v515
    %vm690 = vcmp.eq.s32.totalorder %v336, %v515
    %vm691 = vcmp.eq.s32.totalorder %v335, %v518
    %vm692 = vcmp.eq.s32.totalorder %v336, %v518
    %vm693 = vcmp.eq.s32.totalorder %v335, %v521
    %vm694 = vcmp.eq.s32.totalorder %v336, %v521
    %vm695 = vcmp.eq.s32.totalorder %v335, %v524
    %vm696 = vcmp.eq.s32.totalorder %v336, %v524
    %vm697 = vcmp.eq.s32.totalorder %v335, %v527
    %vm698 = vcmp.eq.s32.totalorder %v336, %v527
    %vm699 = vcmp.eq.s32.totalorder %v335, %v530
    %vm700 = vcmp.eq.s32.totalorder %v336, %v530
    %vm701 = vcmp.eq.s32.totalorder %v335, %v533
    %vm702 = vcmp.eq.s32.totalorder %v336, %v533
    %vm703 = vcmp.eq.s32.totalorder %v335, %v536
    %vm704 = vcmp.eq.s32.totalorder %v336, %v536
    %vm705 = vcmp.eq.s32.totalorder %v335, %v539
    %vm706 = vcmp.eq.s32.totalorder %v336, %v539
    %vm707 = vcmp.eq.s32.totalorder %v335, %v542
    %vm708 = vcmp.eq.s32.totalorder %v336, %v542
    %vm709 = vcmp.eq.s32.totalorder %v335, %v545
    %vm710 = vcmp.eq.s32.totalorder %v336, %v545
    %vm711 = vcmp.eq.s32.totalorder %v335, %v548
    %vm712 = vcmp.eq.s32.totalorder %v336, %v548
    %vm713 = vcmp.eq.s32.totalorder %v335, %v551
    %vm714 = vcmp.eq.s32.totalorder %v336, %v551
    %vm715 = vcmp.eq.s32.totalorder %v335, %v554
    %vm716 = vcmp.eq.s32.totalorder %v336, %v554
    %vm717 = vcmp.eq.s32.totalorder %v335, %v557
    %vm718 = vcmp.eq.s32.totalorder %v336, %v557
    %vm719 = vcmp.eq.s32.totalorder %v335, %v560
    %vm720 = vcmp.eq.s32.totalorder %v336, %v560
    %vm721 = vcmp.eq.s32.totalorder %v335, %v563
    %vm722 = vcmp.eq.s32.totalorder %v336, %v563
    %vm723 = vcmp.eq.s32.totalorder %v335, %v566
    %vm724 = vcmp.eq.s32.totalorder %v336, %v566
    %vm725 = vcmp.eq.s32.totalorder %v335, %v569
    %vm726 = vcmp.eq.s32.totalorder %v336, %v569
    %vm727 = vcmp.eq.s32.totalorder %v335, %v572
    %vm728 = vcmp.eq.s32.totalorder %v336, %v572
    %vm729 = vcmp.eq.s32.totalorder %v335, %v575
    %vm730 = vcmp.eq.s32.totalorder %v336, %v575
    %vm731 = vcmp.eq.s32.totalorder %v335, %v578
    %vm732 = vcmp.eq.s32.totalorder %v336, %v578
    %vm733 = vcmp.eq.s32.totalorder %v335, %v581
    %vm734 = vcmp.eq.s32.totalorder %v336, %v581
    %vm735 = vcmp.eq.s32.totalorder %v335, %v584
    %vm736 = vcmp.eq.s32.totalorder %v336, %v584
    %vm737 = vcmp.eq.s32.totalorder %v335, %v587
    %vm738 = vcmp.eq.s32.totalorder %v336, %v587
    %vm739 = vcmp.eq.s32.totalorder %v335, %v590
    %vm740 = vcmp.eq.s32.totalorder %v336, %v590
    %vm741 = vcmp.eq.s32.totalorder %v335, %v593
    %vm742 = vcmp.eq.s32.totalorder %v336, %v593
    %vm743 = vcmp.eq.s32.totalorder %v335, %v596
    %vm744 = vcmp.eq.s32.totalorder %v336, %v596
    %vm745 = vcmp.eq.s32.totalorder %v335, %v599
    %vm746 = vcmp.eq.s32.totalorder %v336, %v599
    %vm747 = vcmp.eq.s32.totalorder %v335, %v602
    %vm748 = vcmp.eq.s32.totalorder %v336, %v602
    %vm749 = vcmp.eq.s32.totalorder %v335, %v605
    %vm750 = vcmp.eq.s32.totalorder %v336, %v605
    %vm751 = vcmp.eq.s32.totalorder %v335, %v608
    %vm752 = vcmp.eq.s32.totalorder %v336, %v608
    %vm753 = vcmp.eq.s32.totalorder %v335, %v611
    %vm754 = vcmp.eq.s32.totalorder %v336, %v611
    %vm755 = vcmp.eq.s32.totalorder %v335, %v614
    %vm756 = vcmp.eq.s32.totalorder %v336, %v614
    %vm757 = vcmp.eq.s32.totalorder %v335, %v617
    %vm758 = vcmp.eq.s32.totalorder %v336, %v617
    %vm759 = vcmp.eq.s32.totalorder %v335, %v620
    %vm760 = vcmp.eq.s32.totalorder %v336, %v620
    %vm761 = vcmp.eq.s32.totalorder %v335, %v623
    %vm762 = vcmp.eq.s32.totalorder %v336, %v623
    %vm763 = vcmp.eq.s32.totalorder %v335, %v626
    %vm764 = vcmp.eq.s32.totalorder %v336, %v626
    %vm765 = vcmp.eq.s32.totalorder %v335, %v629
    %vm766 = vcmp.eq.s32.totalorder %v336, %v629
    %vm767 = vcmp.eq.s32.totalorder %v335, %v632
    %vm768 = vcmp.eq.s32.totalorder %v336, %v632
    %vm769 = vcmp.eq.s32.totalorder %v335, %v635
    %vm770 = vcmp.eq.s32.totalorder %v336, %v635
    %vm771 = vcmp.eq.s32.totalorder %v335, %v638
    %vm772 = vcmp.eq.s32.totalorder %v336, %v638
    %vm773 = vcmp.eq.s32.totalorder %v335, %v641
    %vm774 = vcmp.eq.s32.totalorder %v336, %v641
    %vm775 = vcmp.eq.s32.totalorder %v335, %v644
    %vm776 = vcmp.eq.s32.totalorder %v336, %v644
    %vm777 = vcmp.eq.s32.totalorder %v335, %v647
    %vm778 = vcmp.eq.s32.totalorder %v336, %v647
    %vm779 = vcmp.eq.s32.totalorder %v335, %v650
    %vm780 = vcmp.eq.s32.totalorder %v336, %v650
    %vm781 = vcmp.eq.s32.totalorder %v335, %v653
    %vm782 = vcmp.eq.s32.totalorder %v336, %v653
    %vm783 = vcmp.eq.s32.totalorder %v335, %v656
    %vm784 = vcmp.eq.s32.totalorder %v336, %v656
    %v785 = vadd.s32 %v401, 128
    %v786 = vadd.s32 %v402, 128
    %v787 = vadd.s32 %v403, 128
    %v788 = vadd.s32 %v404, 128
    %v789 = vadd.s32 %v405, 128
    %v790 = vadd.s32 %v406, 128
    %v791 = vadd.s32 %v407, 128
    %v792 = vadd.s32 %v408, 128
    %v793 = vadd.s32 %v409, 128
    %v794 = vadd.s32 %v410, 128
    %v795 = vadd.s32 %v411, 128
    %v796 = vadd.s32 %v412, 128
    %v797 = vadd.s32 %v413, 128
    %v798 = vadd.s32 %v414, 128
    %v799 = vadd.s32 %v415, 128
    %v800 = vadd.s32 %v416, 128
    %v801 = vadd.s32 %v417, 128
    %v802 = vadd.s32 %v418, 128
    %v803 = vadd.s32 %v419, 128
    %v804 = vadd.s32 %v420, 128
    %v805 = vadd.s32 %v421, 128
    %v806 = vadd.s32 %v422, 128
    %v807 = vadd.s32 %v423, 128
    %v808 = vadd.s32 %v424, 128
    %v809 = vadd.s32 %v425, 128
    %v810 = vadd.s32 %v426, 128
    %v811 = vadd.s32 %v427, 128
    %v812 = vadd.s32 %v428, 128
    %v813 = vadd.s32 %v429, 128
    %v814 = vadd.s32 %v430, 128
    %v815 = vadd.s32 %v431, 128
    %v816 = vadd.s32 %v432, 128
    %v817 = vadd.s32 %v433, 128
    %v818 = vadd.s32 %v434, 128
    %v819 = vadd.s32 %v435, 128
    %v820 = vadd.s32 %v436, 128
    %v821 = vadd.s32 %v437, 128
    %v822 = vadd.s32 %v438, 128
    %v823 = vadd.s32 %v439, 128
    %v824 = vadd.s32 %v440, 128
    %v825 = vadd.s32 %v441, 128
    %v826 = vadd.s32 %v442, 128
    %v827 = vadd.s32 %v443, 128
    %v828 = vadd.s32 %v444, 128
    %v829 = vadd.s32 %v445, 128
    %v830 = vadd.s32 %v446, 128
    %v831 = vadd.s32 %v447, 128
    %v832 = vadd.s32 %v448, 128
    %v833 = vadd.s32 %v449, 128
    %v834 = vadd.s32 %v450, 128
    %v835 = vadd.s32 %v451, 128
    %v836 = vadd.s32 %v452, 128
    %v837 = vadd.s32 %v453, 128
    %v838 = vadd.s32 %v454, 128
    %v839 = vadd.s32 %v455, 128
    %v840 = vadd.s32 %v456, 128
    %v841 = vadd.s32 %v457, 128
    %v842 = vadd.s32 %v458, 128
    %v843 = vadd.s32 %v459, 128
    %v844 = vadd.s32 %v460, 128
    %v845 = vadd.s32 %v461, 128
    %v846 = vadd.s32 %v462, 128
    %v847 = vadd.s32 %v463, 128
    %v848 = vadd.s32 %v464, 128
    %849 = vset.pattern.permute.xlu0 0
    %850 = vperm.xlu0 %849, %v785
    %v851 = vpop.permute.xlu0 %850
    %852 = vset.pattern.permute.xlu0 0
    %853 = vperm.xlu0 %852, %v786
    %v854 = vpop.permute.xlu0 %853
    %855 = vset.pattern.permute.xlu0 0
    %856 = vperm.xlu0 %855, %v787
    %v857 = vpop.permute.xlu0 %856
    %858 = vset.pattern.permute.xlu0 0
    %859 = vperm.xlu0 %858, %v788
    %v860 = vpop.permute.xlu0 %859
    %861 = vset.pattern.permute.xlu0 0
    %862 = vperm.xlu0 %861, %v789
    %v863 = vpop.permute.xlu0 %862
    %864 = vset.pattern.permute.xlu0 0
    %865 = vperm.xlu0 %864, %v790
    %v866 = vpop.permute.xlu0 %865
    %867 = vset.pattern.permute.xlu0 0
    %868 = vperm.xlu0 %867, %v791
    %v869 = vpop.permute.xlu0 %868
    %870 = vset.pattern.permute.xlu0 0
    %871 = vperm.xlu0 %870, %v792
    %v872 = vpop.permute.xlu0 %871
    %873 = vset.pattern.permute.xlu0 0
    %874 = vperm.xlu0 %873, %v793
    %v875 = vpop.permute.xlu0 %874
    %876 = vset.pattern.permute.xlu0 0
    %877 = vperm.xlu0 %876, %v794
    %v878 = vpop.permute.xlu0 %877
    %879 = vset.pattern.permute.xlu0 0
    %880 = vperm.xlu0 %879, %v795
    %v881 = vpop.permute.xlu0 %880
    %882 = vset.pattern.permute.xlu0 0
    %883 = vperm.xlu0 %882, %v796
    %v884 = vpop.permute.xlu0 %883
    %885 = vset.pattern.permute.xlu0 0
    %886 = vperm.xlu0 %885, %v797
    %v887 = vpop.permute.xlu0 %886
    %888 = vset.pattern.permute.xlu0 0
    %889 = vperm.xlu0 %888, %v798
    %v890 = vpop.permute.xlu0 %889
    %891 = vset.pattern.permute.xlu0 0
    %892 = vperm.xlu0 %891, %v799
    %v893 = vpop.permute.xlu0 %892
    %894 = vset.pattern.permute.xlu0 0
    %895 = vperm.xlu0 %894, %v800
    %v896 = vpop.permute.xlu0 %895
    %897 = vset.pattern.permute.xlu0 0
    %898 = vperm.xlu0 %897, %v801
    %v899 = vpop.permute.xlu0 %898
    %900 = vset.pattern.permute.xlu0 0
    %901 = vperm.xlu0 %900, %v802
    %v902 = vpop.permute.xlu0 %901
    %903 = vset.pattern.permute.xlu0 0
    %904 = vperm.xlu0 %903, %v803
    %v905 = vpop.permute.xlu0 %904
    %906 = vset.pattern.permute.xlu0 0
    %907 = vperm.xlu0 %906, %v804
    %v908 = vpop.permute.xlu0 %907
    %909 = vset.pattern.permute.xlu0 0
    %910 = vperm.xlu0 %909, %v805
    %v911 = vpop.permute.xlu0 %910
    %912 = vset.pattern.permute.xlu0 0
    %913 = vperm.xlu0 %912, %v806
    %v914 = vpop.permute.xlu0 %913
    %915 = vset.pattern.permute.xlu0 0
    %916 = vperm.xlu0 %915, %v807
    %v917 = vpop.permute.xlu0 %916
    %918 = vset.pattern.permute.xlu0 0
    %919 = vperm.xlu0 %918, %v808
    %v920 = vpop.permute.xlu0 %919
    %921 = vset.pattern.permute.xlu0 0
    %922 = vperm.xlu0 %921, %v809
    %v923 = vpop.permute.xlu0 %922
    %924 = vset.pattern.permute.xlu0 0
    %925 = vperm.xlu0 %924, %v810
    %v926 = vpop.permute.xlu0 %925
    %927 = vset.pattern.permute.xlu0 0
    %928 = vperm.xlu0 %927, %v811
    %v929 = vpop.permute.xlu0 %928
    %930 = vset.pattern.permute.xlu0 0
    %931 = vperm.xlu0 %930, %v812
    %v932 = vpop.permute.xlu0 %931
    %933 = vset.pattern.permute.xlu0 0
    %934 = vperm.xlu0 %933, %v813
    %v935 = vpop.permute.xlu0 %934
    %936 = vset.pattern.permute.xlu0 0
    %937 = vperm.xlu0 %936, %v814
    %v938 = vpop.permute.xlu0 %937
    %939 = vset.pattern.permute.xlu0 0
    %940 = vperm.xlu0 %939, %v815
    %v941 = vpop.permute.xlu0 %940
    %942 = vset.pattern.permute.xlu0 0
    %943 = vperm.xlu0 %942, %v816
    %v944 = vpop.permute.xlu0 %943
    %945 = vset.pattern.permute.xlu0 0
    %946 = vperm.xlu0 %945, %v817
    %v947 = vpop.permute.xlu0 %946
    %948 = vset.pattern.permute.xlu0 0
    %949 = vperm.xlu0 %948, %v818
    %v950 = vpop.permute.xlu0 %949
    %951 = vset.pattern.permute.xlu0 0
    %952 = vperm.xlu0 %951, %v819
    %v953 = vpop.permute.xlu0 %952
    %954 = vset.pattern.permute.xlu0 0
    %955 = vperm.xlu0 %954, %v820
    %v956 = vpop.permute.xlu0 %955
    %957 = vset.pattern.permute.xlu0 0
    %958 = vperm.xlu0 %957, %v821
    %v959 = vpop.permute.xlu0 %958
    %960 = vset.pattern.permute.xlu0 0
    %961 = vperm.xlu0 %960, %v822
    %v962 = vpop.permute.xlu0 %961
    %963 = vset.pattern.permute.xlu0 0
    %964 = vperm.xlu0 %963, %v823
    %v965 = vpop.permute.xlu0 %964
    %966 = vset.pattern.permute.xlu0 0
    %967 = vperm.xlu0 %966, %v824
    %v968 = vpop.permute.xlu0 %967
    %969 = vset.pattern.permute.xlu0 0
    %970 = vperm.xlu0 %969, %v825
    %v971 = vpop.permute.xlu0 %970
    %972 = vset.pattern.permute.xlu0 0
    %973 = vperm.xlu0 %972, %v826
    %v974 = vpop.permute.xlu0 %973
    %975 = vset.pattern.permute.xlu0 0
    %976 = vperm.xlu0 %975, %v827
    %v977 = vpop.permute.xlu0 %976
    %978 = vset.pattern.permute.xlu0 0
    %979 = vperm.xlu0 %978, %v828
    %v980 = vpop.permute.xlu0 %979
    %981 = vset.pattern.permute.xlu0 0
    %982 = vperm.xlu0 %981, %v829
    %v983 = vpop.permute.xlu0 %982
    %984 = vset.pattern.permute.xlu0 0
    %985 = vperm.xlu0 %984, %v830
    %v986 = vpop.permute.xlu0 %985
    %987 = vset.pattern.permute.xlu0 0
    %988 = vperm.xlu0 %987, %v831
    %v989 = vpop.permute.xlu0 %988
    %990 = vset.pattern.permute.xlu0 0
    %991 = vperm.xlu0 %990, %v832
    %v992 = vpop.permute.xlu0 %991
    %993 = vset.pattern.permute.xlu0 0
    %994 = vperm.xlu0 %993, %v833
    %v995 = vpop.permute.xlu0 %994
    %996 = vset.pattern.permute.xlu0 0
    %997 = vperm.xlu0 %996, %v834
    %v998 = vpop.permute.xlu0 %997
    %999 = vset.pattern.permute.xlu0 0
    %1000 = vperm.xlu0 %999, %v835
    %v1001 = vpop.permute.xlu0 %1000
    %1002 = vset.pattern.permute.xlu0 0
    %1003 = vperm.xlu0 %1002, %v836
    %v1004 = vpop.permute.xlu0 %1003
    %1005 = vset.pattern.permute.xlu0 0
    %1006 = vperm.xlu0 %1005, %v837
    %v1007 = vpop.permute.xlu0 %1006
    %1008 = vset.pattern.permute.xlu0 0
    %1009 = vperm.xlu0 %1008, %v838
    %v1010 = vpop.permute.xlu0 %1009
    %1011 = vset.pattern.permute.xlu0 0
    %1012 = vperm.xlu0 %1011, %v839
    %v1013 = vpop.permute.xlu0 %1012
    %1014 = vset.pattern.permute.xlu0 0
    %1015 = vperm.xlu0 %1014, %v840
    %v1016 = vpop.permute.xlu0 %1015
    %1017 = vset.pattern.permute.xlu0 0
    %1018 = vperm.xlu0 %1017, %v841
    %v1019 = vpop.permute.xlu0 %1018
    %1020 = vset.pattern.permute.xlu0 0
    %1021 = vperm.xlu0 %1020, %v842
    %v1022 = vpop.permute.xlu0 %1021
    %1023 = vset.pattern.permute.xlu0 0
    %1024 = vperm.xlu0 %1023, %v843
    %v1025 = vpop.permute.xlu0 %1024
    %1026 = vset.pattern.permute.xlu0 0
    %1027 = vperm.xlu0 %1026, %v844
    %v1028 = vpop.permute.xlu0 %1027
    %1029 = vset.pattern.permute.xlu0 0
    %1030 = vperm.xlu0 %1029, %v845
    %v1031 = vpop.permute.xlu0 %1030
    %1032 = vset.pattern.permute.xlu0 0
    %1033 = vperm.xlu0 %1032, %v846
    %v1034 = vpop.permute.xlu0 %1033
    %1035 = vset.pattern.permute.xlu0 0
    %1036 = vperm.xlu0 %1035, %v847
    %v1037 = vpop.permute.xlu0 %1036
    %1038 = vset.pattern.permute.xlu0 0
    %1039 = vperm.xlu0 %1038, %v848
    %v1040 = vpop.permute.xlu0 %1039
    %vm1041 = vcmp.eq.s32.totalorder %v335, %v851
    %vm1042 = vcmp.eq.s32.totalorder %v336, %v851
    %vm1043 = vcmp.eq.s32.totalorder %v335, %v854
    %vm1044 = vcmp.eq.s32.totalorder %v336, %v854
    %vm1045 = vcmp.eq.s32.totalorder %v335, %v857
    %vm1046 = vcmp.eq.s32.totalorder %v336, %v857
    %vm1047 = vcmp.eq.s32.totalorder %v335, %v860
    %vm1048 = vcmp.eq.s32.totalorder %v336, %v860
    %vm1049 = vcmp.eq.s32.totalorder %v335, %v863
    %vm1050 = vcmp.eq.s32.totalorder %v336, %v863
    %vm1051 = vcmp.eq.s32.totalorder %v335, %v866
    %vm1052 = vcmp.eq.s32.totalorder %v336, %v866
    %vm1053 = vcmp.eq.s32.totalorder %v335, %v869
    %vm1054 = vcmp.eq.s32.totalorder %v336, %v869
    %vm1055 = vcmp.eq.s32.totalorder %v335, %v872
    %vm1056 = vcmp.eq.s32.totalorder %v336, %v872
    %vm1057 = vcmp.eq.s32.totalorder %v335, %v875
    %vm1058 = vcmp.eq.s32.totalorder %v336, %v875
    %vm1059 = vcmp.eq.s32.totalorder %v335, %v878
    %vm1060 = vcmp.eq.s32.totalorder %v336, %v878
    %vm1061 = vcmp.eq.s32.totalorder %v335, %v881
    %vm1062 = vcmp.eq.s32.totalorder %v336, %v881
    %vm1063 = vcmp.eq.s32.totalorder %v335, %v884
    %vm1064 = vcmp.eq.s32.totalorder %v336, %v884
    %vm1065 = vcmp.eq.s32.totalorder %v335, %v887
    %vm1066 = vcmp.eq.s32.totalorder %v336, %v887
    %vm1067 = vcmp.eq.s32.totalorder %v335, %v890
    %vm1068 = vcmp.eq.s32.totalorder %v336, %v890
    %vm1069 = vcmp.eq.s32.totalorder %v335, %v893
    %vm1070 = vcmp.eq.s32.totalorder %v336, %v893
    %vm1071 = vcmp.eq.s32.totalorder %v335, %v896
    %vm1072 = vcmp.eq.s32.totalorder %v336, %v896
    %vm1073 = vcmp.eq.s32.totalorder %v335, %v899
    %vm1074 = vcmp.eq.s32.totalorder %v336, %v899
    %vm1075 = vcmp.eq.s32.totalorder %v335, %v902
    %vm1076 = vcmp.eq.s32.totalorder %v336, %v902
    %vm1077 = vcmp.eq.s32.totalorder %v335, %v905
    %vm1078 = vcmp.eq.s32.totalorder %v336, %v905
    %vm1079 = vcmp.eq.s32.totalorder %v335, %v908
    %vm1080 = vcmp.eq.s32.totalorder %v336, %v908
    %vm1081 = vcmp.eq.s32.totalorder %v335, %v911
    %vm1082 = vcmp.eq.s32.totalorder %v336, %v911
    %vm1083 = vcmp.eq.s32.totalorder %v335, %v914
    %vm1084 = vcmp.eq.s32.totalorder %v336, %v914
    %vm1085 = vcmp.eq.s32.totalorder %v335, %v917
    %vm1086 = vcmp.eq.s32.totalorder %v336, %v917
    %vm1087 = vcmp.eq.s32.totalorder %v335, %v920
    %vm1088 = vcmp.eq.s32.totalorder %v336, %v920
    %vm1089 = vcmp.eq.s32.totalorder %v335, %v923
    %vm1090 = vcmp.eq.s32.totalorder %v336, %v923
    %vm1091 = vcmp.eq.s32.totalorder %v335, %v926
    %vm1092 = vcmp.eq.s32.totalorder %v336, %v926
    %vm1093 = vcmp.eq.s32.totalorder %v335, %v929
    %vm1094 = vcmp.eq.s32.totalorder %v336, %v929
    %vm1095 = vcmp.eq.s32.totalorder %v335, %v932
    %vm1096 = vcmp.eq.s32.totalorder %v336, %v932
    %vm1097 = vcmp.eq.s32.totalorder %v335, %v935
    %vm1098 = vcmp.eq.s32.totalorder %v336, %v935
    %vm1099 = vcmp.eq.s32.totalorder %v335, %v938
    %vm1100 = vcmp.eq.s32.totalorder %v336, %v938
    %vm1101 = vcmp.eq.s32.totalorder %v335, %v941
    %vm1102 = vcmp.eq.s32.totalorder %v336, %v941
    %vm1103 = vcmp.eq.s32.totalorder %v335, %v944
    %vm1104 = vcmp.eq.s32.totalorder %v336, %v944
    %vm1105 = vcmp.eq.s32.totalorder %v335, %v947
    %vm1106 = vcmp.eq.s32.totalorder %v336, %v947
    %vm1107 = vcmp.eq.s32.totalorder %v335, %v950
    %vm1108 = vcmp.eq.s32.totalorder %v336, %v950
    %vm1109 = vcmp.eq.s32.totalorder %v335, %v953
    %vm1110 = vcmp.eq.s32.totalorder %v336, %v953
    %vm1111 = vcmp.eq.s32.totalorder %v335, %v956
    %vm1112 = vcmp.eq.s32.totalorder %v336, %v956
    %vm1113 = vcmp.eq.s32.totalorder %v335, %v959
    %vm1114 = vcmp.eq.s32.totalorder %v336, %v959
    %vm1115 = vcmp.eq.s32.totalorder %v335, %v962
    %vm1116 = vcmp.eq.s32.totalorder %v336, %v962
    %vm1117 = vcmp.eq.s32.totalorder %v335, %v965
    %vm1118 = vcmp.eq.s32.totalorder %v336, %v965
    %vm1119 = vcmp.eq.s32.totalorder %v335, %v968
    %vm1120 = vcmp.eq.s32.totalorder %v336, %v968
    %vm1121 = vcmp.eq.s32.totalorder %v335, %v971
    %vm1122 = vcmp.eq.s32.totalorder %v336, %v971
    %vm1123 = vcmp.eq.s32.totalorder %v335, %v974
    %vm1124 = vcmp.eq.s32.totalorder %v336, %v974
    %vm1125 = vcmp.eq.s32.totalorder %v335, %v977
    %vm1126 = vcmp.eq.s32.totalorder %v336, %v977
    %vm1127 = vcmp.eq.s32.totalorder %v335, %v980
    %vm1128 = vcmp.eq.s32.totalorder %v336, %v980
    %vm1129 = vcmp.eq.s32.totalorder %v335, %v983
    %vm1130 = vcmp.eq.s32.totalorder %v336, %v983
    %vm1131 = vcmp.eq.s32.totalorder %v335, %v986
    %vm1132 = vcmp.eq.s32.totalorder %v336, %v986
    %vm1133 = vcmp.eq.s32.totalorder %v335, %v989
    %vm1134 = vcmp.eq.s32.totalorder %v336, %v989
    %vm1135 = vcmp.eq.s32.totalorder %v335, %v992
    %vm1136 = vcmp.eq.s32.totalorder %v336, %v992
    %vm1137 = vcmp.eq.s32.totalorder %v335, %v995
    %vm1138 = vcmp.eq.s32.totalorder %v336, %v995
    %vm1139 = vcmp.eq.s32.totalorder %v335, %v998
    %vm1140 = vcmp.eq.s32.totalorder %v336, %v998
    %vm1141 = vcmp.eq.s32.totalorder %v335, %v1001
    %vm1142 = vcmp.eq.s32.totalorder %v336, %v1001
    %vm1143 = vcmp.eq.s32.totalorder %v335, %v1004
    %vm1144 = vcmp.eq.s32.totalorder %v336, %v1004
    %vm1145 = vcmp.eq.s32.totalorder %v335, %v1007
    %vm1146 = vcmp.eq.s32.totalorder %v336, %v1007
    %vm1147 = vcmp.eq.s32.totalorder %v335, %v1010
    %vm1148 = vcmp.eq.s32.totalorder %v336, %v1010
    %vm1149 = vcmp.eq.s32.totalorder %v335, %v1013
    %vm1150 = vcmp.eq.s32.totalorder %v336, %v1013
    %vm1151 = vcmp.eq.s32.totalorder %v335, %v1016
    %vm1152 = vcmp.eq.s32.totalorder %v336, %v1016
    %vm1153 = vcmp.eq.s32.totalorder %v335, %v1019
    %vm1154 = vcmp.eq.s32.totalorder %v336, %v1019
    %vm1155 = vcmp.eq.s32.totalorder %v335, %v1022
    %vm1156 = vcmp.eq.s32.totalorder %v336, %v1022
    %vm1157 = vcmp.eq.s32.totalorder %v335, %v1025
    %vm1158 = vcmp.eq.s32.totalorder %v336, %v1025
    %vm1159 = vcmp.eq.s32.totalorder %v335, %v1028
    %vm1160 = vcmp.eq.s32.totalorder %v336, %v1028
    %vm1161 = vcmp.eq.s32.totalorder %v335, %v1031
    %vm1162 = vcmp.eq.s32.totalorder %v336, %v1031
    %vm1163 = vcmp.eq.s32.totalorder %v335, %v1034
    %vm1164 = vcmp.eq.s32.totalorder %v336, %v1034
    %vm1165 = vcmp.eq.s32.totalorder %v335, %v1037
    %vm1166 = vcmp.eq.s32.totalorder %v336, %v1037
    %vm1167 = vcmp.eq.s32.totalorder %v335, %v1040
    %vm1168 = vcmp.eq.s32.totalorder %v336, %v1040
    %vm1169 = vmor %vm657, %vm1041
    %vm1170 = vmor %vm658, %vm1042
    %vm1171 = vmor %vm659, %vm1043
    %vm1172 = vmor %vm660, %vm1044
    %vm1173 = vmor %vm661, %vm1045
    %vm1174 = vmor %vm662, %vm1046
    %vm1175 = vmor %vm663, %vm1047
    %vm1176 = vmor %vm664, %vm1048
    %vm1177 = vmor %vm665, %vm1049
    %vm1178 = vmor %vm666, %vm1050
    %vm1179 = vmor %vm667, %vm1051
    %vm1180 = vmor %vm668, %vm1052
    %vm1181 = vmor %vm669, %vm1053
    %vm1182 = vmor %vm670, %vm1054
    %vm1183 = vmor %vm671, %vm1055
    %vm1184 = vmor %vm672, %vm1056
    %vm1185 = vmor %vm673, %vm1057
    %vm1186 = vmor %vm674, %vm1058
    %vm1187 = vmor %vm675, %vm1059
    %vm1188 = vmor %vm676, %vm1060
    %vm1189 = vmor %vm677, %vm1061
    %vm1190 = vmor %vm678, %vm1062
    %vm1191 = vmor %vm679, %vm1063
    %vm1192 = vmor %vm680, %vm1064
    %vm1193 = vmor %vm681, %vm1065
    %vm1194 = vmor %vm682, %vm1066
    %vm1195 = vmor %vm683, %vm1067
    %vm1196 = vmor %vm684, %vm1068
    %vm1197 = vmor %vm685, %vm1069
    %vm1198 = vmor %vm686, %vm1070
    %vm1199 = vmor %vm687, %vm1071
    %vm1200 = vmor %vm688, %vm1072
    %vm1201 = vmor %vm689, %vm1073
    %vm1202 = vmor %vm690, %vm1074
    %vm1203 = vmor %vm691, %vm1075
    %vm1204 = vmor %vm692, %vm1076
    %vm1205 = vmor %vm693, %vm1077
    %vm1206 = vmor %vm694, %vm1078
    %vm1207 = vmor %vm695, %vm1079
    %vm1208 = vmor %vm696, %vm1080
    %vm1209 = vmor %vm697, %vm1081
    %vm1210 = vmor %vm698, %vm1082
    %vm1211 = vmor %vm699, %vm1083
    %vm1212 = vmor %vm700, %vm1084
    %vm1213 = vmor %vm701, %vm1085
    %vm1214 = vmor %vm702, %vm1086
    %vm1215 = vmor %vm703, %vm1087
    %vm1216 = vmor %vm704, %vm1088
    %vm1217 = vmor %vm705, %vm1089
    %vm1218 = vmor %vm706, %vm1090
    %vm1219 = vmor %vm707, %vm1091
    %vm1220 = vmor %vm708, %vm1092
    %vm1221 = vmor %vm709, %vm1093
    %vm1222 = vmor %vm710, %vm1094
    %vm1223 = vmor %vm711, %vm1095
    %vm1224 = vmor %vm712, %vm1096
    %vm1225 = vmor %vm713, %vm1097
    %vm1226 = vmor %vm714, %vm1098
    %vm1227 = vmor %vm715, %vm1099
    %vm1228 = vmor %vm716, %vm1100
    %vm1229 = vmor %vm717, %vm1101
    %vm1230 = vmor %vm718, %vm1102
    %vm1231 = vmor %vm719, %vm1103
    %vm1232 = vmor %vm720, %vm1104
    %vm1233 = vmor %vm721, %vm1105
    %vm1234 = vmor %vm722, %vm1106
    %vm1235 = vmor %vm723, %vm1107
    %vm1236 = vmor %vm724, %vm1108
    %vm1237 = vmor %vm725, %vm1109
    %vm1238 = vmor %vm726, %vm1110
    %vm1239 = vmor %vm727, %vm1111
    %vm1240 = vmor %vm728, %vm1112
    %vm1241 = vmor %vm729, %vm1113
    %vm1242 = vmor %vm730, %vm1114
    %vm1243 = vmor %vm731, %vm1115
    %vm1244 = vmor %vm732, %vm1116
    %vm1245 = vmor %vm733, %vm1117
    %vm1246 = vmor %vm734, %vm1118
    %vm1247 = vmor %vm735, %vm1119
    %vm1248 = vmor %vm736, %vm1120
    %vm1249 = vmor %vm737, %vm1121
    %vm1250 = vmor %vm738, %vm1122
    %vm1251 = vmor %vm739, %vm1123
    %vm1252 = vmor %vm740, %vm1124
    %vm1253 = vmor %vm741, %vm1125
    %vm1254 = vmor %vm742, %vm1126
    %vm1255 = vmor %vm743, %vm1127
    %vm1256 = vmor %vm744, %vm1128
    %vm1257 = vmor %vm745, %vm1129
    %vm1258 = vmor %vm746, %vm1130
    %vm1259 = vmor %vm747, %vm1131
    %vm1260 = vmor %vm748, %vm1132
    %vm1261 = vmor %vm749, %vm1133
    %vm1262 = vmor %vm750, %vm1134
    %vm1263 = vmor %vm751, %vm1135
    %vm1264 = vmor %vm752, %vm1136
    %vm1265 = vmor %vm753, %vm1137
    %vm1266 = vmor %vm754, %vm1138
    %vm1267 = vmor %vm755, %vm1139
    %vm1268 = vmor %vm756, %vm1140
    %vm1269 = vmor %vm757, %vm1141
    %vm1270 = vmor %vm758, %vm1142
    %vm1271 = vmor %vm759, %vm1143
    %vm1272 = vmor %vm760, %vm1144
    %vm1273 = vmor %vm761, %vm1145
    %vm1274 = vmor %vm762, %vm1146
    %vm1275 = vmor %vm763, %vm1147
    %vm1276 = vmor %vm764, %vm1148
    %vm1277 = vmor %vm765, %vm1149
    %vm1278 = vmor %vm766, %vm1150
    %vm1279 = vmor %vm767, %vm1151
    %vm1280 = vmor %vm768, %vm1152
    %vm1281 = vmor %vm769, %vm1153
    %vm1282 = vmor %vm770, %vm1154
    %vm1283 = vmor %vm771, %vm1155
    %vm1284 = vmor %vm772, %vm1156
    %vm1285 = vmor %vm773, %vm1157
    %vm1286 = vmor %vm774, %vm1158
    %vm1287 = vmor %vm775, %vm1159
    %vm1288 = vmor %vm776, %vm1160
    %vm1289 = vmor %vm777, %vm1161
    %vm1290 = vmor %vm778, %vm1162
    %vm1291 = vmor %vm779, %vm1163
    %vm1292 = vmor %vm780, %vm1164
    %vm1293 = vmor %vm781, %vm1165
    %vm1294 = vmor %vm782, %vm1166
    %vm1295 = vmor %vm783, %vm1167
    %vm1296 = vmor %vm784, %vm1168
    %v1297 = vsel %vm1169, 1, 0
    %v1298 = vsel %vm1170, 1, 0
    %v1299 = vsel %vm1171, 1, 0
    %v1300 = vsel %vm1172, 1, 0
    %v1301 = vsel %vm1173, 1, 0
    %v1302 = vsel %vm1174, 1, 0
    %v1303 = vsel %vm1175, 1, 0
    %v1304 = vsel %vm1176, 1, 0
    %v1305 = vsel %vm1177, 1, 0
    %v1306 = vsel %vm1178, 1, 0
    %v1307 = vsel %vm1179, 1, 0
    %v1308 = vsel %vm1180, 1, 0
    %v1309 = vsel %vm1181, 1, 0
    %v1310 = vsel %vm1182, 1, 0
    %v1311 = vsel %vm1183, 1, 0
    %v1312 = vsel %vm1184, 1, 0
    %v1313 = vsel %vm1185, 1, 0
    %v1314 = vsel %vm1186, 1, 0
    %v1315 = vsel %vm1187, 1, 0
    %v1316 = vsel %vm1188, 1, 0
    %v1317 = vsel %vm1189, 1, 0
    %v1318 = vsel %vm1190, 1, 0
    %v1319 = vsel %vm1191, 1, 0
    %v1320 = vsel %vm1192, 1, 0
    %v1321 = vsel %vm1193, 1, 0
    %v1322 = vsel %vm1194, 1, 0
    %v1323 = vsel %vm1195, 1, 0
    %v1324 = vsel %vm1196, 1, 0
    %v1325 = vsel %vm1197, 1, 0
    %v1326 = vsel %vm1198, 1, 0
    %v1327 = vsel %vm1199, 1, 0
    %v1328 = vsel %vm1200, 1, 0
    %v1329 = vsel %vm1201, 1, 0
    %v1330 = vsel %vm1202, 1, 0
    %v1331 = vsel %vm1203, 1, 0
    %v1332 = vsel %vm1204, 1, 0
    %v1333 = vsel %vm1205, 1, 0
    %v1334 = vsel %vm1206, 1, 0
    %v1335 = vsel %vm1207, 1, 0
    %v1336 = vsel %vm1208, 1, 0
    %v1337 = vsel %vm1209, 1, 0
    %v1338 = vsel %vm1210, 1, 0
    %v1339 = vsel %vm1211, 1, 0
    %v1340 = vsel %vm1212, 1, 0
    %v1341 = vsel %vm1213, 1, 0
    %v1342 = vsel %vm1214, 1, 0
    %v1343 = vsel %vm1215, 1, 0
    %v1344 = vsel %vm1216, 1, 0
    %v1345 = vsel %vm1217, 1, 0
    %v1346 = vsel %vm1218, 1, 0
    %v1347 = vsel %vm1219, 1, 0
    %v1348 = vsel %vm1220, 1, 0
    %v1349 = vsel %vm1221, 1, 0
    %v1350 = vsel %vm1222, 1, 0
    %v1351 = vsel %vm1223, 1, 0
    %v1352 = vsel %vm1224, 1, 0
    %v1353 = vsel %vm1225, 1, 0
    %v1354 = vsel %vm1226, 1, 0
    %v1355 = vsel %vm1227, 1, 0
    %v1356 = vsel %vm1228, 1, 0
    %v1357 = vsel %vm1229, 1, 0
    %v1358 = vsel %vm1230, 1, 0
    %v1359 = vsel %vm1231, 1, 0
    %v1360 = vsel %vm1232, 1, 0
    %v1361 = vsel %vm1233, 1, 0
    %v1362 = vsel %vm1234, 1, 0
    %v1363 = vsel %vm1235, 1, 0
    %v1364 = vsel %vm1236, 1, 0
    %v1365 = vsel %vm1237, 1, 0
    %v1366 = vsel %vm1238, 1, 0
    %v1367 = vsel %vm1239, 1, 0
    %v1368 = vsel %vm1240, 1, 0
    %v1369 = vsel %vm1241, 1, 0
    %v1370 = vsel %vm1242, 1, 0
    %v1371 = vsel %vm1243, 1, 0
    %v1372 = vsel %vm1244, 1, 0
    %v1373 = vsel %vm1245, 1, 0
    %v1374 = vsel %vm1246, 1, 0
    %v1375 = vsel %vm1247, 1, 0
    %v1376 = vsel %vm1248, 1, 0
    %v1377 = vsel %vm1249, 1, 0
    %v1378 = vsel %vm1250, 1, 0
    %v1379 = vsel %vm1251, 1, 0
    %v1380 = vsel %vm1252, 1, 0
    %v1381 = vsel %vm1253, 1, 0
    %v1382 = vsel %vm1254, 1, 0
    %v1383 = vsel %vm1255, 1, 0
    %v1384 = vsel %vm1256, 1, 0
    %v1385 = vsel %vm1257, 1, 0
    %v1386 = vsel %vm1258, 1, 0
    %v1387 = vsel %vm1259, 1, 0
    %v1388 = vsel %vm1260, 1, 0
    %v1389 = vsel %vm1261, 1, 0
    %v1390 = vsel %vm1262, 1, 0
    %v1391 = vsel %vm1263, 1, 0
    %v1392 = vsel %vm1264, 1, 0
    %v1393 = vsel %vm1265, 1, 0
    %v1394 = vsel %vm1266, 1, 0
    %v1395 = vsel %vm1267, 1, 0
    %v1396 = vsel %vm1268, 1, 0
    %v1397 = vsel %vm1269, 1, 0
    %v1398 = vsel %vm1270, 1, 0
    %v1399 = vsel %vm1271, 1, 0
    %v1400 = vsel %vm1272, 1, 0
    %v1401 = vsel %vm1273, 1, 0
    %v1402 = vsel %vm1274, 1, 0
    %v1403 = vsel %vm1275, 1, 0
    %v1404 = vsel %vm1276, 1, 0
    %v1405 = vsel %vm1277, 1, 0
    %v1406 = vsel %vm1278, 1, 0
    %v1407 = vsel %vm1279, 1, 0
    %v1408 = vsel %vm1280, 1, 0
    %v1409 = vsel %vm1281, 1, 0
    %v1410 = vsel %vm1282, 1, 0
    %v1411 = vsel %vm1283, 1, 0
    %v1412 = vsel %vm1284, 1, 0
    %v1413 = vsel %vm1285, 1, 0
    %v1414 = vsel %vm1286, 1, 0
    %v1415 = vsel %vm1287, 1, 0
    %v1416 = vsel %vm1288, 1, 0
    %v1417 = vsel %vm1289, 1, 0
    %v1418 = vsel %vm1290, 1, 0
    %v1419 = vsel %vm1291, 1, 0
    %v1420 = vsel %vm1292, 1, 0
    %v1421 = vsel %vm1293, 1, 0
    %v1422 = vsel %vm1294, 1, 0
    %v1423 = vsel %vm1295, 1, 0
    %v1424 = vsel %vm1296, 1, 0
    %v1425 = vcvt.s32.f32 %v1297
    %v1426 = vcvt.s32.f32 %v1298
    %v1427 = vcvt.s32.f32 %v1299
    %v1428 = vcvt.s32.f32 %v1300
    %v1429 = vcvt.s32.f32 %v1301
    %v1430 = vcvt.s32.f32 %v1302
    %v1431 = vcvt.s32.f32 %v1303
    %v1432 = vcvt.s32.f32 %v1304
    %v1433 = vcvt.s32.f32 %v1305
    %v1434 = vcvt.s32.f32 %v1306
    %v1435 = vcvt.s32.f32 %v1307
    %v1436 = vcvt.s32.f32 %v1308
    %v1437 = vcvt.s32.f32 %v1309
    %v1438 = vcvt.s32.f32 %v1310
    %v1439 = vcvt.s32.f32 %v1311
    %v1440 = vcvt.s32.f32 %v1312
    %v1441 = vcvt.s32.f32 %v1313
    %v1442 = vcvt.s32.f32 %v1314
    %v1443 = vcvt.s32.f32 %v1315
    %v1444 = vcvt.s32.f32 %v1316
    %v1445 = vcvt.s32.f32 %v1317
    %v1446 = vcvt.s32.f32 %v1318
    %v1447 = vcvt.s32.f32 %v1319
    %v1448 = vcvt.s32.f32 %v1320
    %v1449 = vcvt.s32.f32 %v1321
    %v1450 = vcvt.s32.f32 %v1322
    %v1451 = vcvt.s32.f32 %v1323
    %v1452 = vcvt.s32.f32 %v1324
    %v1453 = vcvt.s32.f32 %v1325
    %v1454 = vcvt.s32.f32 %v1326
    %v1455 = vcvt.s32.f32 %v1327
    %v1456 = vcvt.s32.f32 %v1328
    %v1457 = vcvt.s32.f32 %v1329
    %v1458 = vcvt.s32.f32 %v1330
    %v1459 = vcvt.s32.f32 %v1331
    %v1460 = vcvt.s32.f32 %v1332
    %v1461 = vcvt.s32.f32 %v1333
    %v1462 = vcvt.s32.f32 %v1334
    %v1463 = vcvt.s32.f32 %v1335
    %v1464 = vcvt.s32.f32 %v1336
    %v1465 = vcvt.s32.f32 %v1337
    %v1466 = vcvt.s32.f32 %v1338
    %v1467 = vcvt.s32.f32 %v1339
    %v1468 = vcvt.s32.f32 %v1340
    %v1469 = vcvt.s32.f32 %v1341
    %v1470 = vcvt.s32.f32 %v1342
    %v1471 = vcvt.s32.f32 %v1343
    %v1472 = vcvt.s32.f32 %v1344
    %v1473 = vcvt.s32.f32 %v1345
    %v1474 = vcvt.s32.f32 %v1346
    %v1475 = vcvt.s32.f32 %v1347
    %v1476 = vcvt.s32.f32 %v1348
    %v1477 = vcvt.s32.f32 %v1349
    %v1478 = vcvt.s32.f32 %v1350
    %v1479 = vcvt.s32.f32 %v1351
    %v1480 = vcvt.s32.f32 %v1352
    %v1481 = vcvt.s32.f32 %v1353
    %v1482 = vcvt.s32.f32 %v1354
    %v1483 = vcvt.s32.f32 %v1355
    %v1484 = vcvt.s32.f32 %v1356
    %v1485 = vcvt.s32.f32 %v1357
    %v1486 = vcvt.s32.f32 %v1358
    %v1487 = vcvt.s32.f32 %v1359
    %v1488 = vcvt.s32.f32 %v1360
    %v1489 = vcvt.s32.f32 %v1361
    %v1490 = vcvt.s32.f32 %v1362
    %v1491 = vcvt.s32.f32 %v1363
    %v1492 = vcvt.s32.f32 %v1364
    %v1493 = vcvt.s32.f32 %v1365
    %v1494 = vcvt.s32.f32 %v1366
    %v1495 = vcvt.s32.f32 %v1367
    %v1496 = vcvt.s32.f32 %v1368
    %v1497 = vcvt.s32.f32 %v1369
    %v1498 = vcvt.s32.f32 %v1370
    %v1499 = vcvt.s32.f32 %v1371
    %v1500 = vcvt.s32.f32 %v1372
    %v1501 = vcvt.s32.f32 %v1373
    %v1502 = vcvt.s32.f32 %v1374
    %v1503 = vcvt.s32.f32 %v1375
    %v1504 = vcvt.s32.f32 %v1376
    %v1505 = vcvt.s32.f32 %v1377
    %v1506 = vcvt.s32.f32 %v1378
    %v1507 = vcvt.s32.f32 %v1379
    %v1508 = vcvt.s32.f32 %v1380
    %v1509 = vcvt.s32.f32 %v1381
    %v1510 = vcvt.s32.f32 %v1382
    %v1511 = vcvt.s32.f32 %v1383
    %v1512 = vcvt.s32.f32 %v1384
    %v1513 = vcvt.s32.f32 %v1385
    %v1514 = vcvt.s32.f32 %v1386
    %v1515 = vcvt.s32.f32 %v1387
    %v1516 = vcvt.s32.f32 %v1388
    %v1517 = vcvt.s32.f32 %v1389
    %v1518 = vcvt.s32.f32 %v1390
    %v1519 = vcvt.s32.f32 %v1391
    %v1520 = vcvt.s32.f32 %v1392
    %v1521 = vcvt.s32.f32 %v1393
    %v1522 = vcvt.s32.f32 %v1394
    %v1523 = vcvt.s32.f32 %v1395
    %v1524 = vcvt.s32.f32 %v1396
    %v1525 = vcvt.s32.f32 %v1397
    %v1526 = vcvt.s32.f32 %v1398
    %v1527 = vcvt.s32.f32 %v1399
    %v1528 = vcvt.s32.f32 %v1400
    %v1529 = vcvt.s32.f32 %v1401
    %v1530 = vcvt.s32.f32 %v1402
    %v1531 = vcvt.s32.f32 %v1403
    %v1532 = vcvt.s32.f32 %v1404
    %v1533 = vcvt.s32.f32 %v1405
    %v1534 = vcvt.s32.f32 %v1406
    %v1535 = vcvt.s32.f32 %v1407
    %v1536 = vcvt.s32.f32 %v1408
    %v1537 = vcvt.s32.f32 %v1409
    %v1538 = vcvt.s32.f32 %v1410
    %v1539 = vcvt.s32.f32 %v1411
    %v1540 = vcvt.s32.f32 %v1412
    %v1541 = vcvt.s32.f32 %v1413
    %v1542 = vcvt.s32.f32 %v1414
    %v1543 = vcvt.s32.f32 %v1415
    %v1544 = vcvt.s32.f32 %v1416
    %v1545 = vcvt.s32.f32 %v1417
    %v1546 = vcvt.s32.f32 %v1418
    %v1547 = vcvt.s32.f32 %v1419
    %v1548 = vcvt.s32.f32 %v1420
    %v1549 = vcvt.s32.f32 %v1421
    %v1550 = vcvt.s32.f32 %v1422
    %v1551 = vcvt.s32.f32 %v1423
    %v1552 = vcvt.s32.f32 %v1424
    %v1553 = vld [vmem:[#allocation3] sm:$0xff]
    %v1554 = vld [vmem:[#allocation3 + $0x8] sm:$0xff]
    %v1555 = vld [vmem:[#allocation3 + $0x10] sm:$0xff]
    %v1556 = vld [vmem:[#allocation3 + $0x18] sm:$0xff]
    %v1557 = vld [vmem:[#allocation3 + $0x20] sm:$0xff]
    %v1558 = vld [vmem:[#allocation3 + $0x28] sm:$0xff]
    %v1559 = vld [vmem:[#allocation3 + $0x30] sm:$0xff]
    %v1560 = vld [vmem:[#allocation3 + $0x38] sm:$0xff]
    %v1561 = vld [vmem:[#allocation3 + $0x40] sm:$0xff]
    %v1562 = vld [vmem:[#allocation3 + $0x48] sm:$0xff]
    %v1563 = vld [vmem:[#allocation3 + $0x50] sm:$0xff]
    %v1564 = vld [vmem:[#allocation3 + $0x58] sm:$0xff]
    %v1565 = vld [vmem:[#allocation3 + $0x60] sm:$0xff]
    %v1566 = vld [vmem:[#allocation3 + $0x68] sm:$0xff]
    %v1567 = vld [vmem:[#allocation3 + $0x70] sm:$0xff]
    %v1568 = vld [vmem:[#allocation3 + $0x78] sm:$0xff]
    %v1569 = vld [vmem:[#allocation3 + $0x80] sm:$0xff]
    %v1570 = vld [vmem:[#allocation3 + $0x88] sm:$0xff]
    %v1571 = vld [vmem:[#allocation3 + $0x90] sm:$0xff]
    %v1572 = vld [vmem:[#allocation3 + $0x98] sm:$0xff]
    %v1573 = vld [vmem:[#allocation3 + $0xa0] sm:$0xff]
    %v1574 = vld [vmem:[#allocation3 + $0xa8] sm:$0xff]
    %v1575 = vld [vmem:[#allocation3 + $0xb0] sm:$0xff]
    %v1576 = vld [vmem:[#allocation3 + $0xb8] sm:$0xff]
    %v1577 = vld [vmem:[#allocation3 + $0xc0] sm:$0xff]
    %v1578 = vld [vmem:[#allocation3 + $0xc8] sm:$0xff]
    %v1579 = vld [vmem:[#allocation3 + $0xd0] sm:$0xff]
    %v1580 = vld [vmem:[#allocation3 + $0xd8] sm:$0xff]
    %v1581 = vld [vmem:[#allocation3 + $0xe0] sm:$0xff]
    %v1582 = vld [vmem:[#allocation3 + $0xe8] sm:$0xff]
    %v1583 = vld [vmem:[#allocation3 + $0xf0] sm:$0xff]
    %v1584 = vld [vmem:[#allocation3 + $0xf8] sm:$0xff]
    %v1585 = vld [vmem:[%s5] sm:$0x1]
    %v1587 = vperm.slane %v1585, 0
    %1589 = vmatpush.msra.mxu0 %v1568
    %1590 = vmatpush.msra.mxu0 %v1567
    %1591 = vmatpush.msra.mxu0 %v1566
    %1592 = vmatpush.msra.mxu0 %v1565
    %1593 = vmatpush.msra.mxu0 %v1564
    %1594 = vmatpush.msra.mxu0 %v1563
    %1595 = vmatpush.msra.mxu0 %v1562
    %1596 = vmatpush.msra.mxu0 %v1561
    %1597 = vmatpush.msra.mxu0 %v1560
    %1598 = vmatpush.msra.mxu0 %v1559
    %1599 = vmatpush.msra.mxu0 %v1558
    %1600 = vmatpush.msra.mxu0 %v1557
    %1601 = vmatpush.msra.mxu0 %v1556
    %1602 = vmatpush.msra.mxu0 %v1555
    %1603 = vmatpush.msra.mxu0 %v1554
    %1604 = vmatpush.msra.mxu0 %v1553
    %1605 = vmatmul.f32.gmra.mxu0 %v1425
    %v1606 = vpop.f32.mrf.mxu0
    %v1607 = vadd.f32 %v1587, %v1606
    %1608 = vmatmul.f32.gmra.mxu0 %v1427
    %v1609 = vpop.f32.mrf.mxu0
    %v1610 = vadd.f32 %v1587, %v1609
    %1611 = vmatmul.f32.gmra.mxu0 %v1429
    %v1612 = vpop.f32.mrf.mxu0
    %v1613 = vadd.f32 %v1587, %v1612
    %1614 = vmatmul.f32.gmra.mxu0 %v1431
    %v1615 = vpop.f32.mrf.mxu0
    %v1616 = vadd.f32 %v1587, %v1615
    %1617 = vmatmul.f32.gmra.mxu0 %v1433
    %v1618 = vpop.f32.mrf.mxu0
    %v1619 = vadd.f32 %v1587, %v1618
    %1620 = vmatmul.f32.gmra.mxu0 %v1435
    %v1621 = vpop.f32.mrf.mxu0
    %v1622 = vadd.f32 %v1587, %v1621
    %1623 = vmatmul.f32.gmra.mxu0 %v1437
    %v1624 = vpop.f32.mrf.mxu0
    %v1625 = vadd.f32 %v1587, %v1624
    %1626 = vmatmul.f32.gmra.mxu0 %v1439
    %v1627 = vpop.f32.mrf.mxu0
    %v1628 = vadd.f32 %v1587, %v1627
    %1629 = vmatmul.f32.gmra.mxu0 %v1441
    %v1630 = vpop.f32.mrf.mxu0
    %v1631 = vadd.f32 %v1587, %v1630
    %1632 = vmatmul.f32.gmra.mxu0 %v1443
    %v1633 = vpop.f32.mrf.mxu0
    %v1634 = vadd.f32 %v1587, %v1633
    %1635 = vmatmul.f32.gmra.mxu0 %v1445
    %v1636 = vpop.f32.mrf.mxu0
    %v1637 = vadd.f32 %v1587, %v1636
    %1638 = vmatmul.f32.gmra.mxu0 %v1447
    %v1639 = vpop.f32.mrf.mxu0
    %v1640 = vadd.f32 %v1587, %v1639
    %1641 = vmatmul.f32.gmra.mxu0 %v1449
    %v1642 = vpop.f32.mrf.mxu0
    %v1643 = vadd.f32 %v1587, %v1642
    %1644 = vmatmul.f32.gmra.mxu0 %v1451
    %v1645 = vpop.f32.mrf.mxu0
    %v1646 = vadd.f32 %v1587, %v1645
    %1647 = vmatmul.f32.gmra.mxu0 %v1453
    %v1648 = vpop.f32.mrf.mxu0
    %v1649 = vadd.f32 %v1587, %v1648
    %1650 = vmatmul.f32.gmra.mxu0 %v1455
    %v1651 = vpop.f32.mrf.mxu0
    %v1652 = vadd.f32 %v1587, %v1651
    %1653 = vmatmul.f32.gmra.mxu0 %v1457
    %v1654 = vpop.f32.mrf.mxu0
    %v1655 = vadd.f32 %v1587, %v1654
    %1656 = vmatmul.f32.gmra.mxu0 %v1459
    %v1657 = vpop.f32.mrf.mxu0
    %v1658 = vadd.f32 %v1587, %v1657
    %1659 = vmatmul.f32.gmra.mxu0 %v1461
    %v1660 = vpop.f32.mrf.mxu0
    %v1661 = vadd.f32 %v1587, %v1660
    %1662 = vmatmul.f32.gmra.mxu0 %v1463
    %v1663 = vpop.f32.mrf.mxu0
    %v1664 = vadd.f32 %v1587, %v1663
    %1665 = vmatmul.f32.gmra.mxu0 %v1465
    %v1666 = vpop.f32.mrf.mxu0
    %v1667 = vadd.f32 %v1587, %v1666
    %1668 = vmatmul.f32.gmra.mxu0 %v1467
    %v1669 = vpop.f32.mrf.mxu0
    %v1670 = vadd.f32 %v1587, %v1669
    %1671 = vmatmul.f32.gmra.mxu0 %v1469
    %v1672 = vpop.f32.mrf.mxu0
    %v1673 = vadd.f32 %v1587, %v1672
    %1674 = vmatmul.f32.gmra.mxu0 %v1471
    %v1675 = vpop.f32.mrf.mxu0
    %v1676 = vadd.f32 %v1587, %v1675
    %1677 = vmatmul.f32.gmra.mxu0 %v1473
    %v1678 = vpop.f32.mrf.mxu0
    %v1679 = vadd.f32 %v1587, %v1678
    %1680 = vmatmul.f32.gmra.mxu0 %v1475
    %v1681 = vpop.f32.mrf.mxu0
    %v1682 = vadd.f32 %v1587, %v1681
    %1683 = vmatmul.f32.gmra.mxu0 %v1477
    %v1684 = vpop.f32.mrf.mxu0
    %v1685 = vadd.f32 %v1587, %v1684
    %1686 = vmatmul.f32.gmra.mxu0 %v1479
    %v1687 = vpop.f32.mrf.mxu0
    %v1688 = vadd.f32 %v1587, %v1687
    %1689 = vmatmul.f32.gmra.mxu0 %v1481
    %v1690 = vpop.f32.mrf.mxu0
    %v1691 = vadd.f32 %v1587, %v1690
    %1692 = vmatmul.f32.gmra.mxu0 %v1483
    %v1693 = vpop.f32.mrf.mxu0
    %v1694 = vadd.f32 %v1587, %v1693
    %1695 = vmatmul.f32.gmra.mxu0 %v1485
    %v1696 = vpop.f32.mrf.mxu0
    %v1697 = vadd.f32 %v1587, %v1696
    %1698 = vmatmul.f32.gmra.mxu0 %v1487
    %v1699 = vpop.f32.mrf.mxu0
    %v1700 = vadd.f32 %v1587, %v1699
    %1701 = vmatmul.f32.gmra.mxu0 %v1489
    %v1702 = vpop.f32.mrf.mxu0
    %v1703 = vadd.f32 %v1587, %v1702
    %1704 = vmatmul.f32.gmra.mxu0 %v1491
    %v1705 = vpop.f32.mrf.mxu0
    %v1706 = vadd.f32 %v1587, %v1705
    %1707 = vmatmul.f32.gmra.mxu0 %v1493
    %v1708 = vpop.f32.mrf.mxu0
    %v1709 = vadd.f32 %v1587, %v1708
    %1710 = vmatmul.f32.gmra.mxu0 %v1495
    %v1711 = vpop.f32.mrf.mxu0
    %v1712 = vadd.f32 %v1587, %v1711
    %1713 = vmatmul.f32.gmra.mxu0 %v1497
    %v1714 = vpop.f32.mrf.mxu0
    %v1715 = vadd.f32 %v1587, %v1714
    %1716 = vmatmul.f32.gmra.mxu0 %v1499
    %v1717 = vpop.f32.mrf.mxu0
    %v1718 = vadd.f32 %v1587, %v1717
    %1719 = vmatmul.f32.gmra.mxu0 %v1501
    %v1720 = vpop.f32.mrf.mxu0
    %v1721 = vadd.f32 %v1587, %v1720
    %1722 = vmatmul.f32.gmra.mxu0 %v1503
    %v1723 = vpop.f32.mrf.mxu0
    %v1724 = vadd.f32 %v1587, %v1723
    %1725 = vmatmul.f32.gmra.mxu0 %v1505
    %v1726 = vpop.f32.mrf.mxu0
    %v1727 = vadd.f32 %v1587, %v1726
    %1728 = vmatmul.f32.gmra.mxu0 %v1507
    %v1729 = vpop.f32.mrf.mxu0
    %v1730 = vadd.f32 %v1587, %v1729
    %1731 = vmatmul.f32.gmra.mxu0 %v1509
    %v1732 = vpop.f32.mrf.mxu0
    %v1733 = vadd.f32 %v1587, %v1732
    %1734 = vmatmul.f32.gmra.mxu0 %v1511
    %v1735 = vpop.f32.mrf.mxu0
    %v1736 = vadd.f32 %v1587, %v1735
    %1737 = vmatmul.f32.gmra.mxu0 %v1513
    %v1738 = vpop.f32.mrf.mxu0
    %v1739 = vadd.f32 %v1587, %v1738
    %1740 = vmatmul.f32.gmra.mxu0 %v1515
    %v1741 = vpop.f32.mrf.mxu0
    %v1742 = vadd.f32 %v1587, %v1741
    %1743 = vmatmul.f32.gmra.mxu0 %v1517
    %v1744 = vpop.f32.mrf.mxu0
    %v1745 = vadd.f32 %v1587, %v1744
    %1746 = vmatmul.f32.gmra.mxu0 %v1519
    %v1747 = vpop.f32.mrf.mxu0
    %v1748 = vadd.f32 %v1587, %v1747
    %1749 = vmatmul.f32.gmra.mxu0 %v1521
    %v1750 = vpop.f32.mrf.mxu0
    %v1751 = vadd.f32 %v1587, %v1750
    %1752 = vmatmul.f32.gmra.mxu0 %v1523
    %v1753 = vpop.f32.mrf.mxu0
    %v1754 = vadd.f32 %v1587, %v1753
    %1755 = vmatmul.f32.gmra.mxu0 %v1525
    %v1756 = vpop.f32.mrf.mxu0
    %v1757 = vadd.f32 %v1587, %v1756
    %1758 = vmatmul.f32.gmra.mxu0 %v1527
    %v1759 = vpop.f32.mrf.mxu0
    %v1760 = vadd.f32 %v1587, %v1759
    %1761 = vmatmul.f32.gmra.mxu0 %v1529
    %v1762 = vpop.f32.mrf.mxu0
    %v1763 = vadd.f32 %v1587, %v1762
    %1764 = vmatmul.f32.gmra.mxu0 %v1531
    %v1765 = vpop.f32.mrf.mxu0
    %v1766 = vadd.f32 %v1587, %v1765
    %1767 = vmatmul.f32.gmra.mxu0 %v1533
    %v1768 = vpop.f32.mrf.mxu0
    %v1769 = vadd.f32 %v1587, %v1768
    %1770 = vmatmul.f32.gmra.mxu0 %v1535
    %v1771 = vpop.f32.mrf.mxu0
    %v1772 = vadd.f32 %v1587, %v1771
    %1773 = vmatmul.f32.gmra.mxu0 %v1537
    %v1774 = vpop.f32.mrf.mxu0
    %v1775 = vadd.f32 %v1587, %v1774
    %1776 = vmatmul.f32.gmra.mxu0 %v1539
    %v1777 = vpop.f32.mrf.mxu0
    %v1778 = vadd.f32 %v1587, %v1777
    %1779 = vmatmul.f32.gmra.mxu0 %v1541
    %v1780 = vpop.f32.mrf.mxu0
    %v1781 = vadd.f32 %v1587, %v1780
    %1782 = vmatmul.f32.gmra.mxu0 %v1543
    %v1783 = vpop.f32.mrf.mxu0
    %v1784 = vadd.f32 %v1587, %v1783
    %1785 = vmatmul.f32.gmra.mxu0 %v1545
    %v1786 = vpop.f32.mrf.mxu0
    %v1787 = vadd.f32 %v1587, %v1786
    %1788 = vmatmul.f32.gmra.mxu0 %v1547
    %v1789 = vpop.f32.mrf.mxu0
    %v1790 = vadd.f32 %v1587, %v1789
    %1791 = vmatmul.f32.gmra.mxu0 %v1549
    %v1792 = vpop.f32.mrf.mxu0
    %v1793 = vadd.f32 %v1587, %v1792
    %1794 = vmatmul.f32.gmra.mxu0 %v1551
    %v1795 = vpop.f32.mrf.mxu0
    %v1796 = vadd.f32 %v1587, %v1795
    %1797 = vdwg.mxu0
    %1798 = vmatpush.msra.mxu0 %v1584
    %1799 = vmatpush.msra.mxu0 %v1583
    %1800 = vmatpush.msra.mxu0 %v1582
    %1801 = vmatpush.msra.mxu0 %v1581
    %1802 = vmatpush.msra.mxu0 %v1580
    %1803 = vmatpush.msra.mxu0 %v1579
    %1804 = vmatpush.msra.mxu0 %v1578
    %1805 = vmatpush.msra.mxu0 %v1577
    %1806 = vmatpush.msra.mxu0 %v1576
    %1807 = vmatpush.msra.mxu0 %v1575
    %1808 = vmatpush.msra.mxu0 %v1574
    %1809 = vmatpush.msra.mxu0 %v1573
    %1810 = vmatpush.msra.mxu0 %v1572
    %1811 = vmatpush.msra.mxu0 %v1571
    %1812 = vmatpush.msra.mxu0 %v1570
    %1813 = vmatpush.msra.mxu0 %v1569
    %1814 = vmatmul.f32.gmra.mxu0 %v1426
    %v1815 = vpop.f32.mrf.mxu0
    %v1816 = vadd.f32 %v1607, %v1815
    %1817 = vmatmul.f32.gmra.mxu0 %v1428
    %v1818 = vpop.f32.mrf.mxu0
    %v1819 = vadd.f32 %v1610, %v1818
    %1820 = vmatmul.f32.gmra.mxu0 %v1430
    %v1821 = vpop.f32.mrf.mxu0
    %v1822 = vadd.f32 %v1613, %v1821
    %1823 = vmatmul.f32.gmra.mxu0 %v1432
    %v1824 = vpop.f32.mrf.mxu0
    %v1825 = vadd.f32 %v1616, %v1824
    %1826 = vmatmul.f32.gmra.mxu0 %v1434
    %v1827 = vpop.f32.mrf.mxu0
    %v1828 = vadd.f32 %v1619, %v1827
    %1829 = vmatmul.f32.gmra.mxu0 %v1436
    %v1830 = vpop.f32.mrf.mxu0
    %v1831 = vadd.f32 %v1622, %v1830
    %1832 = vmatmul.f32.gmra.mxu0 %v1438
    %v1833 = vpop.f32.mrf.mxu0
    %v1834 = vadd.f32 %v1625, %v1833
    %1835 = vmatmul.f32.gmra.mxu0 %v1440
    %v1836 = vpop.f32.mrf.mxu0
    %v1837 = vadd.f32 %v1628, %v1836
    %1838 = vmatmul.f32.gmra.mxu0 %v1442
    %v1839 = vpop.f32.mrf.mxu0
    %v1840 = vadd.f32 %v1631, %v1839
    %1841 = vmatmul.f32.gmra.mxu0 %v1444
    %v1842 = vpop.f32.mrf.mxu0
    %v1843 = vadd.f32 %v1634, %v1842
    %1844 = vmatmul.f32.gmra.mxu0 %v1446
    %v1845 = vpop.f32.mrf.mxu0
    %v1846 = vadd.f32 %v1637, %v1845
    %1847 = vmatmul.f32.gmra.mxu0 %v1448
    %v1848 = vpop.f32.mrf.mxu0
    %v1849 = vadd.f32 %v1640, %v1848
    %1850 = vmatmul.f32.gmra.mxu0 %v1450
    %v1851 = vpop.f32.mrf.mxu0
    %v1852 = vadd.f32 %v1643, %v1851
    %1853 = vmatmul.f32.gmra.mxu0 %v1452
    %v1854 = vpop.f32.mrf.mxu0
    %v1855 = vadd.f32 %v1646, %v1854
    %1856 = vmatmul.f32.gmra.mxu0 %v1454
    %v1857 = vpop.f32.mrf.mxu0
    %v1858 = vadd.f32 %v1649, %v1857
    %1859 = vmatmul.f32.gmra.mxu0 %v1456
    %v1860 = vpop.f32.mrf.mxu0
    %v1861 = vadd.f32 %v1652, %v1860
    %1862 = vmatmul.f32.gmra.mxu0 %v1458
    %v1863 = vpop.f32.mrf.mxu0
    %v1864 = vadd.f32 %v1655, %v1863
    %1865 = vmatmul.f32.gmra.mxu0 %v1460
    %v1866 = vpop.f32.mrf.mxu0
    %v1867 = vadd.f32 %v1658, %v1866
    %1868 = vmatmul.f32.gmra.mxu0 %v1462
    %v1869 = vpop.f32.mrf.mxu0
    %v1870 = vadd.f32 %v1661, %v1869
    %1871 = vmatmul.f32.gmra.mxu0 %v1464
    %v1872 = vpop.f32.mrf.mxu0
    %v1873 = vadd.f32 %v1664, %v1872
    %1874 = vmatmul.f32.gmra.mxu0 %v1466
    %v1875 = vpop.f32.mrf.mxu0
    %v1876 = vadd.f32 %v1667, %v1875
    %1877 = vmatmul.f32.gmra.mxu0 %v1468
    %v1878 = vpop.f32.mrf.mxu0
    %v1879 = vadd.f32 %v1670, %v1878
    %1880 = vmatmul.f32.gmra.mxu0 %v1470
    %v1881 = vpop.f32.mrf.mxu0
    %v1882 = vadd.f32 %v1673, %v1881
    %1883 = vmatmul.f32.gmra.mxu0 %v1472
    %v1884 = vpop.f32.mrf.mxu0
    %v1885 = vadd.f32 %v1676, %v1884
    %1886 = vmatmul.f32.gmra.mxu0 %v1474
    %v1887 = vpop.f32.mrf.mxu0
    %v1888 = vadd.f32 %v1679, %v1887
    %1889 = vmatmul.f32.gmra.mxu0 %v1476
    %v1890 = vpop.f32.mrf.mxu0
    %v1891 = vadd.f32 %v1682, %v1890
    %1892 = vmatmul.f32.gmra.mxu0 %v1478
    %v1893 = vpop.f32.mrf.mxu0
    %v1894 = vadd.f32 %v1685, %v1893
    %1895 = vmatmul.f32.gmra.mxu0 %v1480
    %v1896 = vpop.f32.mrf.mxu0
    %v1897 = vadd.f32 %v1688, %v1896
    %1898 = vmatmul.f32.gmra.mxu0 %v1482
    %v1899 = vpop.f32.mrf.mxu0
    %v1900 = vadd.f32 %v1691, %v1899
    %1901 = vmatmul.f32.gmra.mxu0 %v1484
    %v1902 = vpop.f32.mrf.mxu0
    %v1903 = vadd.f32 %v1694, %v1902
    %1904 = vmatmul.f32.gmra.mxu0 %v1486
    %v1905 = vpop.f32.mrf.mxu0
    %v1906 = vadd.f32 %v1697, %v1905
    %1907 = vmatmul.f32.gmra.mxu0 %v1488
    %v1908 = vpop.f32.mrf.mxu0
    %v1909 = vadd.f32 %v1700, %v1908
    %1910 = vmatmul.f32.gmra.mxu0 %v1490
    %v1911 = vpop.f32.mrf.mxu0
    %v1912 = vadd.f32 %v1703, %v1911
    %1913 = vmatmul.f32.gmra.mxu0 %v1492
    %v1914 = vpop.f32.mrf.mxu0
    %v1915 = vadd.f32 %v1706, %v1914
    %1916 = vmatmul.f32.gmra.mxu0 %v1494
    %v1917 = vpop.f32.mrf.mxu0
    %v1918 = vadd.f32 %v1709, %v1917
    %1919 = vmatmul.f32.gmra.mxu0 %v1496
    %v1920 = vpop.f32.mrf.mxu0
    %v1921 = vadd.f32 %v1712, %v1920
    %1922 = vmatmul.f32.gmra.mxu0 %v1498
    %v1923 = vpop.f32.mrf.mxu0
    %v1924 = vadd.f32 %v1715, %v1923
    %1925 = vmatmul.f32.gmra.mxu0 %v1500
    %v1926 = vpop.f32.mrf.mxu0
    %v1927 = vadd.f32 %v1718, %v1926
    %1928 = vmatmul.f32.gmra.mxu0 %v1502
    %v1929 = vpop.f32.mrf.mxu0
    %v1930 = vadd.f32 %v1721, %v1929
    %1931 = vmatmul.f32.gmra.mxu0 %v1504
    %v1932 = vpop.f32.mrf.mxu0
    %v1933 = vadd.f32 %v1724, %v1932
    %1934 = vmatmul.f32.gmra.mxu0 %v1506
    %v1935 = vpop.f32.mrf.mxu0
    %v1936 = vadd.f32 %v1727, %v1935
    %1937 = vmatmul.f32.gmra.mxu0 %v1508
    %v1938 = vpop.f32.mrf.mxu0
    %v1939 = vadd.f32 %v1730, %v1938
    %1940 = vmatmul.f32.gmra.mxu0 %v1510
    %v1941 = vpop.f32.mrf.mxu0
    %v1942 = vadd.f32 %v1733, %v1941
    %1943 = vmatmul.f32.gmra.mxu0 %v1512
    %v1944 = vpop.f32.mrf.mxu0
    %v1945 = vadd.f32 %v1736, %v1944
    %1946 = vmatmul.f32.gmra.mxu0 %v1514
    %v1947 = vpop.f32.mrf.mxu0
    %v1948 = vadd.f32 %v1739, %v1947
    %1949 = vmatmul.f32.gmra.mxu0 %v1516
    %v1950 = vpop.f32.mrf.mxu0
    %v1951 = vadd.f32 %v1742, %v1950
    %1952 = vmatmul.f32.gmra.mxu0 %v1518
    %v1953 = vpop.f32.mrf.mxu0
    %v1954 = vadd.f32 %v1745, %v1953
    %1955 = vmatmul.f32.gmra.mxu0 %v1520
    %v1956 = vpop.f32.mrf.mxu0
    %v1957 = vadd.f32 %v1748, %v1956
    %1958 = vmatmul.f32.gmra.mxu0 %v1522
    %v1959 = vpop.f32.mrf.mxu0
    %v1960 = vadd.f32 %v1751, %v1959
    %1961 = vmatmul.f32.gmra.mxu0 %v1524
    %v1962 = vpop.f32.mrf.mxu0
    %v1963 = vadd.f32 %v1754, %v1962
    %1964 = vmatmul.f32.gmra.mxu0 %v1526
    %v1965 = vpop.f32.mrf.mxu0
    %v1966 = vadd.f32 %v1757, %v1965
    %1967 = vmatmul.f32.gmra.mxu0 %v1528
    %v1968 = vpop.f32.mrf.mxu0
    %v1969 = vadd.f32 %v1760, %v1968
    %1970 = vmatmul.f32.gmra.mxu0 %v1530
    %v1971 = vpop.f32.mrf.mxu0
    %v1972 = vadd.f32 %v1763, %v1971
    %1973 = vmatmul.f32.gmra.mxu0 %v1532
    %v1974 = vpop.f32.mrf.mxu0
    %v1975 = vadd.f32 %v1766, %v1974
    %1976 = vmatmul.f32.gmra.mxu0 %v1534
    %v1977 = vpop.f32.mrf.mxu0
    %v1978 = vadd.f32 %v1769, %v1977
    %1979 = vmatmul.f32.gmra.mxu0 %v1536
    %v1980 = vpop.f32.mrf.mxu0
    %v1981 = vadd.f32 %v1772, %v1980
    %1982 = vmatmul.f32.gmra.mxu0 %v1538
    %v1983 = vpop.f32.mrf.mxu0
    %v1984 = vadd.f32 %v1775, %v1983
    %1985 = vmatmul.f32.gmra.mxu0 %v1540
    %v1986 = vpop.f32.mrf.mxu0
    %v1987 = vadd.f32 %v1778, %v1986
    %1988 = vmatmul.f32.gmra.mxu0 %v1542
    %v1989 = vpop.f32.mrf.mxu0
    %v1990 = vadd.f32 %v1781, %v1989
    %1991 = vmatmul.f32.gmra.mxu0 %v1544
    %v1992 = vpop.f32.mrf.mxu0
    %v1993 = vadd.f32 %v1784, %v1992
    %1994 = vmatmul.f32.gmra.mxu0 %v1546
    %v1995 = vpop.f32.mrf.mxu0
    %v1996 = vadd.f32 %v1787, %v1995
    %1997 = vmatmul.f32.gmra.mxu0 %v1548
    %v1998 = vpop.f32.mrf.mxu0
    %v1999 = vadd.f32 %v1790, %v1998
    %2000 = vmatmul.f32.gmra.mxu0 %v1550
    %v2001 = vpop.f32.mrf.mxu0
    %v2002 = vadd.f32 %v1793, %v2001
    %2003 = vmatmul.f32.gmra.mxu0 %v1552
    %v2004 = vpop.f32.mrf.mxu0
    %v2005 = vadd.f32 %v1796, %v2004
    %2006 = vdwg.mxu0
    %vm2007 = vcmp.lt.s32.totalorder %v335, 3
    %v2008 = vsel %vm2007, %v1816, -1e+30
    %v2009 = vsel %vm2007, %v1819, -1e+30
    %v2010 = vsel %vm2007, %v1822, -1e+30
    %v2011 = vsel %vm2007, %v1825, -1e+30
    %v2012 = vsel %vm2007, %v1828, -1e+30
    %v2013 = vsel %vm2007, %v1831, -1e+30
    %v2014 = vsel %vm2007, %v1834, -1e+30
    %v2015 = vsel %vm2007, %v1837, -1e+30
    %v2016 = vsel %vm2007, %v1840, -1e+30
    %v2017 = vsel %vm2007, %v1843, -1e+30
    %v2018 = vsel %vm2007, %v1846, -1e+30
    %v2019 = vsel %vm2007, %v1849, -1e+30
    %v2020 = vsel %vm2007, %v1852, -1e+30
    %v2021 = vsel %vm2007, %v1855, -1e+30
    %v2022 = vsel %vm2007, %v1858, -1e+30
    %v2023 = vsel %vm2007, %v1861, -1e+30
    %v2024 = vsel %vm2007, %v1864, -1e+30
    %v2025 = vsel %vm2007, %v1867, -1e+30
    %v2026 = vsel %vm2007, %v1870, -1e+30
    %v2027 = vsel %vm2007, %v1873, -1e+30
    %v2028 = vsel %vm2007, %v1876, -1e+30
    %v2029 = vsel %vm2007, %v1879, -1e+30
    %v2030 = vsel %vm2007, %v1882, -1e+30
    %v2031 = vsel %vm2007, %v1885, -1e+30
    %v2032 = vsel %vm2007, %v1888, -1e+30
    %v2033 = vsel %vm2007, %v1891, -1e+30
    %v2034 = vsel %vm2007, %v1894, -1e+30
    %v2035 = vsel %vm2007, %v1897, -1e+30
    %v2036 = vsel %vm2007, %v1900, -1e+30
    %v2037 = vsel %vm2007, %v1903, -1e+30
    %v2038 = vsel %vm2007, %v1906, -1e+30
    %v2039 = vsel %vm2007, %v1909, -1e+30
    %v2040 = vsel %vm2007, %v1912, -1e+30
    %v2041 = vsel %vm2007, %v1915, -1e+30
    %v2042 = vsel %vm2007, %v1918, -1e+30
    %v2043 = vsel %vm2007, %v1921, -1e+30
    %v2044 = vsel %vm2007, %v1924, -1e+30
    %v2045 = vsel %vm2007, %v1927, -1e+30
    %v2046 = vsel %vm2007, %v1930, -1e+30
    %v2047 = vsel %vm2007, %v1933, -1e+30
    %v2048 = vsel %vm2007, %v1936, -1e+30
    %v2049 = vsel %vm2007, %v1939, -1e+30
    %v2050 = vsel %vm2007, %v1942, -1e+30
    %v2051 = vsel %vm2007, %v1945, -1e+30
    %v2052 = vsel %vm2007, %v1948, -1e+30
    %v2053 = vsel %vm2007, %v1951, -1e+30
    %v2054 = vsel %vm2007, %v1954, -1e+30
    %v2055 = vsel %vm2007, %v1957, -1e+30
    %v2056 = vsel %vm2007, %v1960, -1e+30
    %v2057 = vsel %vm2007, %v1963, -1e+30
    %v2058 = vsel %vm2007, %v1966, -1e+30
    %v2059 = vsel %vm2007, %v1969, -1e+30
    %v2060 = vsel %vm2007, %v1972, -1e+30
    %v2061 = vsel %vm2007, %v1975, -1e+30
    %v2062 = vsel %vm2007, %v1978, -1e+30
    %v2063 = vsel %vm2007, %v1981, -1e+30
    %v2064 = vsel %vm2007, %v1984, -1e+30
    %v2065 = vsel %vm2007, %v1987, -1e+30
    %v2066 = vsel %vm2007, %v1990, -1e+30
    %v2067 = vsel %vm2007, %v1993, -1e+30
    %v2068 = vsel %vm2007, %v1996, -1e+30
    %v2069 = vsel %vm2007, %v1999, -1e+30
    %v2070 = vsel %vm2007, %v2002, -1e+30
    %v2071 = vsel %vm2007, %v2005, -1e+30
    %2072 = vmax.xlane.f32.xlu0 %v2008
    %v2073 = vpop.xlane.xlu0 %2072
    %2074 = vmax.xlane.f32.xlu0 %v2009
    %v2075 = vpop.xlane.xlu0 %2074
    %2076 = vmax.xlane.f32.xlu0 %v2010
    %v2077 = vpop.xlane.xlu0 %2076
    %2078 = vmax.xlane.f32.xlu0 %v2011
    %v2079 = vpop.xlane.xlu0 %2078
    %2080 = vmax.xlane.f32.xlu0 %v2012
    %v2081 = vpop.xlane.xlu0 %2080
    %2082 = vmax.xlane.f32.xlu0 %v2013
    %v2083 = vpop.xlane.xlu0 %2082
    %2084 = vmax.xlane.f32.xlu0 %v2014
    %v2085 = vpop.xlane.xlu0 %2084
    %2086 = vmax.xlane.f32.xlu0 %v2015
    %v2087 = vpop.xlane.xlu0 %2086
    %2088 = vmax.xlane.f32.xlu0 %v2016
    %v2089 = vpop.xlane.xlu0 %2088
    %2090 = vmax.xlane.f32.xlu0 %v2017
    %v2091 = vpop.xlane.xlu0 %2090
    %2092 = vmax.xlane.f32.xlu0 %v2018
    %v2093 = vpop.xlane.xlu0 %2092
    %2094 = vmax.xlane.f32.xlu0 %v2019
    %v2095 = vpop.xlane.xlu0 %2094
    %2096 = vmax.xlane.f32.xlu0 %v2020
    %v2097 = vpop.xlane.xlu0 %2096
    %2098 = vmax.xlane.f32.xlu0 %v2021
    %v2099 = vpop.xlane.xlu0 %2098
    %2100 = vmax.xlane.f32.xlu0 %v2022
    %v2101 = vpop.xlane.xlu0 %2100
    %2102 = vmax.xlane.f32.xlu0 %v2023
    %v2103 = vpop.xlane.xlu0 %2102
    %2104 = vmax.xlane.f32.xlu0 %v2024
    %v2105 = vpop.xlane.xlu0 %2104
    %2106 = vmax.xlane.f32.xlu0 %v2025
    %v2107 = vpop.xlane.xlu0 %2106
    %2108 = vmax.xlane.f32.xlu0 %v2026
    %v2109 = vpop.xlane.xlu0 %2108
    %2110 = vmax.xlane.f32.xlu0 %v2027
    %v2111 = vpop.xlane.xlu0 %2110
    %2112 = vmax.xlane.f32.xlu0 %v2028
    %v2113 = vpop.xlane.xlu0 %2112
    %2114 = vmax.xlane.f32.xlu0 %v2029
    %v2115 = vpop.xlane.xlu0 %2114
    %2116 = vmax.xlane.f32.xlu0 %v2030
    %v2117 = vpop.xlane.xlu0 %2116
    %2118 = vmax.xlane.f32.xlu0 %v2031
    %v2119 = vpop.xlane.xlu0 %2118
    %2120 = vmax.xlane.f32.xlu0 %v2032
    %v2121 = vpop.xlane.xlu0 %2120
    %2122 = vmax.xlane.f32.xlu0 %v2033
    %v2123 = vpop.xlane.xlu0 %2122
    %2124 = vmax.xlane.f32.xlu0 %v2034
    %v2125 = vpop.xlane.xlu0 %2124
    %2126 = vmax.xlane.f32.xlu0 %v2035
    %v2127 = vpop.xlane.xlu0 %2126
    %2128 = vmax.xlane.f32.xlu0 %v2036
    %v2129 = vpop.xlane.xlu0 %2128
    %2130 = vmax.xlane.f32.xlu0 %v2037
    %v2131 = vpop.xlane.xlu0 %2130
    %2132 = vmax.xlane.f32.xlu0 %v2038
    %v2133 = vpop.xlane.xlu0 %2132
    %2134 = vmax.xlane.f32.xlu0 %v2039
    %v2135 = vpop.xlane.xlu0 %2134
    %2136 = vmax.xlane.f32.xlu0 %v2040
    %v2137 = vpop.xlane.xlu0 %2136
    %2138 = vmax.xlane.f32.xlu0 %v2041
    %v2139 = vpop.xlane.xlu0 %2138
    %2140 = vmax.xlane.f32.xlu0 %v2042
    %v2141 = vpop.xlane.xlu0 %2140
    %2142 = vmax.xlane.f32.xlu0 %v2043
    %v2143 = vpop.xlane.xlu0 %2142
    %2144 = vmax.xlane.f32.xlu0 %v2044
    %v2145 = vpop.xlane.xlu0 %2144
    %2146 = vmax.xlane.f32.xlu0 %v2045
    %v2147 = vpop.xlane.xlu0 %2146
    %2148 = vmax.xlane.f32.xlu0 %v2046
    %v2149 = vpop.xlane.xlu0 %2148
    %2150 = vmax.xlane.f32.xlu0 %v2047
    %v2151 = vpop.xlane.xlu0 %2150
    %2152 = vmax.xlane.f32.xlu0 %v2048
    %v2153 = vpop.xlane.xlu0 %2152
    %2154 = vmax.xlane.f32.xlu0 %v2049
    %v2155 = vpop.xlane.xlu0 %2154
    %2156 = vmax.xlane.f32.xlu0 %v2050
    %v2157 = vpop.xlane.xlu0 %2156
    %2158 = vmax.xlane.f32.xlu0 %v2051
    %v2159 = vpop.xlane.xlu0 %2158
    %2160 = vmax.xlane.f32.xlu0 %v2052
    %v2161 = vpop.xlane.xlu0 %2160
    %2162 = vmax.xlane.f32.xlu0 %v2053
    %v2163 = vpop.xlane.xlu0 %2162
    %2164 = vmax.xlane.f32.xlu0 %v2054
    %v2165 = vpop.xlane.xlu0 %2164
    %2166 = vmax.xlane.f32.xlu0 %v2055
    %v2167 = vpop.xlane.xlu0 %2166
    %2168 = vmax.xlane.f32.xlu0 %v2056
    %v2169 = vpop.xlane.xlu0 %2168
    %2170 = vmax.xlane.f32.xlu0 %v2057
    %v2171 = vpop.xlane.xlu0 %2170
    %2172 = vmax.xlane.f32.xlu0 %v2058
    %v2173 = vpop.xlane.xlu0 %2172
    %2174 = vmax.xlane.f32.xlu0 %v2059
    %v2175 = vpop.xlane.xlu0 %2174
    %2176 = vmax.xlane.f32.xlu0 %v2060
    %v2177 = vpop.xlane.xlu0 %2176
    %2178 = vmax.xlane.f32.xlu0 %v2061
    %v2179 = vpop.xlane.xlu0 %2178
    %2180 = vmax.xlane.f32.xlu0 %v2062
    %v2181 = vpop.xlane.xlu0 %2180
    %2182 = vmax.xlane.f32.xlu0 %v2063
    %v2183 = vpop.xlane.xlu0 %2182
    %2184 = vmax.xlane.f32.xlu0 %v2064
    %v2185 = vpop.xlane.xlu0 %2184
    %2186 = vmax.xlane.f32.xlu0 %v2065
    %v2187 = vpop.xlane.xlu0 %2186
    %2188 = vmax.xlane.f32.xlu0 %v2066
    %v2189 = vpop.xlane.xlu0 %2188
    %2190 = vmax.xlane.f32.xlu0 %v2067
    %v2191 = vpop.xlane.xlu0 %2190
    %2192 = vmax.xlane.f32.xlu0 %v2068
    %v2193 = vpop.xlane.xlu0 %2192
    %2194 = vmax.xlane.f32.xlu0 %v2069
    %v2195 = vpop.xlane.xlu0 %2194
    %2196 = vmax.xlane.f32.xlu0 %v2070
    %v2197 = vpop.xlane.xlu0 %2196
    %2198 = vmax.xlane.f32.xlu0 %v2071
    %v2199 = vpop.xlane.xlu0 %2198
    %v2200 = vsub.f32 %v2008, %v2073
    %v2201 = vsub.f32 %v2009, %v2075
    %v2202 = vsub.f32 %v2010, %v2077
    %v2203 = vsub.f32 %v2011, %v2079
    %v2204 = vsub.f32 %v2012, %v2081
    %v2205 = vsub.f32 %v2013, %v2083
    %v2206 = vsub.f32 %v2014, %v2085
    %v2207 = vsub.f32 %v2015, %v2087
    %v2208 = vsub.f32 %v2016, %v2089
    %v2209 = vsub.f32 %v2017, %v2091
    %v2210 = vsub.f32 %v2018, %v2093
    %v2211 = vsub.f32 %v2019, %v2095
    %v2212 = vsub.f32 %v2020, %v2097
    %v2213 = vsub.f32 %v2021, %v2099
    %v2214 = vsub.f32 %v2022, %v2101
    %v2215 = vsub.f32 %v2023, %v2103
    %v2216 = vsub.f32 %v2024, %v2105
    %v2217 = vsub.f32 %v2025, %v2107
    %v2218 = vsub.f32 %v2026, %v2109
    %v2219 = vsub.f32 %v2027, %v2111
    %v2220 = vsub.f32 %v2028, %v2113
    %v2221 = vsub.f32 %v2029, %v2115
    %v2222 = vsub.f32 %v2030, %v2117
    %v2223 = vsub.f32 %v2031, %v2119
    %v2224 = vsub.f32 %v2032, %v2121
    %v2225 = vsub.f32 %v2033, %v2123
    %v2226 = vsub.f32 %v2034, %v2125
    %v2227 = vsub.f32 %v2035, %v2127
    %v2228 = vsub.f32 %v2036, %v2129
    %v2229 = vsub.f32 %v2037, %v2131
    %v2230 = vsub.f32 %v2038, %v2133
    %v2231 = vsub.f32 %v2039, %v2135
    %v2232 = vsub.f32 %v2040, %v2137
    %v2233 = vsub.f32 %v2041, %v2139
    %v2234 = vsub.f32 %v2042, %v2141
    %v2235 = vsub.f32 %v2043, %v2143
    %v2236 = vsub.f32 %v2044, %v2145
    %v2237 = vsub.f32 %v2045, %v2147
    %v2238 = vsub.f32 %v2046, %v2149
    %v2239 = vsub.f32 %v2047, %v2151
    %v2240 = vsub.f32 %v2048, %v2153
    %v2241 = vsub.f32 %v2049, %v2155
    %v2242 = vsub.f32 %v2050, %v2157
    %v2243 = vsub.f32 %v2051, %v2159
    %v2244 = vsub.f32 %v2052, %v2161
    %v2245 = vsub.f32 %v2053, %v2163
    %v2246 = vsub.f32 %v2054, %v2165
    %v2247 = vsub.f32 %v2055, %v2167
    %v2248 = vsub.f32 %v2056, %v2169
    %v2249 = vsub.f32 %v2057, %v2171
    %v2250 = vsub.f32 %v2058, %v2173
    %v2251 = vsub.f32 %v2059, %v2175
    %v2252 = vsub.f32 %v2060, %v2177
    %v2253 = vsub.f32 %v2061, %v2179
    %v2254 = vsub.f32 %v2062, %v2181
    %v2255 = vsub.f32 %v2063, %v2183
    %v2256 = vsub.f32 %v2064, %v2185
    %v2257 = vsub.f32 %v2065, %v2187
    %v2258 = vsub.f32 %v2066, %v2189
    %v2259 = vsub.f32 %v2067, %v2191
    %v2260 = vsub.f32 %v2068, %v2193
    %v2261 = vsub.f32 %v2069, %v2195
    %v2262 = vsub.f32 %v2070, %v2197
    %v2263 = vsub.f32 %v2071, %v2199
    %v2264 = vmul.f32 %v2200, 1.442695
    %v2265 = vpow.pop %v2264
    %v2266 = vmul.f32 %v2201, 1.442695
    %v2267 = vpow.pop %v2266
    %v2268 = vmul.f32 %v2202, 1.442695
    %v2269 = vpow.pop %v2268
    %v2270 = vmul.f32 %v2203, 1.442695
    %v2271 = vpow.pop %v2270
    %v2272 = vmul.f32 %v2204, 1.442695
    %v2273 = vpow.pop %v2272
    %v2274 = vmul.f32 %v2205, 1.442695
    %v2275 = vpow.pop %v2274
    %v2276 = vmul.f32 %v2206, 1.442695
    %v2277 = vpow.pop %v2276
    %v2278 = vmul.f32 %v2207, 1.442695
    %v2279 = vpow.pop %v2278
    %v2280 = vmul.f32 %v2208, 1.442695
    %v2281 = vpow.pop %v2280
    %v2282 = vmul.f32 %v2209, 1.442695
    %v2283 = vpow.pop %v2282
    %v2284 = vmul.f32 %v2210, 1.442695
    %v2285 = vpow.pop %v2284
    %v2286 = vmul.f32 %v2211, 1.442695
    %v2287 = vpow.pop %v2286
    %v2288 = vmul.f32 %v2212, 1.442695
    %v2289 = vpow.pop %v2288
    %v2290 = vmul.f32 %v2213, 1.442695
    %v2291 = vpow.pop %v2290
    %v2292 = vmul.f32 %v2214, 1.442695
    %v2293 = vpow.pop %v2292
    %v2294 = vmul.f32 %v2215, 1.442695
    %v2295 = vpow.pop %v2294
    %v2296 = vmul.f32 %v2216, 1.442695
    %v2297 = vpow.pop %v2296
    %v2298 = vmul.f32 %v2217, 1.442695
    %v2299 = vpow.pop %v2298
    %v2300 = vmul.f32 %v2218, 1.442695
    %v2301 = vpow.pop %v2300
    %v2302 = vmul.f32 %v2219, 1.442695
    %v2303 = vpow.pop %v2302
    %v2304 = vmul.f32 %v2220, 1.442695
    %v2305 = vpow.pop %v2304
    %v2306 = vmul.f32 %v2221, 1.442695
    %v2307 = vpow.pop %v2306
    %v2308 = vmul.f32 %v2222, 1.442695
    %v2309 = vpow.pop %v2308
    %v2310 = vmul.f32 %v2223, 1.442695
    %v2311 = vpow.pop %v2310
    %v2312 = vmul.f32 %v2224, 1.442695
    %v2313 = vpow.pop %v2312
    %v2314 = vmul.f32 %v2225, 1.442695
    %v2315 = vpow.pop %v2314
    %v2316 = vmul.f32 %v2226, 1.442695
    %v2317 = vpow.pop %v2316
    %v2318 = vmul.f32 %v2227, 1.442695
    %v2319 = vpow.pop %v2318
    %v2320 = vmul.f32 %v2228, 1.442695
    %v2321 = vpow.pop %v2320
    %v2322 = vmul.f32 %v2229, 1.442695
    %v2323 = vpow.pop %v2322
    %v2324 = vmul.f32 %v2230, 1.442695
    %v2325 = vpow.pop %v2324
    %v2326 = vmul.f32 %v2231, 1.442695
    %v2327 = vpow.pop %v2326
    %v2328 = vmul.f32 %v2232, 1.442695
    %v2329 = vpow.pop %v2328
    %v2330 = vmul.f32 %v2233, 1.442695
    %v2331 = vpow.pop %v2330
    %v2332 = vmul.f32 %v2234, 1.442695
    %v2333 = vpow.pop %v2332
    %v2334 = vmul.f32 %v2235, 1.442695
    %v2335 = vpow.pop %v2334
    %v2336 = vmul.f32 %v2236, 1.442695
    %v2337 = vpow.pop %v2336
    %v2338 = vmul.f32 %v2237, 1.442695
    %v2339 = vpow.pop %v2338
    %v2340 = vmul.f32 %v2238, 1.442695
    %v2341 = vpow.pop %v2340
    %v2342 = vmul.f32 %v2239, 1.442695
    %v2343 = vpow.pop %v2342
    %v2344 = vmul.f32 %v2240, 1.442695
    %v2345 = vpow.pop %v2344
    %v2346 = vmul.f32 %v2241, 1.442695
    %v2347 = vpow.pop %v2346
    %v2348 = vmul.f32 %v2242, 1.442695
    %v2349 = vpow.pop %v2348
    %v2350 = vmul.f32 %v2243, 1.442695
    %v2351 = vpow.pop %v2350
    %v2352 = vmul.f32 %v2244, 1.442695
    %v2353 = vpow.pop %v2352
    %v2354 = vmul.f32 %v2245, 1.442695
    %v2355 = vpow.pop %v2354
    %v2356 = vmul.f32 %v2246, 1.442695
    %v2357 = vpow.pop %v2356
    %v2358 = vmul.f32 %v2247, 1.442695
    %v2359 = vpow.pop %v2358
    %v2360 = vmul.f32 %v2248, 1.442695
    %v2361 = vpow.pop %v2360
    %v2362 = vmul.f32 %v2249, 1.442695
    %v2363 = vpow.pop %v2362
    %v2364 = vmul.f32 %v2250, 1.442695
    %v2365 = vpow.pop %v2364
    %v2366 = vmul.f32 %v2251, 1.442695
    %v2367 = vpow.pop %v2366
    %v2368 = vmul.f32 %v2252, 1.442695
    %v2369 = vpow.pop %v2368
    %v2370 = vmul.f32 %v2253, 1.442695
    %v2371 = vpow.pop %v2370
    %v2372 = vmul.f32 %v2254, 1.442695
    %v2373 = vpow.pop %v2372
    %v2374 = vmul.f32 %v2255, 1.442695
    %v2375 = vpow.pop %v2374
    %v2376 = vmul.f32 %v2256, 1.442695
    %v2377 = vpow.pop %v2376
    %v2378 = vmul.f32 %v2257, 1.442695
    %v2379 = vpow.pop %v2378
    %v2380 = vmul.f32 %v2258, 1.442695
    %v2381 = vpow.pop %v2380
    %v2382 = vmul.f32 %v2259, 1.442695
    %v2383 = vpow.pop %v2382
    %v2384 = vmul.f32 %v2260, 1.442695
    %v2385 = vpow.pop %v2384
    %v2386 = vmul.f32 %v2261, 1.442695
    %v2387 = vpow.pop %v2386
    %v2388 = vmul.f32 %v2262, 1.442695
    %v2389 = vpow.pop %v2388
    %v2390 = vmul.f32 %v2263, 1.442695
    %v2391 = vpow.pop %v2390
    %2392 = vadd.xlane.f32.xlu0 %v2265
    %v2393 = vpop.xlane.xlu0 %2392
    %2394 = vadd.xlane.f32.xlu0 %v2267
    %v2395 = vpop.xlane.xlu0 %2394
    %2396 = vadd.xlane.f32.xlu0 %v2269
    %v2397 = vpop.xlane.xlu0 %2396
    %2398 = vadd.xlane.f32.xlu0 %v2271
    %v2399 = vpop.xlane.xlu0 %2398
    %2400 = vadd.xlane.f32.xlu0 %v2273
    %v2401 = vpop.xlane.xlu0 %2400
    %2402 = vadd.xlane.f32.xlu0 %v2275
    %v2403 = vpop.xlane.xlu0 %2402
    %2404 = vadd.xlane.f32.xlu0 %v2277
    %v2405 = vpop.xlane.xlu0 %2404
    %2406 = vadd.xlane.f32.xlu0 %v2279
    %v2407 = vpop.xlane.xlu0 %2406
    %2408 = vadd.xlane.f32.xlu0 %v2281
    %v2409 = vpop.xlane.xlu0 %2408
    %2410 = vadd.xlane.f32.xlu0 %v2283
    %v2411 = vpop.xlane.xlu0 %2410
    %2412 = vadd.xlane.f32.xlu0 %v2285
    %v2413 = vpop.xlane.xlu0 %2412
    %2414 = vadd.xlane.f32.xlu0 %v2287
    %v2415 = vpop.xlane.xlu0 %2414
    %2416 = vadd.xlane.f32.xlu0 %v2289
    %v2417 = vpop.xlane.xlu0 %2416
    %2418 = vadd.xlane.f32.xlu0 %v2291
    %v2419 = vpop.xlane.xlu0 %2418
    %2420 = vadd.xlane.f32.xlu0 %v2293
    %v2421 = vpop.xlane.xlu0 %2420
    %2422 = vadd.xlane.f32.xlu0 %v2295
    %v2423 = vpop.xlane.xlu0 %2422
    %2424 = vadd.xlane.f32.xlu0 %v2297
    %v2425 = vpop.xlane.xlu0 %2424
    %2426 = vadd.xlane.f32.xlu0 %v2299
    %v2427 = vpop.xlane.xlu0 %2426
    %2428 = vadd.xlane.f32.xlu0 %v2301
    %v2429 = vpop.xlane.xlu0 %2428
    %2430 = vadd.xlane.f32.xlu0 %v2303
    %v2431 = vpop.xlane.xlu0 %2430
    %2432 = vadd.xlane.f32.xlu0 %v2305
    %v2433 = vpop.xlane.xlu0 %2432
    %2434 = vadd.xlane.f32.xlu0 %v2307
    %v2435 = vpop.xlane.xlu0 %2434
    %2436 = vadd.xlane.f32.xlu0 %v2309
    %v2437 = vpop.xlane.xlu0 %2436
    %2438 = vadd.xlane.f32.xlu0 %v2311
    %v2439 = vpop.xlane.xlu0 %2438
    %2440 = vadd.xlane.f32.xlu0 %v2313
    %v2441 = vpop.xlane.xlu0 %2440
    %2442 = vadd.xlane.f32.xlu0 %v2315
    %v2443 = vpop.xlane.xlu0 %2442
    %2444 = vadd.xlane.f32.xlu0 %v2317
    %v2445 = vpop.xlane.xlu0 %2444
    %2446 = vadd.xlane.f32.xlu0 %v2319
    %v2447 = vpop.xlane.xlu0 %2446
    %2448 = vadd.xlane.f32.xlu0 %v2321
    %v2449 = vpop.xlane.xlu0 %2448
    %2450 = vadd.xlane.f32.xlu0 %v2323
    %v2451 = vpop.xlane.xlu0 %2450
    %2452 = vadd.xlane.f32.xlu0 %v2325
    %v2453 = vpop.xlane.xlu0 %2452
    %2454 = vadd.xlane.f32.xlu0 %v2327
    %v2455 = vpop.xlane.xlu0 %2454
    %2456 = vadd.xlane.f32.xlu0 %v2329
    %v2457 = vpop.xlane.xlu0 %2456
    %2458 = vadd.xlane.f32.xlu0 %v2331
    %v2459 = vpop.xlane.xlu0 %2458
    %2460 = vadd.xlane.f32.xlu0 %v2333
    %v2461 = vpop.xlane.xlu0 %2460
    %2462 = vadd.xlane.f32.xlu0 %v2335
    %v2463 = vpop.xlane.xlu0 %2462
    %2464 = vadd.xlane.f32.xlu0 %v2337
    %v2465 = vpop.xlane.xlu0 %2464
    %2466 = vadd.xlane.f32.xlu0 %v2339
    %v2467 = vpop.xlane.xlu0 %2466
    %2468 = vadd.xlane.f32.xlu0 %v2341
    %v2469 = vpop.xlane.xlu0 %2468
    %2470 = vadd.xlane.f32.xlu0 %v2343
    %v2471 = vpop.xlane.xlu0 %2470
    %2472 = vadd.xlane.f32.xlu0 %v2345
    %v2473 = vpop.xlane.xlu0 %2472
    %2474 = vadd.xlane.f32.xlu0 %v2347
    %v2475 = vpop.xlane.xlu0 %2474
    %2476 = vadd.xlane.f32.xlu0 %v2349
    %v2477 = vpop.xlane.xlu0 %2476
    %2478 = vadd.xlane.f32.xlu0 %v2351
    %v2479 = vpop.xlane.xlu0 %2478
    %2480 = vadd.xlane.f32.xlu0 %v2353
    %v2481 = vpop.xlane.xlu0 %2480
    %2482 = vadd.xlane.f32.xlu0 %v2355
    %v2483 = vpop.xlane.xlu0 %2482
    %2484 = vadd.xlane.f32.xlu0 %v2357
    %v2485 = vpop.xlane.xlu0 %2484
    %2486 = vadd.xlane.f32.xlu0 %v2359
    %v2487 = vpop.xlane.xlu0 %2486
    %2488 = vadd.xlane.f32.xlu0 %v2361
    %v2489 = vpop.xlane.xlu0 %2488
    %2490 = vadd.xlane.f32.xlu0 %v2363
    %v2491 = vpop.xlane.xlu0 %2490
    %2492 = vadd.xlane.f32.xlu0 %v2365
    %v2493 = vpop.xlane.xlu0 %2492
    %2494 = vadd.xlane.f32.xlu0 %v2367
    %v2495 = vpop.xlane.xlu0 %2494
    %2496 = vadd.xlane.f32.xlu0 %v2369
    %v2497 = vpop.xlane.xlu0 %2496
    %2498 = vadd.xlane.f32.xlu0 %v2371
    %v2499 = vpop.xlane.xlu0 %2498
    %2500 = vadd.xlane.f32.xlu0 %v2373
    %v2501 = vpop.xlane.xlu0 %2500
    %2502 = vadd.xlane.f32.xlu0 %v2375
    %v2503 = vpop.xlane.xlu0 %2502
    %2504 = vadd.xlane.f32.xlu0 %v2377
    %v2505 = vpop.xlane.xlu0 %2504
    %2506 = vadd.xlane.f32.xlu0 %v2379
    %v2507 = vpop.xlane.xlu0 %2506
    %2508 = vadd.xlane.f32.xlu0 %v2381
    %v2509 = vpop.xlane.xlu0 %2508
    %2510 = vadd.xlane.f32.xlu0 %v2383
    %v2511 = vpop.xlane.xlu0 %2510
    %2512 = vadd.xlane.f32.xlu0 %v2385
    %v2513 = vpop.xlane.xlu0 %2512
    %2514 = vadd.xlane.f32.xlu0 %v2387
    %v2515 = vpop.xlane.xlu0 %2514
    %2516 = vadd.xlane.f32.xlu0 %v2389
    %v2517 = vpop.xlane.xlu0 %2516
    %2518 = vadd.xlane.f32.xlu0 %v2391
    %v2519 = vpop.xlane.xlu0 %2518
    %v2520 = vlog2.pop %v2393
    %v2521 = vmul.f32 %v2520, 0.6931472
    %v2522 = vlog2.pop %v2395
    %v2523 = vmul.f32 %v2522, 0.6931472
    %v2524 = vlog2.pop %v2397
    %v2525 = vmul.f32 %v2524, 0.6931472
    %v2526 = vlog2.pop %v2399
    %v2527 = vmul.f32 %v2526, 0.6931472
    %v2528 = vlog2.pop %v2401
    %v2529 = vmul.f32 %v2528, 0.6931472
    %v2530 = vlog2.pop %v2403
    %v2531 = vmul.f32 %v2530, 0.6931472
    %v2532 = vlog2.pop %v2405
    %v2533 = vmul.f32 %v2532, 0.6931472
    %v2534 = vlog2.pop %v2407
    %v2535 = vmul.f32 %v2534, 0.6931472
    %v2536 = vlog2.pop %v2409
    %v2537 = vmul.f32 %v2536, 0.6931472
    %v2538 = vlog2.pop %v2411
    %v2539 = vmul.f32 %v2538, 0.6931472
    %v2540 = vlog2.pop %v2413
    %v2541 = vmul.f32 %v2540, 0.6931472
    %v2542 = vlog2.pop %v2415
    %v2543 = vmul.f32 %v2542, 0.6931472
    %v2544 = vlog2.pop %v2417
    %v2545 = vmul.f32 %v2544, 0.6931472
    %v2546 = vlog2.pop %v2419
    %v2547 = vmul.f32 %v2546, 0.6931472
    %v2548 = vlog2.pop %v2421
    %v2549 = vmul.f32 %v2548, 0.6931472
    %v2550 = vlog2.pop %v2423
    %v2551 = vmul.f32 %v2550, 0.6931472
    %v2552 = vlog2.pop %v2425
    %v2553 = vmul.f32 %v2552, 0.6931472
    %v2554 = vlog2.pop %v2427
    %v2555 = vmul.f32 %v2554, 0.6931472
    %v2556 = vlog2.pop %v2429
    %v2557 = vmul.f32 %v2556, 0.6931472
    %v2558 = vlog2.pop %v2431
    %v2559 = vmul.f32 %v2558, 0.6931472
    %v2560 = vlog2.pop %v2433
    %v2561 = vmul.f32 %v2560, 0.6931472
    %v2562 = vlog2.pop %v2435
    %v2563 = vmul.f32 %v2562, 0.6931472
    %v2564 = vlog2.pop %v2437
    %v2565 = vmul.f32 %v2564, 0.6931472
    %v2566 = vlog2.pop %v2439
    %v2567 = vmul.f32 %v2566, 0.6931472
    %v2568 = vlog2.pop %v2441
    %v2569 = vmul.f32 %v2568, 0.6931472
    %v2570 = vlog2.pop %v2443
    %v2571 = vmul.f32 %v2570, 0.6931472
    %v2572 = vlog2.pop %v2445
    %v2573 = vmul.f32 %v2572, 0.6931472
    %v2574 = vlog2.pop %v2447
    %v2575 = vmul.f32 %v2574, 0.6931472
    %v2576 = vlog2.pop %v2449
    %v2577 = vmul.f32 %v2576, 0.6931472
    %v2578 = vlog2.pop %v2451
    %v2579 = vmul.f32 %v2578, 0.6931472
    %v2580 = vlog2.pop %v2453
    %v2581 = vmul.f32 %v2580, 0.6931472
    %v2582 = vlog2.pop %v2455
    %v2583 = vmul.f32 %v2582, 0.6931472
    %v2584 = vlog2.pop %v2457
    %v2585 = vmul.f32 %v2584, 0.6931472
    %v2586 = vlog2.pop %v2459
    %v2587 = vmul.f32 %v2586, 0.6931472
    %v2588 = vlog2.pop %v2461
    %v2589 = vmul.f32 %v2588, 0.6931472
    %v2590 = vlog2.pop %v2463
    %v2591 = vmul.f32 %v2590, 0.6931472
    %v2592 = vlog2.pop %v2465
    %v2593 = vmul.f32 %v2592, 0.6931472
    %v2594 = vlog2.pop %v2467
    %v2595 = vmul.f32 %v2594, 0.6931472
    %v2596 = vlog2.pop %v2469
    %v2597 = vmul.f32 %v2596, 0.6931472
    %v2598 = vlog2.pop %v2471
    %v2599 = vmul.f32 %v2598, 0.6931472
    %v2600 = vlog2.pop %v2473
    %v2601 = vmul.f32 %v2600, 0.6931472
    %v2602 = vlog2.pop %v2475
    %v2603 = vmul.f32 %v2602, 0.6931472
    %v2604 = vlog2.pop %v2477
    %v2605 = vmul.f32 %v2604, 0.6931472
    %v2606 = vlog2.pop %v2479
    %v2607 = vmul.f32 %v2606, 0.6931472
    %v2608 = vlog2.pop %v2481
    %v2609 = vmul.f32 %v2608, 0.6931472
    %v2610 = vlog2.pop %v2483
    %v2611 = vmul.f32 %v2610, 0.6931472
    %v2612 = vlog2.pop %v2485
    %v2613 = vmul.f32 %v2612, 0.6931472
    %v2614 = vlog2.pop %v2487
    %v2615 = vmul.f32 %v2614, 0.6931472
    %v2616 = vlog2.pop %v2489
    %v2617 = vmul.f32 %v2616, 0.6931472
    %v2618 = vlog2.pop %v2491
    %v2619 = vmul.f32 %v2618, 0.6931472
    %v2620 = vlog2.pop %v2493
    %v2621 = vmul.f32 %v2620, 0.6931472
    %v2622 = vlog2.pop %v2495
    %v2623 = vmul.f32 %v2622, 0.6931472
    %v2624 = vlog2.pop %v2497
    %v2625 = vmul.f32 %v2624, 0.6931472
    %v2626 = vlog2.pop %v2499
    %v2627 = vmul.f32 %v2626, 0.6931472
    %v2628 = vlog2.pop %v2501
    %v2629 = vmul.f32 %v2628, 0.6931472
    %v2630 = vlog2.pop %v2503
    %v2631 = vmul.f32 %v2630, 0.6931472
    %v2632 = vlog2.pop %v2505
    %v2633 = vmul.f32 %v2632, 0.6931472
    %v2634 = vlog2.pop %v2507
    %v2635 = vmul.f32 %v2634, 0.6931472
    %v2636 = vlog2.pop %v2509
    %v2637 = vmul.f32 %v2636, 0.6931472
    %v2638 = vlog2.pop %v2511
    %v2639 = vmul.f32 %v2638, 0.6931472
    %v2640 = vlog2.pop %v2513
    %v2641 = vmul.f32 %v2640, 0.6931472
    %v2642 = vlog2.pop %v2515
    %v2643 = vmul.f32 %v2642, 0.6931472
    %v2644 = vlog2.pop %v2517
    %v2645 = vmul.f32 %v2644, 0.6931472
    %v2646 = vlog2.pop %v2519
    %v2647 = vmul.f32 %v2646, 0.6931472
    %v2648 = vadd.f32 %v2073, %v2521
    %v2649 = vadd.f32 %v2075, %v2523
    %v2650 = vadd.f32 %v2077, %v2525
    %v2651 = vadd.f32 %v2079, %v2527
    %v2652 = vadd.f32 %v2081, %v2529
    %v2653 = vadd.f32 %v2083, %v2531
    %v2654 = vadd.f32 %v2085, %v2533
    %v2655 = vadd.f32 %v2087, %v2535
    %v2656 = vadd.f32 %v2089, %v2537
    %v2657 = vadd.f32 %v2091, %v2539
    %v2658 = vadd.f32 %v2093, %v2541
    %v2659 = vadd.f32 %v2095, %v2543
    %v2660 = vadd.f32 %v2097, %v2545
    %v2661 = vadd.f32 %v2099, %v2547
    %v2662 = vadd.f32 %v2101, %v2549
    %v2663 = vadd.f32 %v2103, %v2551
    %v2664 = vadd.f32 %v2105, %v2553
    %v2665 = vadd.f32 %v2107, %v2555
    %v2666 = vadd.f32 %v2109, %v2557
    %v2667 = vadd.f32 %v2111, %v2559
    %v2668 = vadd.f32 %v2113, %v2561
    %v2669 = vadd.f32 %v2115, %v2563
    %v2670 = vadd.f32 %v2117, %v2565
    %v2671 = vadd.f32 %v2119, %v2567
    %v2672 = vadd.f32 %v2121, %v2569
    %v2673 = vadd.f32 %v2123, %v2571
    %v2674 = vadd.f32 %v2125, %v2573
    %v2675 = vadd.f32 %v2127, %v2575
    %v2676 = vadd.f32 %v2129, %v2577
    %v2677 = vadd.f32 %v2131, %v2579
    %v2678 = vadd.f32 %v2133, %v2581
    %v2679 = vadd.f32 %v2135, %v2583
    %v2680 = vadd.f32 %v2137, %v2585
    %v2681 = vadd.f32 %v2139, %v2587
    %v2682 = vadd.f32 %v2141, %v2589
    %v2683 = vadd.f32 %v2143, %v2591
    %v2684 = vadd.f32 %v2145, %v2593
    %v2685 = vadd.f32 %v2147, %v2595
    %v2686 = vadd.f32 %v2149, %v2597
    %v2687 = vadd.f32 %v2151, %v2599
    %v2688 = vadd.f32 %v2153, %v2601
    %v2689 = vadd.f32 %v2155, %v2603
    %v2690 = vadd.f32 %v2157, %v2605
    %v2691 = vadd.f32 %v2159, %v2607
    %v2692 = vadd.f32 %v2161, %v2609
    %v2693 = vadd.f32 %v2163, %v2611
    %v2694 = vadd.f32 %v2165, %v2613
    %v2695 = vadd.f32 %v2167, %v2615
    %v2696 = vadd.f32 %v2169, %v2617
    %v2697 = vadd.f32 %v2171, %v2619
    %v2698 = vadd.f32 %v2173, %v2621
    %v2699 = vadd.f32 %v2175, %v2623
    %v2700 = vadd.f32 %v2177, %v2625
    %v2701 = vadd.f32 %v2179, %v2627
    %v2702 = vadd.f32 %v2181, %v2629
    %v2703 = vadd.f32 %v2183, %v2631
    %v2704 = vadd.f32 %v2185, %v2633
    %v2705 = vadd.f32 %v2187, %v2635
    %v2706 = vadd.f32 %v2189, %v2637
    %v2707 = vadd.f32 %v2191, %v2639
    %v2708 = vadd.f32 %v2193, %v2641
    %v2709 = vadd.f32 %v2195, %v2643
    %v2710 = vadd.f32 %v2197, %v2645
    %v2711 = vadd.f32 %v2199, %v2647
    %s2712 = sld [smem:[#allocation5]]
    %s2713 = sld [smem:[#allocation5 + $0x1]]
    %s2714 = sld [smem:[#allocation5 + $0x2]]
    %s2715 = smul.u32 0, 512
    %v2716 = vlaneseq
    %v2717 = vshrl.u32 %v2716, 7
    %v2718 = vadd.s32 %v2717, 8
    %v2719 = vadd.s32 %v2717, 16
    %v2720 = vadd.s32 %v2717, 24
    %v2721 = vadd.s32 %v2717, 32
    %v2722 = vadd.s32 %v2717, 40
    %v2723 = vadd.s32 %v2717, 48
    %v2724 = vadd.s32 %v2717, 56
    %v2725 = vadd.s32 %v2717, 64
    %v2726 = vadd.s32 %v2717, 72
    %v2727 = vadd.s32 %v2717, 80
    %v2728 = vadd.s32 %v2717, 88
    %v2729 = vadd.s32 %v2717, 96
    %v2730 = vadd.s32 %v2717, 104
    %v2731 = vadd.s32 %v2717, 112
    %v2732 = vadd.s32 %v2717, 120
    %v2733 = vadd.s32 %v2717, 128
    %v2734 = vadd.s32 %v2717, 136
    %v2735 = vadd.s32 %v2717, 144
    %v2736 = vadd.s32 %v2717, 152
    %v2737 = vadd.s32 %v2717, 160
    %v2738 = vadd.s32 %v2717, 168
    %v2739 = vadd.s32 %v2717, 176
    %v2740 = vadd.s32 %v2717, 184
    %v2741 = vadd.s32 %v2717, 192
    %v2742 = vadd.s32 %v2717, 200
    %v2743 = vadd.s32 %v2717, 208
    %v2744 = vadd.s32 %v2717, 216
    %v2745 = vadd.s32 %v2717, 224
    %v2746 = vadd.s32 %v2717, 232
    %v2747 = vadd.s32 %v2717, 240
    %v2748 = vadd.s32 %v2717, 248
    %v2749 = vadd.s32 %v2717, 256
    %v2750 = vadd.s32 %v2717, 264
    %v2751 = vadd.s32 %v2717, 272
    %v2752 = vadd.s32 %v2717, 280
    %v2753 = vadd.s32 %v2717, 288
    %v2754 = vadd.s32 %v2717, 296
    %v2755 = vadd.s32 %v2717, 304
    %v2756 = vadd.s32 %v2717, 312
    %v2757 = vadd.s32 %v2717, 320
    %v2758 = vadd.s32 %v2717, 328
    %v2759 = vadd.s32 %v2717, 336
    %v2760 = vadd.s32 %v2717, 344
    %v2761 = vadd.s32 %v2717, 352
    %v2762 = vadd.s32 %v2717, 360
    %v2763 = vadd.s32 %v2717, 368
    %v2764 = vadd.s32 %v2717, 376
    %v2765 = vadd.s32 %v2717, 384
    %v2766 = vadd.s32 %v2717, 392
    %v2767 = vadd.s32 %v2717, 400
    %v2768 = vadd.s32 %v2717, 408
    %v2769 = vadd.s32 %v2717, 416
    %v2770 = vadd.s32 %v2717, 424
    %v2771 = vadd.s32 %v2717, 432
    %v2772 = vadd.s32 %v2717, 440
    %v2773 = vadd.s32 %v2717, 448
    %v2774 = vadd.s32 %v2717, 456
    %v2775 = vadd.s32 %v2717, 464
    %v2776 = vadd.s32 %v2717, 472
    %v2777 = vadd.s32 %v2717, 480
    %v2778 = vadd.s32 %v2717, 488
    %v2779 = vadd.s32 %v2717, 496
    %v2780 = vadd.s32 %v2717, 504
    %v2781 = vstv %s2715
    %v2782 = vadd.s32 %v2781, %v2717
    %v2783 = vadd.s32 %v2781, %v2718
    %v2784 = vadd.s32 %v2781, %v2719
    %v2785 = vadd.s32 %v2781, %v2720
    %v2786 = vadd.s32 %v2781, %v2721
    %v2787 = vadd.s32 %v2781, %v2722
    %v2788 = vadd.s32 %v2781, %v2723
    %v2789 = vadd.s32 %v2781, %v2724
    %v2790 = vadd.s32 %v2781, %v2725
    %v2791 = vadd.s32 %v2781, %v2726
    %v2792 = vadd.s32 %v2781, %v2727
    %v2793 = vadd.s32 %v2781, %v2728
    %v2794 = vadd.s32 %v2781, %v2729
    %v2795 = vadd.s32 %v2781, %v2730
    %v2796 = vadd.s32 %v2781, %v2731
    %v2797 = vadd.s32 %v2781, %v2732
    %v2798 = vadd.s32 %v2781, %v2733
    %v2799 = vadd.s32 %v2781, %v2734
    %v2800 = vadd.s32 %v2781, %v2735
    %v2801 = vadd.s32 %v2781, %v2736
    %v2802 = vadd.s32 %v2781, %v2737
    %v2803 = vadd.s32 %v2781, %v2738
    %v2804 = vadd.s32 %v2781, %v2739
    %v2805 = vadd.s32 %v2781, %v2740
    %v2806 = vadd.s32 %v2781, %v2741
    %v2807 = vadd.s32 %v2781, %v2742
    %v2808 = vadd.s32 %v2781, %v2743
    %v2809 = vadd.s32 %v2781, %v2744
    %v2810 = vadd.s32 %v2781, %v2745
    %v2811 = vadd.s32 %v2781, %v2746
    %v2812 = vadd.s32 %v2781, %v2747
    %v2813 = vadd.s32 %v2781, %v2748
    %v2814 = vadd.s32 %v2781, %v2749
    %v2815 = vadd.s32 %v2781, %v2750
    %v2816 = vadd.s32 %v2781, %v2751
    %v2817 = vadd.s32 %v2781, %v2752
    %v2818 = vadd.s32 %v2781, %v2753
    %v2819 = vadd.s32 %v2781, %v2754
    %v2820 = vadd.s32 %v2781, %v2755
    %v2821 = vadd.s32 %v2781, %v2756
    %v2822 = vadd.s32 %v2781, %v2757
    %v2823 = vadd.s32 %v2781, %v2758
    %v2824 = vadd.s32 %v2781, %v2759
    %v2825 = vadd.s32 %v2781, %v2760
    %v2826 = vadd.s32 %v2781, %v2761
    %v2827 = vadd.s32 %v2781, %v2762
    %v2828 = vadd.s32 %v2781, %v2763
    %v2829 = vadd.s32 %v2781, %v2764
    %v2830 = vadd.s32 %v2781, %v2765
    %v2831 = vadd.s32 %v2781, %v2766
    %v2832 = vadd.s32 %v2781, %v2767
    %v2833 = vadd.s32 %v2781, %v2768
    %v2834 = vadd.s32 %v2781, %v2769
    %v2835 = vadd.s32 %v2781, %v2770
    %v2836 = vadd.s32 %v2781, %v2771
    %v2837 = vadd.s32 %v2781, %v2772
    %v2838 = vadd.s32 %v2781, %v2773
    %v2839 = vadd.s32 %v2781, %v2774
    %v2840 = vadd.s32 %v2781, %v2775
    %v2841 = vadd.s32 %v2781, %v2776
    %v2842 = vadd.s32 %v2781, %v2777
    %v2843 = vadd.s32 %v2781, %v2778
    %v2844 = vadd.s32 %v2781, %v2779
    %v2845 = vadd.s32 %v2781, %v2780
    %v2846 = vstv %s2712
    %vm2847 = vcmp.lt.s32.totalorder %v2782, %v2846
    %vm2848 = vcmp.lt.s32.totalorder %v2783, %v2846
    %vm2849 = vcmp.lt.s32.totalorder %v2784, %v2846
    %vm2850 = vcmp.lt.s32.totalorder %v2785, %v2846
    %vm2851 = vcmp.lt.s32.totalorder %v2786, %v2846
    %vm2852 = vcmp.lt.s32.totalorder %v2787, %v2846
    %vm2853 = vcmp.lt.s32.totalorder %v2788, %v2846
    %vm2854 = vcmp.lt.s32.totalorder %v2789, %v2846
    %vm2855 = vcmp.lt.s32.totalorder %v2790, %v2846
    %vm2856 = vcmp.lt.s32.totalorder %v2791, %v2846
    %vm2857 = vcmp.lt.s32.totalorder %v2792, %v2846
    %vm2858 = vcmp.lt.s32.totalorder %v2793, %v2846
    %vm2859 = vcmp.lt.s32.totalorder %v2794, %v2846
    %vm2860 = vcmp.lt.s32.totalorder %v2795, %v2846
    %vm2861 = vcmp.lt.s32.totalorder %v2796, %v2846
    %vm2862 = vcmp.lt.s32.totalorder %v2797, %v2846
    %vm2863 = vcmp.lt.s32.totalorder %v2798, %v2846
    %vm2864 = vcmp.lt.s32.totalorder %v2799, %v2846
    %vm2865 = vcmp.lt.s32.totalorder %v2800, %v2846
    %vm2866 = vcmp.lt.s32.totalorder %v2801, %v2846
    %vm2867 = vcmp.lt.s32.totalorder %v2802, %v2846
    %vm2868 = vcmp.lt.s32.totalorder %v2803, %v2846
    %vm2869 = vcmp.lt.s32.totalorder %v2804, %v2846
    %vm2870 = vcmp.lt.s32.totalorder %v2805, %v2846
    %vm2871 = vcmp.lt.s32.totalorder %v2806, %v2846
    %vm2872 = vcmp.lt.s32.totalorder %v2807, %v2846
    %vm2873 = vcmp.lt.s32.totalorder %v2808, %v2846
    %vm2874 = vcmp.lt.s32.totalorder %v2809, %v2846
    %vm2875 = vcmp.lt.s32.totalorder %v2810, %v2846
    %vm2876 = vcmp.lt.s32.totalorder %v2811, %v2846
    %vm2877 = vcmp.lt.s32.totalorder %v2812, %v2846
    %vm2878 = vcmp.lt.s32.totalorder %v2813, %v2846
    %vm2879 = vcmp.lt.s32.totalorder %v2814, %v2846
    %vm2880 = vcmp.lt.s32.totalorder %v2815, %v2846
    %vm2881 = vcmp.lt.s32.totalorder %v2816, %v2846
    %vm2882 = vcmp.lt.s32.totalorder %v2817, %v2846
    %vm2883 = vcmp.lt.s32.totalorder %v2818, %v2846
    %vm2884 = vcmp.lt.s32.totalorder %v2819, %v2846
    %vm2885 = vcmp.lt.s32.totalorder %v2820, %v2846
    %vm2886 = vcmp.lt.s32.totalorder %v2821, %v2846
    %vm2887 = vcmp.lt.s32.totalorder %v2822, %v2846
    %vm2888 = vcmp.lt.s32.totalorder %v2823, %v2846
    %vm2889 = vcmp.lt.s32.totalorder %v2824, %v2846
    %vm2890 = vcmp.lt.s32.totalorder %v2825, %v2846
    %vm2891 = vcmp.lt.s32.totalorder %v2826, %v2846
    %vm2892 = vcmp.lt.s32.totalorder %v2827, %v2846
    %vm2893 = vcmp.lt.s32.totalorder %v2828, %v2846
    %vm2894 = vcmp.lt.s32.totalorder %v2829, %v2846
    %vm2895 = vcmp.lt.s32.totalorder %v2830, %v2846
    %vm2896 = vcmp.lt.s32.totalorder %v2831, %v2846
    %vm2897 = vcmp.lt.s32.totalorder %v2832, %v2846
    %vm2898 = vcmp.lt.s32.totalorder %v2833, %v2846
    %vm2899 = vcmp.lt.s32.totalorder %v2834, %v2846
    %vm2900 = vcmp.lt.s32.totalorder %v2835, %v2846
    %vm2901 = vcmp.lt.s32.totalorder %v2836, %v2846
    %vm2902 = vcmp.lt.s32.totalorder %v2837, %v2846
    %vm2903 = vcmp.lt.s32.totalorder %v2838, %v2846
    %vm2904 = vcmp.lt.s32.totalorder %v2839, %v2846
    %vm2905 = vcmp.lt.s32.totalorder %v2840, %v2846
    %vm2906 = vcmp.lt.s32.totalorder %v2841, %v2846
    %vm2907 = vcmp.lt.s32.totalorder %v2842, %v2846
    %vm2908 = vcmp.lt.s32.totalorder %v2843, %v2846
    %vm2909 = vcmp.lt.s32.totalorder %v2844, %v2846
    %vm2910 = vcmp.lt.s32.totalorder %v2845, %v2846
    %v2911 = vstv %s2713
    %vm2912 = vcmp.lt.s32.totalorder %v2782, %v2911
    %vm2913 = vcmp.lt.s32.totalorder %v2783, %v2911
    %vm2914 = vcmp.lt.s32.totalorder %v2784, %v2911
    %vm2915 = vcmp.lt.s32.totalorder %v2785, %v2911
    %vm2916 = vcmp.lt.s32.totalorder %v2786, %v2911
    %vm2917 = vcmp.lt.s32.totalorder %v2787, %v2911
    %vm2918 = vcmp.lt.s32.totalorder %v2788, %v2911
    %vm2919 = vcmp.lt.s32.totalorder %v2789, %v2911
    %vm2920 = vcmp.lt.s32.totalorder %v2790, %v2911
    %vm2921 = vcmp.lt.s32.totalorder %v2791, %v2911
    %vm2922 = vcmp.lt.s32.totalorder %v2792, %v2911
    %vm2923 = vcmp.lt.s32.totalorder %v2793, %v2911
    %vm2924 = vcmp.lt.s32.totalorder %v2794, %v2911
    %vm2925 = vcmp.lt.s32.totalorder %v2795, %v2911
    %vm2926 = vcmp.lt.s32.totalorder %v2796, %v2911
    %vm2927 = vcmp.lt.s32.totalorder %v2797, %v2911
    %vm2928 = vcmp.lt.s32.totalorder %v2798, %v2911
    %vm2929 = vcmp.lt.s32.totalorder %v2799, %v2911
    %vm2930 = vcmp.lt.s32.totalorder %v2800, %v2911
    %vm2931 = vcmp.lt.s32.totalorder %v2801, %v2911
    %vm2932 = vcmp.lt.s32.totalorder %v2802, %v2911
    %vm2933 = vcmp.lt.s32.totalorder %v2803, %v2911
    %vm2934 = vcmp.lt.s32.totalorder %v2804, %v2911
    %vm2935 = vcmp.lt.s32.totalorder %v2805, %v2911
    %vm2936 = vcmp.lt.s32.totalorder %v2806, %v2911
    %vm2937 = vcmp.lt.s32.totalorder %v2807, %v2911
    %vm2938 = vcmp.lt.s32.totalorder %v2808, %v2911
    %vm2939 = vcmp.lt.s32.totalorder %v2809, %v2911
    %vm2940 = vcmp.lt.s32.totalorder %v2810, %v2911
    %vm2941 = vcmp.lt.s32.totalorder %v2811, %v2911
    %vm2942 = vcmp.lt.s32.totalorder %v2812, %v2911
    %vm2943 = vcmp.lt.s32.totalorder %v2813, %v2911
    %vm2944 = vcmp.lt.s32.totalorder %v2814, %v2911
    %vm2945 = vcmp.lt.s32.totalorder %v2815, %v2911
    %vm2946 = vcmp.lt.s32.totalorder %v2816, %v2911
    %vm2947 = vcmp.lt.s32.totalorder %v2817, %v2911
    %vm2948 = vcmp.lt.s32.totalorder %v2818, %v2911
    %vm2949 = vcmp.lt.s32.totalorder %v2819, %v2911
    %vm2950 = vcmp.lt.s32.totalorder %v2820, %v2911
    %vm2951 = vcmp.lt.s32.totalorder %v2821, %v2911
    %vm2952 = vcmp.lt.s32.totalorder %v2822, %v2911
    %vm2953 = vcmp.lt.s32.totalorder %v2823, %v2911
    %vm2954 = vcmp.lt.s32.totalorder %v2824, %v2911
    %vm2955 = vcmp.lt.s32.totalorder %v2825, %v2911
    %vm2956 = vcmp.lt.s32.totalorder %v2826, %v2911
    %vm2957 = vcmp.lt.s32.totalorder %v2827, %v2911
    %vm2958 = vcmp.lt.s32.totalorder %v2828, %v2911
    %vm2959 = vcmp.lt.s32.totalorder %v2829, %v2911
    %vm2960 = vcmp.lt.s32.totalorder %v2830, %v2911
    %vm2961 = vcmp.lt.s32.totalorder %v2831, %v2911
    %vm2962 = vcmp.lt.s32.totalorder %v2832, %v2911
    %vm2963 = vcmp.lt.s32.totalorder %v2833, %v2911
    %vm2964 = vcmp.lt.s32.totalorder %v2834, %v2911
    %vm2965 = vcmp.lt.s32.totalorder %v2835, %v2911
    %vm2966 = vcmp.lt.s32.totalorder %v2836, %v2911
    %vm2967 = vcmp.lt.s32.totalorder %v2837, %v2911
    %vm2968 = vcmp.lt.s32.totalorder %v2838, %v2911
    %vm2969 = vcmp.lt.s32.totalorder %v2839, %v2911
    %vm2970 = vcmp.lt.s32.totalorder %v2840, %v2911
    %vm2971 = vcmp.lt.s32.totalorder %v2841, %v2911
    %vm2972 = vcmp.lt.s32.totalorder %v2842, %v2911
    %vm2973 = vcmp.lt.s32.totalorder %v2843, %v2911
    %vm2974 = vcmp.lt.s32.totalorder %v2844, %v2911
    %vm2975 = vcmp.lt.s32.totalorder %v2845, %v2911
    %v2976 = vsel %vm2912, 1, 2
    %v2977 = vsel %vm2913, 1, 2
    %v2978 = vsel %vm2914, 1, 2
    %v2979 = vsel %vm2915, 1, 2
    %v2980 = vsel %vm2916, 1, 2
    %v2981 = vsel %vm2917, 1, 2
    %v2982 = vsel %vm2918, 1, 2
    %v2983 = vsel %vm2919, 1, 2
    %v2984 = vsel %vm2920, 1, 2
    %v2985 = vsel %vm2921, 1, 2
    %v2986 = vsel %vm2922, 1, 2
    %v2987 = vsel %vm2923, 1, 2
    %v2988 = vsel %vm2924, 1, 2
    %v2989 = vsel %vm2925, 1, 2
    %v2990 = vsel %vm2926, 1, 2
    %v2991 = vsel %vm2927, 1, 2
    %v2992 = vsel %vm2928, 1, 2
    %v2993 = vsel %vm2929, 1, 2
    %v2994 = vsel %vm2930, 1, 2
    %v2995 = vsel %vm2931, 1, 2
    %v2996 = vsel %vm2932, 1, 2
    %v2997 = vsel %vm2933, 1, 2
    %v2998 = vsel %vm2934, 1, 2
    %v2999 = vsel %vm2935, 1, 2
    %v3000 = vsel %vm2936, 1, 2
    %v3001 = vsel %vm2937, 1, 2
    %v3002 = vsel %vm2938, 1, 2
    %v3003 = vsel %vm2939, 1, 2
    %v3004 = vsel %vm2940, 1, 2
    %v3005 = vsel %vm2941, 1, 2
    %v3006 = vsel %vm2942, 1, 2
    %v3007 = vsel %vm2943, 1, 2
    %v3008 = vsel %vm2944, 1, 2
    %v3009 = vsel %vm2945, 1, 2
    %v3010 = vsel %vm2946, 1, 2
    %v3011 = vsel %vm2947, 1, 2
    %v3012 = vsel %vm2948, 1, 2
    %v3013 = vsel %vm2949, 1, 2
    %v3014 = vsel %vm2950, 1, 2
    %v3015 = vsel %vm2951, 1, 2
    %v3016 = vsel %vm2952, 1, 2
    %v3017 = vsel %vm2953, 1, 2
    %v3018 = vsel %vm2954, 1, 2
    %v3019 = vsel %vm2955, 1, 2
    %v3020 = vsel %vm2956, 1, 2
    %v3021 = vsel %vm2957, 1, 2
    %v3022 = vsel %vm2958, 1, 2
    %v3023 = vsel %vm2959, 1, 2
    %v3024 = vsel %vm2960, 1, 2
    %v3025 = vsel %vm2961, 1, 2
    %v3026 = vsel %vm2962, 1, 2
    %v3027 = vsel %vm2963, 1, 2
    %v3028 = vsel %vm2964, 1, 2
    %v3029 = vsel %vm2965, 1, 2
    %v3030 = vsel %vm2966, 1, 2
    %v3031 = vsel %vm2967, 1, 2
    %v3032 = vsel %vm2968, 1, 2
    %v3033 = vsel %vm2969, 1, 2
    %v3034 = vsel %vm2970, 1, 2
    %v3035 = vsel %vm2971, 1, 2
    %v3036 = vsel %vm2972, 1, 2
    %v3037 = vsel %vm2973, 1, 2
    %v3038 = vsel %vm2974, 1, 2
    %v3039 = vsel %vm2975, 1, 2
    %v3040 = vsel %vm2847, 0, %v2976
    %v3041 = vsel %vm2848, 0, %v2977
    %v3042 = vsel %vm2849, 0, %v2978
    %v3043 = vsel %vm2850, 0, %v2979
    %v3044 = vsel %vm2851, 0, %v2980
    %v3045 = vsel %vm2852, 0, %v2981
    %v3046 = vsel %vm2853, 0, %v2982
    %v3047 = vsel %vm2854, 0, %v2983
    %v3048 = vsel %vm2855, 0, %v2984
    %v3049 = vsel %vm2856, 0, %v2985
    %v3050 = vsel %vm2857, 0, %v2986
    %v3051 = vsel %vm2858, 0, %v2987
    %v3052 = vsel %vm2859, 0, %v2988
    %v3053 = vsel %vm2860, 0, %v2989
    %v3054 = vsel %vm2861, 0, %v2990
    %v3055 = vsel %vm2862, 0, %v2991
    %v3056 = vsel %vm2863, 0, %v2992
    %v3057 = vsel %vm2864, 0, %v2993
    %v3058 = vsel %vm2865, 0, %v2994
    %v3059 = vsel %vm2866, 0, %v2995
    %v3060 = vsel %vm2867, 0, %v2996
    %v3061 = vsel %vm2868, 0, %v2997
    %v3062 = vsel %vm2869, 0, %v2998
    %v3063 = vsel %vm2870, 0, %v2999
    %v3064 = vsel %vm2871, 0, %v3000
    %v3065 = vsel %vm2872, 0, %v3001
    %v3066 = vsel %vm2873, 0, %v3002
    %v3067 = vsel %vm2874, 0, %v3003
    %v3068 = vsel %vm2875, 0, %v3004
    %v3069 = vsel %vm2876, 0, %v3005
    %v3070 = vsel %vm2877, 0, %v3006
    %v3071 = vsel %vm2878, 0, %v3007
    %v3072 = vsel %vm2879, 0, %v3008
    %v3073 = vsel %vm2880, 0, %v3009
    %v3074 = vsel %vm2881, 0, %v3010
    %v3075 = vsel %vm2882, 0, %v3011
    %v3076 = vsel %vm2883, 0, %v3012
    %v3077 = vsel %vm2884, 0, %v3013
    %v3078 = vsel %vm2885, 0, %v3014
    %v3079 = vsel %vm2886, 0, %v3015
    %v3080 = vsel %vm2887, 0, %v3016
    %v3081 = vsel %vm2888, 0, %v3017
    %v3082 = vsel %vm2889, 0, %v3018
    %v3083 = vsel %vm2890, 0, %v3019
    %v3084 = vsel %vm2891, 0, %v3020
    %v3085 = vsel %vm2892, 0, %v3021
    %v3086 = vsel %vm2893, 0, %v3022
    %v3087 = vsel %vm2894, 0, %v3023
    %v3088 = vsel %vm2895, 0, %v3024
    %v3089 = vsel %vm2896, 0, %v3025
    %v3090 = vsel %vm2897, 0, %v3026
    %v3091 = vsel %vm2898, 0, %v3027
    %v3092 = vsel %vm2899, 0, %v3028
    %v3093 = vsel %vm2900, 0, %v3029
    %v3094 = vsel %vm2901, 0, %v3030
    %v3095 = vsel %vm2902, 0, %v3031
    %v3096 = vsel %vm2903, 0, %v3032
    %v3097 = vsel %vm2904, 0, %v3033
    %v3098 = vsel %vm2905, 0, %v3034
    %v3099 = vsel %vm2906, 0, %v3035
    %v3100 = vsel %vm2907, 0, %v3036
    %v3101 = vsel %vm2908, 0, %v3037
    %v3102 = vsel %vm2909, 0, %v3038
    %v3103 = vsel %vm2910, 0, %v3039
    %p3104 = scmp.gt.s32.totalorder %s2712, 1
    %s3105 = scalar_select %p3104, %s2712, 1
    %s3106 = scvt.s32.f32 %s3105
    %v3107 = vstv %s3106
    %v3108 = vrcp.pop %v3107
    %v3109 = vmul.f32 %v3107, %v3108
    %v3110 = vsub.f32 1.0, %v3109
    %v3111 = vmul.f32 %v3108, %v3110
    %v3112 = vadd.f32 %v3108, %v3111
    %vm3113 = vweird.f32 %v3107
    %vm3114 = vweird.f32 %v3108
    %vm3115 = vmor %vm3113, %vm3114
    %v3116 = vsel %vm3115, %v3108, %v3112
    %v3117 = vand.u32 2147483647, %v3107
    %vm3118 = vcmp.eq.f32.partialorder %v3117, 8.507059e+37
    %v3119 = vand.u32 %v3107, 2147483648
    %v3120 = vor.u32 1.1754944e-38, %v3119
    %v3121 = vsel %vm3118, %v3120, %v3116
    %s3122 = vtos %v3121
    %s3123 = ssub.s32 %s2713, %s2712
    %p3124 = scmp.gt.s32.totalorder %s3123, 1
    %s3125 = scalar_select %p3124, %s3123, 1
    %s3126 = scvt.s32.f32 %s3125
    %v3127 = vstv %s3126
    %v3128 = vrcp.pop %v3127
    %v3129 = vmul.f32 %v3127, %v3128
    %v3130 = vsub.f32 1.0, %v3129
    %v3131 = vmul.f32 %v3128, %v3130
    %v3132 = vadd.f32 %v3128, %v3131
    %vm3133 = vweird.f32 %v3127
    %vm3134 = vweird.f32 %v3128
    %vm3135 = vmor %vm3133, %vm3134
    %v3136 = vsel %vm3135, %v3128, %v3132
    %v3137 = vand.u32 2147483647, %v3127
    %vm3138 = vcmp.eq.f32.partialorder %v3137, 8.507059e+37
    %v3139 = vand.u32 %v3127, 2147483648
    %v3140 = vor.u32 1.1754944e-38, %v3139
    %v3141 = vsel %vm3138, %v3140, %v3136
    %s3142 = vtos %v3141
    %s3143 = ssub.s32 %s2714, %s2713
    %p3144 = scmp.gt.s32.totalorder %s3143, 1
    %s3145 = scalar_select %p3144, %s3143, 1
    %s3146 = scvt.s32.f32 %s3145
    %v3147 = vstv %s3146
    %v3148 = vrcp.pop %v3147
    %v3149 = vmul.f32 %v3147, %v3148
    %v3150 = vsub.f32 1.0, %v3149
    %v3151 = vmul.f32 %v3148, %v3150
    %v3152 = vadd.f32 %v3148, %v3151
    %vm3153 = vweird.f32 %v3147
    %vm3154 = vweird.f32 %v3148
    %vm3155 = vmor %vm3153, %vm3154
    %v3156 = vsel %vm3155, %v3148, %v3152
    %v3157 = vand.u32 2147483647, %v3147
    %vm3158 = vcmp.eq.f32.partialorder %v3157, 8.507059e+37
    %v3159 = vand.u32 %v3147, 2147483648
    %v3160 = vor.u32 1.1754944e-38, %v3159
    %v3161 = vsel %vm3158, %v3160, %v3156
    %s3162 = vtos %v3161
    %v3163 = vstv %s3142
    %v3164 = vstv %s3162
    %v3165 = vsel %vm2912, %v3163, %v3164
    %v3166 = vsel %vm2913, %v3163, %v3164
    %v3167 = vsel %vm2914, %v3163, %v3164
    %v3168 = vsel %vm2915, %v3163, %v3164
    %v3169 = vsel %vm2916, %v3163, %v3164
    %v3170 = vsel %vm2917, %v3163, %v3164
    %v3171 = vsel %vm2918, %v3163, %v3164
    %v3172 = vsel %vm2919, %v3163, %v3164
    %v3173 = vsel %vm2920, %v3163, %v3164
    %v3174 = vsel %vm2921, %v3163, %v3164
    %v3175 = vsel %vm2922, %v3163, %v3164
    %v3176 = vsel %vm2923, %v3163, %v3164
    %v3177 = vsel %vm2924, %v3163, %v3164
    %v3178 = vsel %vm2925, %v3163, %v3164
    %v3179 = vsel %vm2926, %v3163, %v3164
    %v3180 = vsel %vm2927, %v3163, %v3164
    %v3181 = vsel %vm2928, %v3163, %v3164
    %v3182 = vsel %vm2929, %v3163, %v3164
    %v3183 = vsel %vm2930, %v3163, %v3164
    %v3184 = vsel %vm2931, %v3163, %v3164
    %v3185 = vsel %vm2932, %v3163, %v3164
    %v3186 = vsel %vm2933, %v3163, %v3164
    %v3187 = vsel %vm2934, %v3163, %v3164
    %v3188 = vsel %vm2935, %v3163, %v3164
    %v3189 = vsel %vm2936, %v3163, %v3164
    %v3190 = vsel %vm2937, %v3163, %v3164
    %v3191 = vsel %vm2938, %v3163, %v3164
    %v3192 = vsel %vm2939, %v3163, %v3164
    %v3193 = vsel %vm2940, %v3163, %v3164
    %v3194 = vsel %vm2941, %v3163, %v3164
    %v3195 = vsel %vm2942, %v3163, %v3164
    %v3196 = vsel %vm2943, %v3163, %v3164
    %v3197 = vsel %vm2944, %v3163, %v3164
    %v3198 = vsel %vm2945, %v3163, %v3164
    %v3199 = vsel %vm2946, %v3163, %v3164
    %v3200 = vsel %vm2947, %v3163, %v3164
    %v3201 = vsel %vm2948, %v3163, %v3164
    %v3202 = vsel %vm2949, %v3163, %v3164
    %v3203 = vsel %vm2950, %v3163, %v3164
    %v3204 = vsel %vm2951, %v3163, %v3164
    %v3205 = vsel %vm2952, %v3163, %v3164
    %v3206 = vsel %vm2953, %v3163, %v3164
    %v3207 = vsel %vm2954, %v3163, %v3164
    %v3208 = vsel %vm2955, %v3163, %v3164
    %v3209 = vsel %vm2956, %v3163, %v3164
    %v3210 = vsel %vm2957, %v3163, %v3164
    %v3211 = vsel %vm2958, %v3163, %v3164
    %v3212 = vsel %vm2959, %v3163, %v3164
    %v3213 = vsel %vm2960, %v3163, %v3164
    %v3214 = vsel %vm2961, %v3163, %v3164
    %v3215 = vsel %vm2962, %v3163, %v3164
    %v3216 = vsel %vm2963, %v3163, %v3164
    %v3217 = vsel %vm2964, %v3163, %v3164
    %v3218 = vsel %vm2965, %v3163, %v3164
    %v3219 = vsel %vm2966, %v3163, %v3164
    %v3220 = vsel %vm2967, %v3163, %v3164
    %v3221 = vsel %vm2968, %v3163, %v3164
    %v3222 = vsel %vm2969, %v3163, %v3164
    %v3223 = vsel %vm2970, %v3163, %v3164
    %v3224 = vsel %vm2971, %v3163, %v3164
    %v3225 = vsel %vm2972, %v3163, %v3164
    %v3226 = vsel %vm2973, %v3163, %v3164
    %v3227 = vsel %vm2974, %v3163, %v3164
    %v3228 = vsel %vm2975, %v3163, %v3164
    %v3229 = vstv %s3122
    %v3230 = vsel %vm2847, %v3229, %v3165
    %v3231 = vsel %vm2848, %v3229, %v3166
    %v3232 = vsel %vm2849, %v3229, %v3167
    %v3233 = vsel %vm2850, %v3229, %v3168
    %v3234 = vsel %vm2851, %v3229, %v3169
    %v3235 = vsel %vm2852, %v3229, %v3170
    %v3236 = vsel %vm2853, %v3229, %v3171
    %v3237 = vsel %vm2854, %v3229, %v3172
    %v3238 = vsel %vm2855, %v3229, %v3173
    %v3239 = vsel %vm2856, %v3229, %v3174
    %v3240 = vsel %vm2857, %v3229, %v3175
    %v3241 = vsel %vm2858, %v3229, %v3176
    %v3242 = vsel %vm2859, %v3229, %v3177
    %v3243 = vsel %vm2860, %v3229, %v3178
    %v3244 = vsel %vm2861, %v3229, %v3179
    %v3245 = vsel %vm2862, %v3229, %v3180
    %v3246 = vsel %vm2863, %v3229, %v3181
    %v3247 = vsel %vm2864, %v3229, %v3182
    %v3248 = vsel %vm2865, %v3229, %v3183
    %v3249 = vsel %vm2866, %v3229, %v3184
    %v3250 = vsel %vm2867, %v3229, %v3185
    %v3251 = vsel %vm2868, %v3229, %v3186
    %v3252 = vsel %vm2869, %v3229, %v3187
    %v3253 = vsel %vm2870, %v3229, %v3188
    %v3254 = vsel %vm2871, %v3229, %v3189
    %v3255 = vsel %vm2872, %v3229, %v3190
    %v3256 = vsel %vm2873, %v3229, %v3191
    %v3257 = vsel %vm2874, %v3229, %v3192
    %v3258 = vsel %vm2875, %v3229, %v3193
    %v3259 = vsel %vm2876, %v3229, %v3194
    %v3260 = vsel %vm2877, %v3229, %v3195
    %v3261 = vsel %vm2878, %v3229, %v3196
    %v3262 = vsel %vm2879, %v3229, %v3197
    %v3263 = vsel %vm2880, %v3229, %v3198
    %v3264 = vsel %vm2881, %v3229, %v3199
    %v3265 = vsel %vm2882, %v3229, %v3200
    %v3266 = vsel %vm2883, %v3229, %v3201
    %v3267 = vsel %vm2884, %v3229, %v3202
    %v3268 = vsel %vm2885, %v3229, %v3203
    %v3269 = vsel %vm2886, %v3229, %v3204
    %v3270 = vsel %vm2887, %v3229, %v3205
    %v3271 = vsel %vm2888, %v3229, %v3206
    %v3272 = vsel %vm2889, %v3229, %v3207
    %v3273 = vsel %vm2890, %v3229, %v3208
    %v3274 = vsel %vm2891, %v3229, %v3209
    %v3275 = vsel %vm2892, %v3229, %v3210
    %v3276 = vsel %vm2893, %v3229, %v3211
    %v3277 = vsel %vm2894, %v3229, %v3212
    %v3278 = vsel %vm2895, %v3229, %v3213
    %v3279 = vsel %vm2896, %v3229, %v3214
    %v3280 = vsel %vm2897, %v3229, %v3215
    %v3281 = vsel %vm2898, %v3229, %v3216
    %v3282 = vsel %vm2899, %v3229, %v3217
    %v3283 = vsel %vm2900, %v3229, %v3218
    %v3284 = vsel %vm2901, %v3229, %v3219
    %v3285 = vsel %vm2902, %v3229, %v3220
    %v3286 = vsel %vm2903, %v3229, %v3221
    %v3287 = vsel %vm2904, %v3229, %v3222
    %v3288 = vsel %vm2905, %v3229, %v3223
    %v3289 = vsel %vm2906, %v3229, %v3224
    %v3290 = vsel %vm2907, %v3229, %v3225
    %v3291 = vsel %vm2908, %v3229, %v3226
    %v3292 = vsel %vm2909, %v3229, %v3227
    %v3293 = vsel %vm2910, %v3229, %v3228
    %v3294 = vstv %s2714
    %vm3295 = vcmp.lt.s32.totalorder %v2782, %v3294
    %vm3296 = vcmp.lt.s32.totalorder %v2783, %v3294
    %vm3297 = vcmp.lt.s32.totalorder %v2784, %v3294
    %vm3298 = vcmp.lt.s32.totalorder %v2785, %v3294
    %vm3299 = vcmp.lt.s32.totalorder %v2786, %v3294
    %vm3300 = vcmp.lt.s32.totalorder %v2787, %v3294
    %vm3301 = vcmp.lt.s32.totalorder %v2788, %v3294
    %vm3302 = vcmp.lt.s32.totalorder %v2789, %v3294
    %vm3303 = vcmp.lt.s32.totalorder %v2790, %v3294
    %vm3304 = vcmp.lt.s32.totalorder %v2791, %v3294
    %vm3305 = vcmp.lt.s32.totalorder %v2792, %v3294
    %vm3306 = vcmp.lt.s32.totalorder %v2793, %v3294
    %vm3307 = vcmp.lt.s32.totalorder %v2794, %v3294
    %vm3308 = vcmp.lt.s32.totalorder %v2795, %v3294
    %vm3309 = vcmp.lt.s32.totalorder %v2796, %v3294
    %vm3310 = vcmp.lt.s32.totalorder %v2797, %v3294
    %vm3311 = vcmp.lt.s32.totalorder %v2798, %v3294
    %vm3312 = vcmp.lt.s32.totalorder %v2799, %v3294
    %vm3313 = vcmp.lt.s32.totalorder %v2800, %v3294
    %vm3314 = vcmp.lt.s32.totalorder %v2801, %v3294
    %vm3315 = vcmp.lt.s32.totalorder %v2802, %v3294
    %vm3316 = vcmp.lt.s32.totalorder %v2803, %v3294
    %vm3317 = vcmp.lt.s32.totalorder %v2804, %v3294
    %vm3318 = vcmp.lt.s32.totalorder %v2805, %v3294
    %vm3319 = vcmp.lt.s32.totalorder %v2806, %v3294
    %vm3320 = vcmp.lt.s32.totalorder %v2807, %v3294
    %vm3321 = vcmp.lt.s32.totalorder %v2808, %v3294
    %vm3322 = vcmp.lt.s32.totalorder %v2809, %v3294
    %vm3323 = vcmp.lt.s32.totalorder %v2810, %v3294
    %vm3324 = vcmp.lt.s32.totalorder %v2811, %v3294
    %vm3325 = vcmp.lt.s32.totalorder %v2812, %v3294
    %vm3326 = vcmp.lt.s32.totalorder %v2813, %v3294
    %vm3327 = vcmp.lt.s32.totalorder %v2814, %v3294
    %vm3328 = vcmp.lt.s32.totalorder %v2815, %v3294
    %vm3329 = vcmp.lt.s32.totalorder %v2816, %v3294
    %vm3330 = vcmp.lt.s32.totalorder %v2817, %v3294
    %vm3331 = vcmp.lt.s32.totalorder %v2818, %v3294
    %vm3332 = vcmp.lt.s32.totalorder %v2819, %v3294
    %vm3333 = vcmp.lt.s32.totalorder %v2820, %v3294
    %vm3334 = vcmp.lt.s32.totalorder %v2821, %v3294
    %vm3335 = vcmp.lt.s32.totalorder %v2822, %v3294
    %vm3336 = vcmp.lt.s32.totalorder %v2823, %v3294
    %vm3337 = vcmp.lt.s32.totalorder %v2824, %v3294
    %vm3338 = vcmp.lt.s32.totalorder %v2825, %v3294
    %vm3339 = vcmp.lt.s32.totalorder %v2826, %v3294
    %vm3340 = vcmp.lt.s32.totalorder %v2827, %v3294
    %vm3341 = vcmp.lt.s32.totalorder %v2828, %v3294
    %vm3342 = vcmp.lt.s32.totalorder %v2829, %v3294
    %vm3343 = vcmp.lt.s32.totalorder %v2830, %v3294
    %vm3344 = vcmp.lt.s32.totalorder %v2831, %v3294
    %vm3345 = vcmp.lt.s32.totalorder %v2832, %v3294
    %vm3346 = vcmp.lt.s32.totalorder %v2833, %v3294
    %vm3347 = vcmp.lt.s32.totalorder %v2834, %v3294
    %vm3348 = vcmp.lt.s32.totalorder %v2835, %v3294
    %vm3349 = vcmp.lt.s32.totalorder %v2836, %v3294
    %vm3350 = vcmp.lt.s32.totalorder %v2837, %v3294
    %vm3351 = vcmp.lt.s32.totalorder %v2838, %v3294
    %vm3352 = vcmp.lt.s32.totalorder %v2839, %v3294
    %vm3353 = vcmp.lt.s32.totalorder %v2840, %v3294
    %vm3354 = vcmp.lt.s32.totalorder %v2841, %v3294
    %vm3355 = vcmp.lt.s32.totalorder %v2842, %v3294
    %vm3356 = vcmp.lt.s32.totalorder %v2843, %v3294
    %vm3357 = vcmp.lt.s32.totalorder %v2844, %v3294
    %vm3358 = vcmp.lt.s32.totalorder %v2845, %v3294
    %v3359 = vsel %vm3295, %v3230, 0.0
    %v3360 = vsel %vm3296, %v3231, 0.0
    %v3361 = vsel %vm3297, %v3232, 0.0
    %v3362 = vsel %vm3298, %v3233, 0.0
    %v3363 = vsel %vm3299, %v3234, 0.0
    %v3364 = vsel %vm3300, %v3235, 0.0
    %v3365 = vsel %vm3301, %v3236, 0.0
    %v3366 = vsel %vm3302, %v3237, 0.0
    %v3367 = vsel %vm3303, %v3238, 0.0
    %v3368 = vsel %vm3304, %v3239, 0.0
    %v3369 = vsel %vm3305, %v3240, 0.0
    %v3370 = vsel %vm3306, %v3241, 0.0
    %v3371 = vsel %vm3307, %v3242, 0.0
    %v3372 = vsel %vm3308, %v3243, 0.0
    %v3373 = vsel %vm3309, %v3244, 0.0
    %v3374 = vsel %vm3310, %v3245, 0.0
    %v3375 = vsel %vm3311, %v3246, 0.0
    %v3376 = vsel %vm3312, %v3247, 0.0
    %v3377 = vsel %vm3313, %v3248, 0.0
    %v3378 = vsel %vm3314, %v3249, 0.0
    %v3379 = vsel %vm3315, %v3250, 0.0
    %v3380 = vsel %vm3316, %v3251, 0.0
    %v3381 = vsel %vm3317, %v3252, 0.0
    %v3382 = vsel %vm3318, %v3253, 0.0
    %v3383 = vsel %vm3319, %v3254, 0.0
    %v3384 = vsel %vm3320, %v3255, 0.0
    %v3385 = vsel %vm3321, %v3256, 0.0
    %v3386 = vsel %vm3322, %v3257, 0.0
    %v3387 = vsel %vm3323, %v3258, 0.0
    %v3388 = vsel %vm3324, %v3259, 0.0
    %v3389 = vsel %vm3325, %v3260, 0.0
    %v3390 = vsel %vm3326, %v3261, 0.0
    %v3391 = vsel %vm3327, %v3262, 0.0
    %v3392 = vsel %vm3328, %v3263, 0.0
    %v3393 = vsel %vm3329, %v3264, 0.0
    %v3394 = vsel %vm3330, %v3265, 0.0
    %v3395 = vsel %vm3331, %v3266, 0.0
    %v3396 = vsel %vm3332, %v3267, 0.0
    %v3397 = vsel %vm3333, %v3268, 0.0
    %v3398 = vsel %vm3334, %v3269, 0.0
    %v3399 = vsel %vm3335, %v3270, 0.0
    %v3400 = vsel %vm3336, %v3271, 0.0
    %v3401 = vsel %vm3337, %v3272, 0.0
    %v3402 = vsel %vm3338, %v3273, 0.0
    %v3403 = vsel %vm3339, %v3274, 0.0
    %v3404 = vsel %vm3340, %v3275, 0.0
    %v3405 = vsel %vm3341, %v3276, 0.0
    %v3406 = vsel %vm3342, %v3277, 0.0
    %v3407 = vsel %vm3343, %v3278, 0.0
    %v3408 = vsel %vm3344, %v3279, 0.0
    %v3409 = vsel %vm3345, %v3280, 0.0
    %v3410 = vsel %vm3346, %v3281, 0.0
    %v3411 = vsel %vm3347, %v3282, 0.0
    %v3412 = vsel %vm3348, %v3283, 0.0
    %v3413 = vsel %vm3349, %v3284, 0.0
    %v3414 = vsel %vm3350, %v3285, 0.0
    %v3415 = vsel %vm3351, %v3286, 0.0
    %v3416 = vsel %vm3352, %v3287, 0.0
    %v3417 = vsel %vm3353, %v3288, 0.0
    %v3418 = vsel %vm3354, %v3289, 0.0
    %v3419 = vsel %vm3355, %v3290, 0.0
    %v3420 = vsel %vm3356, %v3291, 0.0
    %v3421 = vsel %vm3357, %v3292, 0.0
    %v3422 = vsel %vm3358, %v3293, 0.0
    %vm3423 = vcmp.eq.s32.totalorder %v335, %v3040
    %vm3424 = vcmp.eq.s32.totalorder %v335, %v3041
    %vm3425 = vcmp.eq.s32.totalorder %v335, %v3042
    %vm3426 = vcmp.eq.s32.totalorder %v335, %v3043
    %vm3427 = vcmp.eq.s32.totalorder %v335, %v3044
    %vm3428 = vcmp.eq.s32.totalorder %v335, %v3045
    %vm3429 = vcmp.eq.s32.totalorder %v335, %v3046
    %vm3430 = vcmp.eq.s32.totalorder %v335, %v3047
    %vm3431 = vcmp.eq.s32.totalorder %v335, %v3048
    %vm3432 = vcmp.eq.s32.totalorder %v335, %v3049
    %vm3433 = vcmp.eq.s32.totalorder %v335, %v3050
    %vm3434 = vcmp.eq.s32.totalorder %v335, %v3051
    %vm3435 = vcmp.eq.s32.totalorder %v335, %v3052
    %vm3436 = vcmp.eq.s32.totalorder %v335, %v3053
    %vm3437 = vcmp.eq.s32.totalorder %v335, %v3054
    %vm3438 = vcmp.eq.s32.totalorder %v335, %v3055
    %vm3439 = vcmp.eq.s32.totalorder %v335, %v3056
    %vm3440 = vcmp.eq.s32.totalorder %v335, %v3057
    %vm3441 = vcmp.eq.s32.totalorder %v335, %v3058
    %vm3442 = vcmp.eq.s32.totalorder %v335, %v3059
    %vm3443 = vcmp.eq.s32.totalorder %v335, %v3060
    %vm3444 = vcmp.eq.s32.totalorder %v335, %v3061
    %vm3445 = vcmp.eq.s32.totalorder %v335, %v3062
    %vm3446 = vcmp.eq.s32.totalorder %v335, %v3063
    %vm3447 = vcmp.eq.s32.totalorder %v335, %v3064
    %vm3448 = vcmp.eq.s32.totalorder %v335, %v3065
    %vm3449 = vcmp.eq.s32.totalorder %v335, %v3066
    %vm3450 = vcmp.eq.s32.totalorder %v335, %v3067
    %vm3451 = vcmp.eq.s32.totalorder %v335, %v3068
    %vm3452 = vcmp.eq.s32.totalorder %v335, %v3069
    %vm3453 = vcmp.eq.s32.totalorder %v335, %v3070
    %vm3454 = vcmp.eq.s32.totalorder %v335, %v3071
    %vm3455 = vcmp.eq.s32.totalorder %v335, %v3072
    %vm3456 = vcmp.eq.s32.totalorder %v335, %v3073
    %vm3457 = vcmp.eq.s32.totalorder %v335, %v3074
    %vm3458 = vcmp.eq.s32.totalorder %v335, %v3075
    %vm3459 = vcmp.eq.s32.totalorder %v335, %v3076
    %vm3460 = vcmp.eq.s32.totalorder %v335, %v3077
    %vm3461 = vcmp.eq.s32.totalorder %v335, %v3078
    %vm3462 = vcmp.eq.s32.totalorder %v335, %v3079
    %vm3463 = vcmp.eq.s32.totalorder %v335, %v3080
    %vm3464 = vcmp.eq.s32.totalorder %v335, %v3081
    %vm3465 = vcmp.eq.s32.totalorder %v335, %v3082
    %vm3466 = vcmp.eq.s32.totalorder %v335, %v3083
    %vm3467 = vcmp.eq.s32.totalorder %v335, %v3084
    %vm3468 = vcmp.eq.s32.totalorder %v335, %v3085
    %vm3469 = vcmp.eq.s32.totalorder %v335, %v3086
    %vm3470 = vcmp.eq.s32.totalorder %v335, %v3087
    %vm3471 = vcmp.eq.s32.totalorder %v335, %v3088
    %vm3472 = vcmp.eq.s32.totalorder %v335, %v3089
    %vm3473 = vcmp.eq.s32.totalorder %v335, %v3090
    %vm3474 = vcmp.eq.s32.totalorder %v335, %v3091
    %vm3475 = vcmp.eq.s32.totalorder %v335, %v3092
    %vm3476 = vcmp.eq.s32.totalorder %v335, %v3093
    %vm3477 = vcmp.eq.s32.totalorder %v335, %v3094
    %vm3478 = vcmp.eq.s32.totalorder %v335, %v3095
    %vm3479 = vcmp.eq.s32.totalorder %v335, %v3096
    %vm3480 = vcmp.eq.s32.totalorder %v335, %v3097
    %vm3481 = vcmp.eq.s32.totalorder %v335, %v3098
    %vm3482 = vcmp.eq.s32.totalorder %v335, %v3099
    %vm3483 = vcmp.eq.s32.totalorder %v335, %v3100
    %vm3484 = vcmp.eq.s32.totalorder %v335, %v3101
    %vm3485 = vcmp.eq.s32.totalorder %v335, %v3102
    %vm3486 = vcmp.eq.s32.totalorder %v335, %v3103
    %v3487 = vsel %vm3423, %v1816, 0.0
    %v3488 = vsel %vm3424, %v1819, 0.0
    %v3489 = vsel %vm3425, %v1822, 0.0
    %v3490 = vsel %vm3426, %v1825, 0.0
    %v3491 = vsel %vm3427, %v1828, 0.0
    %v3492 = vsel %vm3428, %v1831, 0.0
    %v3493 = vsel %vm3429, %v1834, 0.0
    %v3494 = vsel %vm3430, %v1837, 0.0
    %v3495 = vsel %vm3431, %v1840, 0.0
    %v3496 = vsel %vm3432, %v1843, 0.0
    %v3497 = vsel %vm3433, %v1846, 0.0
    %v3498 = vsel %vm3434, %v1849, 0.0
    %v3499 = vsel %vm3435, %v1852, 0.0
    %v3500 = vsel %vm3436, %v1855, 0.0
    %v3501 = vsel %vm3437, %v1858, 0.0
    %v3502 = vsel %vm3438, %v1861, 0.0
    %v3503 = vsel %vm3439, %v1864, 0.0
    %v3504 = vsel %vm3440, %v1867, 0.0
    %v3505 = vsel %vm3441, %v1870, 0.0
    %v3506 = vsel %vm3442, %v1873, 0.0
    %v3507 = vsel %vm3443, %v1876, 0.0
    %v3508 = vsel %vm3444, %v1879, 0.0
    %v3509 = vsel %vm3445, %v1882, 0.0
    %v3510 = vsel %vm3446, %v1885, 0.0
    %v3511 = vsel %vm3447, %v1888, 0.0
    %v3512 = vsel %vm3448, %v1891, 0.0
    %v3513 = vsel %vm3449, %v1894, 0.0
    %v3514 = vsel %vm3450, %v1897, 0.0
    %v3515 = vsel %vm3451, %v1900, 0.0
    %v3516 = vsel %vm3452, %v1903, 0.0
    %v3517 = vsel %vm3453, %v1906, 0.0
    %v3518 = vsel %vm3454, %v1909, 0.0
    %v3519 = vsel %vm3455, %v1912, 0.0
    %v3520 = vsel %vm3456, %v1915, 0.0
    %v3521 = vsel %vm3457, %v1918, 0.0
    %v3522 = vsel %vm3458, %v1921, 0.0
    %v3523 = vsel %vm3459, %v1924, 0.0
    %v3524 = vsel %vm3460, %v1927, 0.0
    %v3525 = vsel %vm3461, %v1930, 0.0
    %v3526 = vsel %vm3462, %v1933, 0.0
    %v3527 = vsel %vm3463, %v1936, 0.0
    %v3528 = vsel %vm3464, %v1939, 0.0
    %v3529 = vsel %vm3465, %v1942, 0.0
    %v3530 = vsel %vm3466, %v1945, 0.0
    %v3531 = vsel %vm3467, %v1948, 0.0
    %v3532 = vsel %vm3468, %v1951, 0.0
    %v3533 = vsel %vm3469, %v1954, 0.0
    %v3534 = vsel %vm3470, %v1957, 0.0
    %v3535 = vsel %vm3471, %v1960, 0.0
    %v3536 = vsel %vm3472, %v1963, 0.0
    %v3537 = vsel %vm3473, %v1966, 0.0
    %v3538 = vsel %vm3474, %v1969, 0.0
    %v3539 = vsel %vm3475, %v1972, 0.0
    %v3540 = vsel %vm3476, %v1975, 0.0
    %v3541 = vsel %vm3477, %v1978, 0.0
    %v3542 = vsel %vm3478, %v1981, 0.0
    %v3543 = vsel %vm3479, %v1984, 0.0
    %v3544 = vsel %vm3480, %v1987, 0.0
    %v3545 = vsel %vm3481, %v1990, 0.0
    %v3546 = vsel %vm3482, %v1993, 0.0
    %v3547 = vsel %vm3483, %v1996, 0.0
    %v3548 = vsel %vm3484, %v1999, 0.0
    %v3549 = vsel %vm3485, %v2002, 0.0
    %v3550 = vsel %vm3486, %v2005, 0.0
    %3551 = vadd.xlane.f32.xlu0 %v3487
    %v3552 = vpop.xlane.xlu0 %3551
    %3553 = vadd.xlane.f32.xlu0 %v3488
    %v3554 = vpop.xlane.xlu0 %3553
    %3555 = vadd.xlane.f32.xlu0 %v3489
    %v3556 = vpop.xlane.xlu0 %3555
    %3557 = vadd.xlane.f32.xlu0 %v3490
    %v3558 = vpop.xlane.xlu0 %3557
    %3559 = vadd.xlane.f32.xlu0 %v3491
    %v3560 = vpop.xlane.xlu0 %3559
    %3561 = vadd.xlane.f32.xlu0 %v3492
    %v3562 = vpop.xlane.xlu0 %3561
    %3563 = vadd.xlane.f32.xlu0 %v3493
    %v3564 = vpop.xlane.xlu0 %3563
    %3565 = vadd.xlane.f32.xlu0 %v3494
    %v3566 = vpop.xlane.xlu0 %3565
    %3567 = vadd.xlane.f32.xlu0 %v3495
    %v3568 = vpop.xlane.xlu0 %3567
    %3569 = vadd.xlane.f32.xlu0 %v3496
    %v3570 = vpop.xlane.xlu0 %3569
    %3571 = vadd.xlane.f32.xlu0 %v3497
    %v3572 = vpop.xlane.xlu0 %3571
    %3573 = vadd.xlane.f32.xlu0 %v3498
    %v3574 = vpop.xlane.xlu0 %3573
    %3575 = vadd.xlane.f32.xlu0 %v3499
    %v3576 = vpop.xlane.xlu0 %3575
    %3577 = vadd.xlane.f32.xlu0 %v3500
    %v3578 = vpop.xlane.xlu0 %3577
    %3579 = vadd.xlane.f32.xlu0 %v3501
    %v3580 = vpop.xlane.xlu0 %3579
    %3581 = vadd.xlane.f32.xlu0 %v3502
    %v3582 = vpop.xlane.xlu0 %3581
    %3583 = vadd.xlane.f32.xlu0 %v3503
    %v3584 = vpop.xlane.xlu0 %3583
    %3585 = vadd.xlane.f32.xlu0 %v3504
    %v3586 = vpop.xlane.xlu0 %3585
    %3587 = vadd.xlane.f32.xlu0 %v3505
    %v3588 = vpop.xlane.xlu0 %3587
    %3589 = vadd.xlane.f32.xlu0 %v3506
    %v3590 = vpop.xlane.xlu0 %3589
    %3591 = vadd.xlane.f32.xlu0 %v3507
    %v3592 = vpop.xlane.xlu0 %3591
    %3593 = vadd.xlane.f32.xlu0 %v3508
    %v3594 = vpop.xlane.xlu0 %3593
    %3595 = vadd.xlane.f32.xlu0 %v3509
    %v3596 = vpop.xlane.xlu0 %3595
    %3597 = vadd.xlane.f32.xlu0 %v3510
    %v3598 = vpop.xlane.xlu0 %3597
    %3599 = vadd.xlane.f32.xlu0 %v3511
    %v3600 = vpop.xlane.xlu0 %3599
    %3601 = vadd.xlane.f32.xlu0 %v3512
    %v3602 = vpop.xlane.xlu0 %3601
    %3603 = vadd.xlane.f32.xlu0 %v3513
    %v3604 = vpop.xlane.xlu0 %3603
    %3605 = vadd.xlane.f32.xlu0 %v3514
    %v3606 = vpop.xlane.xlu0 %3605
    %3607 = vadd.xlane.f32.xlu0 %v3515
    %v3608 = vpop.xlane.xlu0 %3607
    %3609 = vadd.xlane.f32.xlu0 %v3516
    %v3610 = vpop.xlane.xlu0 %3609
    %3611 = vadd.xlane.f32.xlu0 %v3517
    %v3612 = vpop.xlane.xlu0 %3611
    %3613 = vadd.xlane.f32.xlu0 %v3518
    %v3614 = vpop.xlane.xlu0 %3613
    %3615 = vadd.xlane.f32.xlu0 %v3519
    %v3616 = vpop.xlane.xlu0 %3615
    %3617 = vadd.xlane.f32.xlu0 %v3520
    %v3618 = vpop.xlane.xlu0 %3617
    %3619 = vadd.xlane.f32.xlu0 %v3521
    %v3620 = vpop.xlane.xlu0 %3619
    %3621 = vadd.xlane.f32.xlu0 %v3522
    %v3622 = vpop.xlane.xlu0 %3621
    %3623 = vadd.xlane.f32.xlu0 %v3523
    %v3624 = vpop.xlane.xlu0 %3623
    %3625 = vadd.xlane.f32.xlu0 %v3524
    %v3626 = vpop.xlane.xlu0 %3625
    %3627 = vadd.xlane.f32.xlu0 %v3525
    %v3628 = vpop.xlane.xlu0 %3627
    %3629 = vadd.xlane.f32.xlu0 %v3526
    %v3630 = vpop.xlane.xlu0 %3629
    %3631 = vadd.xlane.f32.xlu0 %v3527
    %v3632 = vpop.xlane.xlu0 %3631
    %3633 = vadd.xlane.f32.xlu0 %v3528
    %v3634 = vpop.xlane.xlu0 %3633
    %3635 = vadd.xlane.f32.xlu0 %v3529
    %v3636 = vpop.xlane.xlu0 %3635
    %3637 = vadd.xlane.f32.xlu0 %v3530
    %v3638 = vpop.xlane.xlu0 %3637
    %3639 = vadd.xlane.f32.xlu0 %v3531
    %v3640 = vpop.xlane.xlu0 %3639
    %3641 = vadd.xlane.f32.xlu0 %v3532
    %v3642 = vpop.xlane.xlu0 %3641
    %3643 = vadd.xlane.f32.xlu0 %v3533
    %v3644 = vpop.xlane.xlu0 %3643
    %3645 = vadd.xlane.f32.xlu0 %v3534
    %v3646 = vpop.xlane.xlu0 %3645
    %3647 = vadd.xlane.f32.xlu0 %v3535
    %v3648 = vpop.xlane.xlu0 %3647
    %3649 = vadd.xlane.f32.xlu0 %v3536
    %v3650 = vpop.xlane.xlu0 %3649
    %3651 = vadd.xlane.f32.xlu0 %v3537
    %v3652 = vpop.xlane.xlu0 %3651
    %3653 = vadd.xlane.f32.xlu0 %v3538
    %v3654 = vpop.xlane.xlu0 %3653
    %3655 = vadd.xlane.f32.xlu0 %v3539
    %v3656 = vpop.xlane.xlu0 %3655
    %3657 = vadd.xlane.f32.xlu0 %v3540
    %v3658 = vpop.xlane.xlu0 %3657
    %3659 = vadd.xlane.f32.xlu0 %v3541
    %v3660 = vpop.xlane.xlu0 %3659
    %3661 = vadd.xlane.f32.xlu0 %v3542
    %v3662 = vpop.xlane.xlu0 %3661
    %3663 = vadd.xlane.f32.xlu0 %v3543
    %v3664 = vpop.xlane.xlu0 %3663
    %3665 = vadd.xlane.f32.xlu0 %v3544
    %v3666 = vpop.xlane.xlu0 %3665
    %3667 = vadd.xlane.f32.xlu0 %v3545
    %v3668 = vpop.xlane.xlu0 %3667
    %3669 = vadd.xlane.f32.xlu0 %v3546
    %v3670 = vpop.xlane.xlu0 %3669
    %3671 = vadd.xlane.f32.xlu0 %v3547
    %v3672 = vpop.xlane.xlu0 %3671
    %3673 = vadd.xlane.f32.xlu0 %v3548
    %v3674 = vpop.xlane.xlu0 %3673
    %3675 = vadd.xlane.f32.xlu0 %v3549
    %v3676 = vpop.xlane.xlu0 %3675
    %3677 = vadd.xlane.f32.xlu0 %v3550
    %v3678 = vpop.xlane.xlu0 %3677
    %v3679 = vld [vmem:[#allocation2] sm:$0xff]
    %v3680 = vld [vmem:[#allocation2 + $0x8] sm:$0xff]
    %v3681 = vld [vmem:[#allocation2 + $0x10] sm:$0xff]
    %v3682 = vld [vmem:[#allocation2 + $0x18] sm:$0xff]
    %v3683 = vld [vmem:[#allocation2 + $0x20] sm:$0xff]
    %v3684 = vld [vmem:[#allocation2 + $0x28] sm:$0xff]
    %v3685 = vld [vmem:[#allocation2 + $0x30] sm:$0xff]
    %v3686 = vld [vmem:[#allocation2 + $0x38] sm:$0xff]
    %v3687 = vld [vmem:[#allocation2 + $0x40] sm:$0xff]
    %v3688 = vld [vmem:[#allocation2 + $0x48] sm:$0xff]
    %v3689 = vld [vmem:[#allocation2 + $0x50] sm:$0xff]
    %v3690 = vld [vmem:[#allocation2 + $0x58] sm:$0xff]
    %v3691 = vld [vmem:[#allocation2 + $0x60] sm:$0xff]
    %v3692 = vld [vmem:[#allocation2 + $0x68] sm:$0xff]
    %v3693 = vld [vmem:[#allocation2 + $0x70] sm:$0xff]
    %v3694 = vld [vmem:[#allocation2 + $0x78] sm:$0xff]
    %v3695 = vld [vmem:[#allocation2 + $0x80] sm:$0xff]
    %v3696 = vld [vmem:[#allocation2 + $0x88] sm:$0xff]
    %v3697 = vld [vmem:[#allocation2 + $0x90] sm:$0xff]
    %v3698 = vld [vmem:[#allocation2 + $0x98] sm:$0xff]
    %v3699 = vld [vmem:[#allocation2 + $0xa0] sm:$0xff]
    %v3700 = vld [vmem:[#allocation2 + $0xa8] sm:$0xff]
    %v3701 = vld [vmem:[#allocation2 + $0xb0] sm:$0xff]
    %v3702 = vld [vmem:[#allocation2 + $0xb8] sm:$0xff]
    %v3703 = vld [vmem:[#allocation2 + $0xc0] sm:$0xff]
    %v3704 = vld [vmem:[#allocation2 + $0xc8] sm:$0xff]
    %v3705 = vld [vmem:[#allocation2 + $0xd0] sm:$0xff]
    %v3706 = vld [vmem:[#allocation2 + $0xd8] sm:$0xff]
    %v3707 = vld [vmem:[#allocation2 + $0xe0] sm:$0xff]
    %v3708 = vld [vmem:[#allocation2 + $0xe8] sm:$0xff]
    %v3709 = vld [vmem:[#allocation2 + $0xf0] sm:$0xff]
    %v3710 = vld [vmem:[#allocation2 + $0xf8] sm:$0xff]
    %v3711 = vld [vmem:[#allocation2 + $0x100] sm:$0xff]
    %v3712 = vld [vmem:[#allocation2 + $0x108] sm:$0xff]
    %v3713 = vld [vmem:[#allocation2 + $0x110] sm:$0xff]
    %v3714 = vld [vmem:[#allocation2 + $0x118] sm:$0xff]
    %v3715 = vld [vmem:[#allocation2 + $0x120] sm:$0xff]
    %v3716 = vld [vmem:[#allocation2 + $0x128] sm:$0xff]
    %v3717 = vld [vmem:[#allocation2 + $0x130] sm:$0xff]
    %v3718 = vld [vmem:[#allocation2 + $0x138] sm:$0xff]
    %v3719 = vld [vmem:[#allocation2 + $0x140] sm:$0xff]
    %v3720 = vld [vmem:[#allocation2 + $0x148] sm:$0xff]
    %v3721 = vld [vmem:[#allocation2 + $0x150] sm:$0xff]
    %v3722 = vld [vmem:[#allocation2 + $0x158] sm:$0xff]
    %v3723 = vld [vmem:[#allocation2 + $0x160] sm:$0xff]
    %v3724 = vld [vmem:[#allocation2 + $0x168] sm:$0xff]
    %v3725 = vld [vmem:[#allocation2 + $0x170] sm:$0xff]
    %v3726 = vld [vmem:[#allocation2 + $0x178] sm:$0xff]
    %v3727 = vld [vmem:[#allocation2 + $0x180] sm:$0xff]
    %v3728 = vld [vmem:[#allocation2 + $0x188] sm:$0xff]
    %v3729 = vld [vmem:[#allocation2 + $0x190] sm:$0xff]
    %v3730 = vld [vmem:[#allocation2 + $0x198] sm:$0xff]
    %v3731 = vld [vmem:[#allocation2 + $0x1a0] sm:$0xff]
    %v3732 = vld [vmem:[#allocation2 + $0x1a8] sm:$0xff]
    %v3733 = vld [vmem:[#allocation2 + $0x1b0] sm:$0xff]
    %v3734 = vld [vmem:[#allocation2 + $0x1b8] sm:$0xff]
    %v3735 = vld [vmem:[#allocation2 + $0x1c0] sm:$0xff]
    %v3736 = vld [vmem:[#allocation2 + $0x1c8] sm:$0xff]
    %v3737 = vld [vmem:[#allocation2 + $0x1d0] sm:$0xff]
    %v3738 = vld [vmem:[#allocation2 + $0x1d8] sm:$0xff]
    %v3739 = vld [vmem:[#allocation2 + $0x1e0] sm:$0xff]
    %v3740 = vld [vmem:[#allocation2 + $0x1e8] sm:$0xff]
    %v3741 = vld [vmem:[#allocation2 + $0x1f0] sm:$0xff]
    %v3742 = vld [vmem:[#allocation2 + $0x1f8] sm:$0xff]
    %v3743 = vsub.f32 %v3552, %v2648
    %v3744 = vsub.f32 %v3554, %v2649
    %v3745 = vsub.f32 %v3556, %v2650
    %v3746 = vsub.f32 %v3558, %v2651
    %v3747 = vsub.f32 %v3560, %v2652
    %v3748 = vsub.f32 %v3562, %v2653
    %v3749 = vsub.f32 %v3564, %v2654
    %v3750 = vsub.f32 %v3566, %v2655
    %v3751 = vsub.f32 %v3568, %v2656
    %v3752 = vsub.f32 %v3570, %v2657
    %v3753 = vsub.f32 %v3572, %v2658
    %v3754 = vsub.f32 %v3574, %v2659
    %v3755 = vsub.f32 %v3576, %v2660
    %v3756 = vsub.f32 %v3578, %v2661
    %v3757 = vsub.f32 %v3580, %v2662
    %v3758 = vsub.f32 %v3582, %v2663
    %v3759 = vsub.f32 %v3584, %v2664
    %v3760 = vsub.f32 %v3586, %v2665
    %v3761 = vsub.f32 %v3588, %v2666
    %v3762 = vsub.f32 %v3590, %v2667
    %v3763 = vsub.f32 %v3592, %v2668
    %v3764 = vsub.f32 %v3594, %v2669
    %v3765 = vsub.f32 %v3596, %v2670
    %v3766 = vsub.f32 %v3598, %v2671
    %v3767 = vsub.f32 %v3600, %v2672
    %v3768 = vsub.f32 %v3602, %v2673
    %v3769 = vsub.f32 %v3604, %v2674
    %v3770 = vsub.f32 %v3606, %v2675
    %v3771 = vsub.f32 %v3608, %v2676
    %v3772 = vsub.f32 %v3610, %v2677
    %v3773 = vsub.f32 %v3612, %v2678
    %v3774 = vsub.f32 %v3614, %v2679
    %v3775 = vsub.f32 %v3616, %v2680
    %v3776 = vsub.f32 %v3618, %v2681
    %v3777 = vsub.f32 %v3620, %v2682
    %v3778 = vsub.f32 %v3622, %v2683
    %v3779 = vsub.f32 %v3624, %v2684
    %v3780 = vsub.f32 %v3626, %v2685
    %v3781 = vsub.f32 %v3628, %v2686
    %v3782 = vsub.f32 %v3630, %v2687
    %v3783 = vsub.f32 %v3632, %v2688
    %v3784 = vsub.f32 %v3634, %v2689
    %v3785 = vsub.f32 %v3636, %v2690
    %v3786 = vsub.f32 %v3638, %v2691
    %v3787 = vsub.f32 %v3640, %v2692
    %v3788 = vsub.f32 %v3642, %v2693
    %v3789 = vsub.f32 %v3644, %v2694
    %v3790 = vsub.f32 %v3646, %v2695
    %v3791 = vsub.f32 %v3648, %v2696
    %v3792 = vsub.f32 %v3650, %v2697
    %v3793 = vsub.f32 %v3652, %v2698
    %v3794 = vsub.f32 %v3654, %v2699
    %v3795 = vsub.f32 %v3656, %v2700
    %v3796 = vsub.f32 %v3658, %v2701
    %v3797 = vsub.f32 %v3660, %v2702
    %v3798 = vsub.f32 %v3662, %v2703
    %v3799 = vsub.f32 %v3664, %v2704
    %v3800 = vsub.f32 %v3666, %v2705
    %v3801 = vsub.f32 %v3668, %v2706
    %v3802 = vsub.f32 %v3670, %v2707
    %v3803 = vsub.f32 %v3672, %v2708
    %v3804 = vsub.f32 %v3674, %v2709
    %v3805 = vsub.f32 %v3676, %v2710
    %v3806 = vsub.f32 %v3678, %v2711
    %v3807 = vmul.f32 %v3359, %v3743
    %v3808 = vmul.f32 %v3360, %v3744
    %v3809 = vmul.f32 %v3361, %v3745
    %v3810 = vmul.f32 %v3362, %v3746
    %v3811 = vmul.f32 %v3363, %v3747
    %v3812 = vmul.f32 %v3364, %v3748
    %v3813 = vmul.f32 %v3365, %v3749
    %v3814 = vmul.f32 %v3366, %v3750
    %v3815 = vmul.f32 %v3367, %v3751
    %v3816 = vmul.f32 %v3368, %v3752
    %v3817 = vmul.f32 %v3369, %v3753
    %v3818 = vmul.f32 %v3370, %v3754
    %v3819 = vmul.f32 %v3371, %v3755
    %v3820 = vmul.f32 %v3372, %v3756
    %v3821 = vmul.f32 %v3373, %v3757
    %v3822 = vmul.f32 %v3374, %v3758
    %v3823 = vmul.f32 %v3375, %v3759
    %v3824 = vmul.f32 %v3376, %v3760
    %v3825 = vmul.f32 %v3377, %v3761
    %v3826 = vmul.f32 %v3378, %v3762
    %v3827 = vmul.f32 %v3379, %v3763
    %v3828 = vmul.f32 %v3380, %v3764
    %v3829 = vmul.f32 %v3381, %v3765
    %v3830 = vmul.f32 %v3382, %v3766
    %v3831 = vmul.f32 %v3383, %v3767
    %v3832 = vmul.f32 %v3384, %v3768
    %v3833 = vmul.f32 %v3385, %v3769
    %v3834 = vmul.f32 %v3386, %v3770
    %v3835 = vmul.f32 %v3387, %v3771
    %v3836 = vmul.f32 %v3388, %v3772
    %v3837 = vmul.f32 %v3389, %v3773
    %v3838 = vmul.f32 %v3390, %v3774
    %v3839 = vmul.f32 %v3391, %v3775
    %v3840 = vmul.f32 %v3392, %v3776
    %v3841 = vmul.f32 %v3393, %v3777
    %v3842 = vmul.f32 %v3394, %v3778
    %v3843 = vmul.f32 %v3395, %v3779
    %v3844 = vmul.f32 %v3396, %v3780
    %v3845 = vmul.f32 %v3397, %v3781
    %v3846 = vmul.f32 %v3398, %v3782
    %v3847 = vmul.f32 %v3399, %v3783
    %v3848 = vmul.f32 %v3400, %v3784
    %v3849 = vmul.f32 %v3401, %v3785
    %v3850 = vmul.f32 %v3402, %v3786
    %v3851 = vmul.f32 %v3403, %v3787
    %v3852 = vmul.f32 %v3404, %v3788
    %v3853 = vmul.f32 %v3405, %v3789
    %v3854 = vmul.f32 %v3406, %v3790
    %v3855 = vmul.f32 %v3407, %v3791
    %v3856 = vmul.f32 %v3408, %v3792
    %v3857 = vmul.f32 %v3409, %v3793
    %v3858 = vmul.f32 %v3410, %v3794
    %v3859 = vmul.f32 %v3411, %v3795
    %v3860 = vmul.f32 %v3412, %v3796
    %v3861 = vmul.f32 %v3413, %v3797
    %v3862 = vmul.f32 %v3414, %v3798
    %v3863 = vmul.f32 %v3415, %v3799
    %v3864 = vmul.f32 %v3416, %v3800
    %v3865 = vmul.f32 %v3417, %v3801
    %v3866 = vmul.f32 %v3418, %v3802
    %v3867 = vmul.f32 %v3419, %v3803
    %v3868 = vmul.f32 %v3420, %v3804
    %v3869 = vmul.f32 %v3421, %v3805
    %v3870 = vmul.f32 %v3422, %v3806
    %v3871 = vadd.f32 %v3679, %v3807
    %v3872 = vadd.f32 %v3680, %v3808
    %v3873 = vadd.f32 %v3681, %v3809
    %v3874 = vadd.f32 %v3682, %v3810
    %v3875 = vadd.f32 %v3683, %v3811
    %v3876 = vadd.f32 %v3684, %v3812
    %v3877 = vadd.f32 %v3685, %v3813
    %v3878 = vadd.f32 %v3686, %v3814
    %v3879 = vadd.f32 %v3687, %v3815
    %v3880 = vadd.f32 %v3688, %v3816
    %v3881 = vadd.f32 %v3689, %v3817
    %v3882 = vadd.f32 %v3690, %v3818
    %v3883 = vadd.f32 %v3691, %v3819
    %v3884 = vadd.f32 %v3692, %v3820
    %v3885 = vadd.f32 %v3693, %v3821
    %v3886 = vadd.f32 %v3694, %v3822
    %v3887 = vadd.f32 %v3695, %v3823
    %v3888 = vadd.f32 %v3696, %v3824
    %v3889 = vadd.f32 %v3697, %v3825
    %v3890 = vadd.f32 %v3698, %v3826
    %v3891 = vadd.f32 %v3699, %v3827
    %v3892 = vadd.f32 %v3700, %v3828
    %v3893 = vadd.f32 %v3701, %v3829
    %v3894 = vadd.f32 %v3702, %v3830
    %v3895 = vadd.f32 %v3703, %v3831
    %v3896 = vadd.f32 %v3704, %v3832
    %v3897 = vadd.f32 %v3705, %v3833
    %v3898 = vadd.f32 %v3706, %v3834
    %v3899 = vadd.f32 %v3707, %v3835
    %v3900 = vadd.f32 %v3708, %v3836
    %v3901 = vadd.f32 %v3709, %v3837
    %v3902 = vadd.f32 %v3710, %v3838
    %v3903 = vadd.f32 %v3711, %v3839
    %v3904 = vadd.f32 %v3712, %v3840
    %v3905 = vadd.f32 %v3713, %v3841
    %v3906 = vadd.f32 %v3714, %v3842
    %v3907 = vadd.f32 %v3715, %v3843
    %v3908 = vadd.f32 %v3716, %v3844
    %v3909 = vadd.f32 %v3717, %v3845
    %v3910 = vadd.f32 %v3718, %v3846
    %v3911 = vadd.f32 %v3719, %v3847
    %v3912 = vadd.f32 %v3720, %v3848
    %v3913 = vadd.f32 %v3721, %v3849
    %v3914 = vadd.f32 %v3722, %v3850
    %v3915 = vadd.f32 %v3723, %v3851
    %v3916 = vadd.f32 %v3724, %v3852
    %v3917 = vadd.f32 %v3725, %v3853
    %v3918 = vadd.f32 %v3726, %v3854
    %v3919 = vadd.f32 %v3727, %v3855
    %v3920 = vadd.f32 %v3728, %v3856
    %v3921 = vadd.f32 %v3729, %v3857
    %v3922 = vadd.f32 %v3730, %v3858
    %v3923 = vadd.f32 %v3731, %v3859
    %v3924 = vadd.f32 %v3732, %v3860
    %v3925 = vadd.f32 %v3733, %v3861
    %v3926 = vadd.f32 %v3734, %v3862
    %v3927 = vadd.f32 %v3735, %v3863
    %v3928 = vadd.f32 %v3736, %v3864
    %v3929 = vadd.f32 %v3737, %v3865
    %v3930 = vadd.f32 %v3738, %v3866
    %v3931 = vadd.f32 %v3739, %v3867
    %v3932 = vadd.f32 %v3740, %v3868
    %v3933 = vadd.f32 %v3741, %v3869
    %v3934 = vadd.f32 %v3742, %v3870
    %vm3935 = vcmask 7168
    %3936 = vst.msk [vmem:[#allocation2] sm:$0xff] %vm3935, %v3871
    %3937 = vst.msk [vmem:[#allocation2 + $0x8] sm:$0xff] %vm3935, %v3872
    %3938 = vst.msk [vmem:[#allocation2 + $0x10] sm:$0xff] %vm3935, %v3873
    %3939 = vst.msk [vmem:[#allocation2 + $0x18] sm:$0xff] %vm3935, %v3874
    %3940 = vst.msk [vmem:[#allocation2 + $0x20] sm:$0xff] %vm3935, %v3875
    %3941 = vst.msk [vmem:[#allocation2 + $0x28] sm:$0xff] %vm3935, %v3876
    %3942 = vst.msk [vmem:[#allocation2 + $0x30] sm:$0xff] %vm3935, %v3877
    %3943 = vst.msk [vmem:[#allocation2 + $0x38] sm:$0xff] %vm3935, %v3878
    %3944 = vst.msk [vmem:[#allocation2 + $0x40] sm:$0xff] %vm3935, %v3879
    %3945 = vst.msk [vmem:[#allocation2 + $0x48] sm:$0xff] %vm3935, %v3880
    %3946 = vst.msk [vmem:[#allocation2 + $0x50] sm:$0xff] %vm3935, %v3881
    %3947 = vst.msk [vmem:[#allocation2 + $0x58] sm:$0xff] %vm3935, %v3882
    %3948 = vst.msk [vmem:[#allocation2 + $0x60] sm:$0xff] %vm3935, %v3883
    %3949 = vst.msk [vmem:[#allocation2 + $0x68] sm:$0xff] %vm3935, %v3884
    %3950 = vst.msk [vmem:[#allocation2 + $0x70] sm:$0xff] %vm3935, %v3885
    %3951 = vst.msk [vmem:[#allocation2 + $0x78] sm:$0xff] %vm3935, %v3886
    %3952 = vst.msk [vmem:[#allocation2 + $0x80] sm:$0xff] %vm3935, %v3887
    %3953 = vst.msk [vmem:[#allocation2 + $0x88] sm:$0xff] %vm3935, %v3888
    %3954 = vst.msk [vmem:[#allocation2 + $0x90] sm:$0xff] %vm3935, %v3889
    %3955 = vst.msk [vmem:[#allocation2 + $0x98] sm:$0xff] %vm3935, %v3890
    %3956 = vst.msk [vmem:[#allocation2 + $0xa0] sm:$0xff] %vm3935, %v3891
    %3957 = vst.msk [vmem:[#allocation2 + $0xa8] sm:$0xff] %vm3935, %v3892
    %3958 = vst.msk [vmem:[#allocation2 + $0xb0] sm:$0xff] %vm3935, %v3893
    %3959 = vst.msk [vmem:[#allocation2 + $0xb8] sm:$0xff] %vm3935, %v3894
    %3960 = vst.msk [vmem:[#allocation2 + $0xc0] sm:$0xff] %vm3935, %v3895
    %3961 = vst.msk [vmem:[#allocation2 + $0xc8] sm:$0xff] %vm3935, %v3896
    %3962 = vst.msk [vmem:[#allocation2 + $0xd0] sm:$0xff] %vm3935, %v3897
    %3963 = vst.msk [vmem:[#allocation2 + $0xd8] sm:$0xff] %vm3935, %v3898
    %3964 = vst.msk [vmem:[#allocation2 + $0xe0] sm:$0xff] %vm3935, %v3899
    %3965 = vst.msk [vmem:[#allocation2 + $0xe8] sm:$0xff] %vm3935, %v3900
    %3966 = vst.msk [vmem:[#allocation2 + $0xf0] sm:$0xff] %vm3935, %v3901
    %3967 = vst.msk [vmem:[#allocation2 + $0xf8] sm:$0xff] %vm3935, %v3902
    %3968 = vst.msk [vmem:[#allocation2 + $0x100] sm:$0xff] %vm3935, %v3903
    %3969 = vst.msk [vmem:[#allocation2 + $0x108] sm:$0xff] %vm3935, %v3904
    %3970 = vst.msk [vmem:[#allocation2 + $0x110] sm:$0xff] %vm3935, %v3905
    %3971 = vst.msk [vmem:[#allocation2 + $0x118] sm:$0xff] %vm3935, %v3906
    %3972 = vst.msk [vmem:[#allocation2 + $0x120] sm:$0xff] %vm3935, %v3907
    %3973 = vst.msk [vmem:[#allocation2 + $0x128] sm:$0xff] %vm3935, %v3908
    %3974 = vst.msk [vmem:[#allocation2 + $0x130] sm:$0xff] %vm3935, %v3909
    %3975 = vst.msk [vmem:[#allocation2 + $0x138] sm:$0xff] %vm3935, %v3910
    %3976 = vst.msk [vmem:[#allocation2 + $0x140] sm:$0xff] %vm3935, %v3911
    %3977 = vst.msk [vmem:[#allocation2 + $0x148] sm:$0xff] %vm3935, %v3912
    %3978 = vst.msk [vmem:[#allocation2 + $0x150] sm:$0xff] %vm3935, %v3913
    %3979 = vst.msk [vmem:[#allocation2 + $0x158] sm:$0xff] %vm3935, %v3914
    %3980 = vst.msk [vmem:[#allocation2 + $0x160] sm:$0xff] %vm3935, %v3915
    %3981 = vst.msk [vmem:[#allocation2 + $0x168] sm:$0xff] %vm3935, %v3916
    %3982 = vst.msk [vmem:[#allocation2 + $0x170] sm:$0xff] %vm3935, %v3917
    %3983 = vst.msk [vmem:[#allocation2 + $0x178] sm:$0xff] %vm3935, %v3918
    %3984 = vst.msk [vmem:[#allocation2 + $0x180] sm:$0xff] %vm3935, %v3919
    %3985 = vst.msk [vmem:[#allocation2 + $0x188] sm:$0xff] %vm3935, %v3920
    %3986 = vst.msk [vmem:[#allocation2 + $0x190] sm:$0xff] %vm3935, %v3921
    %3987 = vst.msk [vmem:[#allocation2 + $0x198] sm:$0xff] %vm3935, %v3922
    %3988 = vst.msk [vmem:[#allocation2 + $0x1a0] sm:$0xff] %vm3935, %v3923
    %3989 = vst.msk [vmem:[#allocation2 + $0x1a8] sm:$0xff] %vm3935, %v3924
    %3990 = vst.msk [vmem:[#allocation2 + $0x1b0] sm:$0xff] %vm3935, %v3925
    %3991 = vst.msk [vmem:[#allocation2 + $0x1b8] sm:$0xff] %vm3935, %v3926
    %3992 = vst.msk [vmem:[#allocation2 + $0x1c0] sm:$0xff] %vm3935, %v3927
    %3993 = vst.msk [vmem:[#allocation2 + $0x1c8] sm:$0xff] %vm3935, %v3928
    %3994 = vst.msk [vmem:[#allocation2 + $0x1d0] sm:$0xff] %vm3935, %v3929
    %3995 = vst.msk [vmem:[#allocation2 + $0x1d8] sm:$0xff] %vm3935, %v3930
    %3996 = vst.msk [vmem:[#allocation2 + $0x1e0] sm:$0xff] %vm3935, %v3931
    %3997 = vst.msk [vmem:[#allocation2 + $0x1e8] sm:$0xff] %vm3935, %v3932
    %3998 = vst.msk [vmem:[#allocation2 + $0x1f0] sm:$0xff] %vm3935, %v3933
    %3999 = vst.msk [vmem:[#allocation2 + $0x1f8] sm:$0xff] %vm3935, %v3934
    // Predicated region
    $region26: #{_fused_link_sign_loss.1} parent=1 // pred_check
      %p4000 = pneg %p30
    $region27: #{_fused_link_sign_loss.1} parent=1 // pred_check_branch
      %4002 = sbr.rel (%p4000) target = $region29
    $region28: #{_fused_link_sign_loss.1} parent=1 // pred_region
      %v4003 = vld [vmem:[#allocation2] sm:$0xff]
      %v4004 = vld [vmem:[#allocation2 + $0x8] sm:$0xff]
      %v4005 = vld [vmem:[#allocation2 + $0x10] sm:$0xff]
      %v4006 = vld [vmem:[#allocation2 + $0x18] sm:$0xff]
      %v4007 = vld [vmem:[#allocation2 + $0x20] sm:$0xff]
      %v4008 = vld [vmem:[#allocation2 + $0x28] sm:$0xff]
      %v4009 = vld [vmem:[#allocation2 + $0x30] sm:$0xff]
      %v4010 = vld [vmem:[#allocation2 + $0x38] sm:$0xff]
      %v4011 = vld [vmem:[#allocation2 + $0x40] sm:$0xff]
      %v4012 = vld [vmem:[#allocation2 + $0x48] sm:$0xff]
      %v4013 = vld [vmem:[#allocation2 + $0x50] sm:$0xff]
      %v4014 = vld [vmem:[#allocation2 + $0x58] sm:$0xff]
      %v4015 = vld [vmem:[#allocation2 + $0x60] sm:$0xff]
      %v4016 = vld [vmem:[#allocation2 + $0x68] sm:$0xff]
      %v4017 = vld [vmem:[#allocation2 + $0x70] sm:$0xff]
      %v4018 = vld [vmem:[#allocation2 + $0x78] sm:$0xff]
      %v4019 = vld [vmem:[#allocation2 + $0x80] sm:$0xff]
      %v4020 = vld [vmem:[#allocation2 + $0x88] sm:$0xff]
      %v4021 = vld [vmem:[#allocation2 + $0x90] sm:$0xff]
      %v4022 = vld [vmem:[#allocation2 + $0x98] sm:$0xff]
      %v4023 = vld [vmem:[#allocation2 + $0xa0] sm:$0xff]
      %v4024 = vld [vmem:[#allocation2 + $0xa8] sm:$0xff]
      %v4025 = vld [vmem:[#allocation2 + $0xb0] sm:$0xff]
      %v4026 = vld [vmem:[#allocation2 + $0xb8] sm:$0xff]
      %v4027 = vld [vmem:[#allocation2 + $0xc0] sm:$0xff]
      %v4028 = vld [vmem:[#allocation2 + $0xc8] sm:$0xff]
      %v4029 = vld [vmem:[#allocation2 + $0xd0] sm:$0xff]
      %v4030 = vld [vmem:[#allocation2 + $0xd8] sm:$0xff]
      %v4031 = vld [vmem:[#allocation2 + $0xe0] sm:$0xff]
      %v4032 = vld [vmem:[#allocation2 + $0xe8] sm:$0xff]
      %v4033 = vld [vmem:[#allocation2 + $0xf0] sm:$0xff]
      %v4034 = vld [vmem:[#allocation2 + $0xf8] sm:$0xff]
      %v4035 = vld [vmem:[#allocation2 + $0x100] sm:$0xff]
      %v4036 = vld [vmem:[#allocation2 + $0x108] sm:$0xff]
      %v4037 = vld [vmem:[#allocation2 + $0x110] sm:$0xff]
      %v4038 = vld [vmem:[#allocation2 + $0x118] sm:$0xff]
      %v4039 = vld [vmem:[#allocation2 + $0x120] sm:$0xff]
      %v4040 = vld [vmem:[#allocation2 + $0x128] sm:$0xff]
      %v4041 = vld [vmem:[#allocation2 + $0x130] sm:$0xff]
      %v4042 = vld [vmem:[#allocation2 + $0x138] sm:$0xff]
      %v4043 = vld [vmem:[#allocation2 + $0x140] sm:$0xff]
      %v4044 = vld [vmem:[#allocation2 + $0x148] sm:$0xff]
      %v4045 = vld [vmem:[#allocation2 + $0x150] sm:$0xff]
      %v4046 = vld [vmem:[#allocation2 + $0x158] sm:$0xff]
      %v4047 = vld [vmem:[#allocation2 + $0x160] sm:$0xff]
      %v4048 = vld [vmem:[#allocation2 + $0x168] sm:$0xff]
      %v4049 = vld [vmem:[#allocation2 + $0x170] sm:$0xff]
      %v4050 = vld [vmem:[#allocation2 + $0x178] sm:$0xff]
      %v4051 = vld [vmem:[#allocation2 + $0x180] sm:$0xff]
      %v4052 = vld [vmem:[#allocation2 + $0x188] sm:$0xff]
      %v4053 = vld [vmem:[#allocation2 + $0x190] sm:$0xff]
      %v4054 = vld [vmem:[#allocation2 + $0x198] sm:$0xff]
      %v4055 = vld [vmem:[#allocation2 + $0x1a0] sm:$0xff]
      %v4056 = vld [vmem:[#allocation2 + $0x1a8] sm:$0xff]
      %v4057 = vld [vmem:[#allocation2 + $0x1b0] sm:$0xff]
      %v4058 = vld [vmem:[#allocation2 + $0x1b8] sm:$0xff]
      %v4059 = vld [vmem:[#allocation2 + $0x1c0] sm:$0xff]
      %v4060 = vld [vmem:[#allocation2 + $0x1c8] sm:$0xff]
      %v4061 = vld [vmem:[#allocation2 + $0x1d0] sm:$0xff]
      %v4062 = vld [vmem:[#allocation2 + $0x1d8] sm:$0xff]
      %v4063 = vld [vmem:[#allocation2 + $0x1e0] sm:$0xff]
      %v4064 = vld [vmem:[#allocation2 + $0x1e8] sm:$0xff]
      %v4065 = vld [vmem:[#allocation2 + $0x1f0] sm:$0xff]
      %v4066 = vld [vmem:[#allocation2 + $0x1f8] sm:$0xff]
      %v4067 = vsel %vm3935, %v4003, 0.0
      %v4068 = vsel %vm3935, %v4004, 0.0
      %v4069 = vadd.f32 %v4067, %v4068
      %v4070 = vsel %vm3935, %v4005, 0.0
      %v4071 = vadd.f32 %v4069, %v4070
      %v4072 = vsel %vm3935, %v4006, 0.0
      %v4073 = vadd.f32 %v4071, %v4072
      %v4074 = vsel %vm3935, %v4007, 0.0
      %v4075 = vadd.f32 %v4073, %v4074
      %v4076 = vsel %vm3935, %v4008, 0.0
      %v4077 = vadd.f32 %v4075, %v4076
      %v4078 = vsel %vm3935, %v4009, 0.0
      %v4079 = vadd.f32 %v4077, %v4078
      %v4080 = vsel %vm3935, %v4010, 0.0
      %v4081 = vadd.f32 %v4079, %v4080
      %v4082 = vsel %vm3935, %v4011, 0.0
      %v4083 = vadd.f32 %v4081, %v4082
      %v4084 = vsel %vm3935, %v4012, 0.0
      %v4085 = vadd.f32 %v4083, %v4084
      %v4086 = vsel %vm3935, %v4013, 0.0
      %v4087 = vadd.f32 %v4085, %v4086
      %v4088 = vsel %vm3935, %v4014, 0.0
      %v4089 = vadd.f32 %v4087, %v4088
      %v4090 = vsel %vm3935, %v4015, 0.0
      %v4091 = vadd.f32 %v4089, %v4090
      %v4092 = vsel %vm3935, %v4016, 0.0
      %v4093 = vadd.f32 %v4091, %v4092
      %v4094 = vsel %vm3935, %v4017, 0.0
      %v4095 = vadd.f32 %v4093, %v4094
      %v4096 = vsel %vm3935, %v4018, 0.0
      %v4097 = vadd.f32 %v4095, %v4096
      %v4098 = vsel %vm3935, %v4019, 0.0
      %v4099 = vadd.f32 %v4097, %v4098
      %v4100 = vsel %vm3935, %v4020, 0.0
      %v4101 = vadd.f32 %v4099, %v4100
      %v4102 = vsel %vm3935, %v4021, 0.0
      %v4103 = vadd.f32 %v4101, %v4102
      %v4104 = vsel %vm3935, %v4022, 0.0
      %v4105 = vadd.f32 %v4103, %v4104
      %v4106 = vsel %vm3935, %v4023, 0.0
      %v4107 = vadd.f32 %v4105, %v4106
      %v4108 = vsel %vm3935, %v4024, 0.0
      %v4109 = vadd.f32 %v4107, %v4108
      %v4110 = vsel %vm3935, %v4025, 0.0
      %v4111 = vadd.f32 %v4109, %v4110
      %v4112 = vsel %vm3935, %v4026, 0.0
      %v4113 = vadd.f32 %v4111, %v4112
      %v4114 = vsel %vm3935, %v4027, 0.0
      %v4115 = vadd.f32 %v4113, %v4114
      %v4116 = vsel %vm3935, %v4028, 0.0
      %v4117 = vadd.f32 %v4115, %v4116
      %v4118 = vsel %vm3935, %v4029, 0.0
      %v4119 = vadd.f32 %v4117, %v4118
      %v4120 = vsel %vm3935, %v4030, 0.0
      %v4121 = vadd.f32 %v4119, %v4120
      %v4122 = vsel %vm3935, %v4031, 0.0
      %v4123 = vadd.f32 %v4121, %v4122
      %v4124 = vsel %vm3935, %v4032, 0.0
      %v4125 = vadd.f32 %v4123, %v4124
      %v4126 = vsel %vm3935, %v4033, 0.0
      %v4127 = vadd.f32 %v4125, %v4126
      %v4128 = vsel %vm3935, %v4034, 0.0
      %v4129 = vadd.f32 %v4127, %v4128
      %v4130 = vsel %vm3935, %v4035, 0.0
      %v4131 = vadd.f32 %v4129, %v4130
      %v4132 = vsel %vm3935, %v4036, 0.0
      %v4133 = vadd.f32 %v4131, %v4132
      %v4134 = vsel %vm3935, %v4037, 0.0
      %v4135 = vadd.f32 %v4133, %v4134
      %v4136 = vsel %vm3935, %v4038, 0.0
      %v4137 = vadd.f32 %v4135, %v4136
      %v4138 = vsel %vm3935, %v4039, 0.0
      %v4139 = vadd.f32 %v4137, %v4138
      %v4140 = vsel %vm3935, %v4040, 0.0
      %v4141 = vadd.f32 %v4139, %v4140
      %v4142 = vsel %vm3935, %v4041, 0.0
      %v4143 = vadd.f32 %v4141, %v4142
      %v4144 = vsel %vm3935, %v4042, 0.0
      %v4145 = vadd.f32 %v4143, %v4144
      %v4146 = vsel %vm3935, %v4043, 0.0
      %v4147 = vadd.f32 %v4145, %v4146
      %v4148 = vsel %vm3935, %v4044, 0.0
      %v4149 = vadd.f32 %v4147, %v4148
      %v4150 = vsel %vm3935, %v4045, 0.0
      %v4151 = vadd.f32 %v4149, %v4150
      %v4152 = vsel %vm3935, %v4046, 0.0
      %v4153 = vadd.f32 %v4151, %v4152
      %v4154 = vsel %vm3935, %v4047, 0.0
      %v4155 = vadd.f32 %v4153, %v4154
      %v4156 = vsel %vm3935, %v4048, 0.0
      %v4157 = vadd.f32 %v4155, %v4156
      %v4158 = vsel %vm3935, %v4049, 0.0
      %v4159 = vadd.f32 %v4157, %v4158
      %v4160 = vsel %vm3935, %v4050, 0.0
      %v4161 = vadd.f32 %v4159, %v4160
      %v4162 = vsel %vm3935, %v4051, 0.0
      %v4163 = vadd.f32 %v4161, %v4162
      %v4164 = vsel %vm3935, %v4052, 0.0
      %v4165 = vadd.f32 %v4163, %v4164
      %v4166 = vsel %vm3935, %v4053, 0.0
      %v4167 = vadd.f32 %v4165, %v4166
      %v4168 = vsel %vm3935, %v4054, 0.0
      %v4169 = vadd.f32 %v4167, %v4168
      %v4170 = vsel %vm3935, %v4055, 0.0
      %v4171 = vadd.f32 %v4169, %v4170
      %v4172 = vsel %vm3935, %v4056, 0.0
      %v4173 = vadd.f32 %v4171, %v4172
      %v4174 = vsel %vm3935, %v4057, 0.0
      %v4175 = vadd.f32 %v4173, %v4174
      %v4176 = vsel %vm3935, %v4058, 0.0
      %v4177 = vadd.f32 %v4175, %v4176
      %v4178 = vsel %vm3935, %v4059, 0.0
      %v4179 = vadd.f32 %v4177, %v4178
      %v4180 = vsel %vm3935, %v4060, 0.0
      %v4181 = vadd.f32 %v4179, %v4180
      %v4182 = vsel %vm3935, %v4061, 0.0
      %v4183 = vadd.f32 %v4181, %v4182
      %v4184 = vsel %vm3935, %v4062, 0.0
      %v4185 = vadd.f32 %v4183, %v4184
      %v4186 = vsel %vm3935, %v4063, 0.0
      %v4187 = vadd.f32 %v4185, %v4186
      %v4188 = vsel %vm3935, %v4064, 0.0
      %v4189 = vadd.f32 %v4187, %v4188
      %v4190 = vsel %vm3935, %v4065, 0.0
      %v4191 = vadd.f32 %v4189, %v4190
      %v4192 = vsel %vm3935, %v4066, 0.0
      %v4193 = vadd.f32 %v4191, %v4192
      %4194 = vadd.xlane.f32.xlu0 %v4193
      %v4195 = vpop.xlane.xlu0 %4194
      %v4196 = vrot.slane %v4195, 4
      %v4197 = vadd.f32 %v4195, %v4196
      %v4198 = vrot.slane %v4197, 2
      %v4199 = vadd.f32 %v4197, %v4198
      %v4200 = vrot.slane %v4199, 1
      %v4201 = vadd.f32 %v4199, %v4200
      %s4202 = vtos %v4201
      %s4203 = ssub.f32 0.0, %s4202
      %v4204 = vrcp.pop 3.0
      %v4205 = vmul.f32 3.0, %v4204
      %v4206 = vsub.f32 1.0, %v4205
      %v4207 = vmul.f32 %v4204, %v4206
      %v4208 = vadd.f32 %v4204, %v4207
      %vm4209 = vweird.f32 %v4204
      %v4210 = vsel %vm4209, %v4204, %v4208
      %s4211 = vtos %v4210
      %s4212 = smul.f32 %s4203, %s4211
      %v4213 = vstv %s4212
      %vm4214 = vcmask 0
      %4215 = vst.msk [vmem:[#allocation6] sm:$0x1] %vm4214, %v4213
    $region29: #{_fused_link_sign_loss.1} parent=1 // pred_fallthru
      _
    // Predicated region
    $region30: #{_fused_link_sign_loss.1} parent=1 // pred_check
      _
    $region31: #{_fused_link_sign_loss.1} parent=1 // pred_check_branch
      %4217 = sbr.rel (0) target = $region33
    $region32: #{_fused_link_sign_loss.1} parent=1 // pred_region
      %4219 = vsyncadd [#allocation7], 0
      %s4221 = sshll.u32 [#allocation6], 4
      %s4222 = int_to_ptr.vmem [resolvable:$true] %s4221
      %s4223 = sshll.u32 %s6, 4
      %s4224 = int_to_ptr.hbm [resolvable:$true] %s4223
      %4226 = dma.vmem_to_hbm [thread:$0]  %s4222, 16, %s4224, [#allocation7]
    $region33: #{_fused_link_sign_loss.1} parent=1 // pred_fallthru
      _
    // Predicated region
    $region34: #{_fused_link_sign_loss.1} parent=1 // pred_check
      _
    $region35: #{_fused_link_sign_loss.1} parent=1 // pred_check_branch
      %4228 = sbr.rel (0) target = $region37
    $region36: #{_fused_link_sign_loss.1} parent=1 // pred_region
      %4230 = dma.done [#allocation7], 16
    $region37: #{_fused_link_sign_loss.1} parent=1 // pred_fallthru
      _
    %4231 = vsyncpa [#allocation7], 1

</llo_original>
